<compile_context>
chip_gen: v7x
topology: tpu7x:2x2x1
jax: 0.10.0
libtpu: 0.0.40
codegen_flags: <defaults>
</compile_context>

<pallas_src>
import functools

import numpy as np
import jax
import jax.numpy as jnp
from jax.experimental import pallas as pl
from jax.experimental.pallas import tpu as pltpu

WIN_LENGTH_LIST = (2048, 1024, 512)
HOP_SIZE = 512
AMIN = 1e-10
INV_LN10 = 1.0 / float(np.log(10.0))
FREQ_TILE = 128      # lane-aligned frequency tile; fused [cos|sin] RHS is 2*FREQ_TILE wide
MAX_M_TILE = 512     # frame rows per tile (v7x-safe VMEM budget; multiple of 128)


def _round_up(x, m):
    return ((x + m - 1) // m) * m


def _hann_window_padded(win_length, n_fft):
    n = np.arange(win_length, dtype=np.float64)
    w = 0.5 - 0.5 * np.cos(2.0 * np.pi * n / win_length)   # torch.hann_window (periodic)
    left = (n_fft - win_length) // 2
    right = n_fft - win_length - left
    return np.pad(w, (left, right))                        # torch.stft centers the window


def _build_basis(win_length_list, n_fft, n_freq_pad):
    """Hann-folded rDFT basis, cos/sin fused per 128-freq tile.

    Returns (n_res, n_fft, 2*n_freq_pad) bf16 where columns
      [f*256      : f*256+128] = hann_r * cos for freq tile f
      [f*256+128  : f*256+256] = hann_r * sin for freq tile f
    (sin sign is irrelevant for the magnitude/dB output).
    """
    n_i = np.arange(n_fft, dtype=np.int64)[:, None]
    k_i = np.arange(n_freq_pad, dtype=np.int64)[None, :]
    ang = 2.0 * np.pi * ((n_i * k_i) % n_fft).astype(np.float64) / n_fft
    n_tiles = n_freq_pad // FREQ_TILE
    cos_t = np.cos(ang).reshape(n_fft, n_tiles, FREQ_TILE)
    sin_t = np.sin(ang).reshape(n_fft, n_tiles, FREQ_TILE)
    fused = np.stack([cos_t, sin_t], axis=2).reshape(n_fft, 2 * n_freq_pad)
    windows = np.stack([_hann_window_padded(wl, n_fft) for wl in win_length_list])
    basis = windows[:, :, None] * fused[None]              # (n_res, n_fft, 2*n_freq_pad)
    return jnp.asarray(basis, dtype=jnp.bfloat16)


def _mrs_kernel(frames_ref, basis_ref, out_ref):
    # frames_ref: (M_TILE, n_fft)          bf16  -- raw frames for m-tile program_id(0)
    # basis_ref : (1, n_fft, 2*FREQ_TILE)  bf16  -- hann-folded [cos|sin] slab for (r, f)
    # out_ref   : (1, FREQ_TILE, M_TILE)   f32   -- dB tile, (freq, time)-major
    y = jnp.dot(frames_ref[...], basis_ref[0],
                preferred_element_type=jnp.float32)        # (M_TILE, 2*FREQ_TILE) f32
    re = y[:, :FREQ_TILE]
    im = y[:, FREQ_TILE:]
    power = re * re + im * im
    # 10*log10(max(sqrt(p), 1e-10)) == 5*log10(max(p, 1e-20)) -- no sqrt on the EUP.
    db = (5.0 * INV_LN10) * jnp.log(jnp.maximum(power, AMIN * AMIN))
    out_ref[0] = db.T.astype(out_ref.dtype)                # XLU transpose -> (FREQ, M_TILE)


@functools.partial(jax.jit, static_argnames=("win_length_list", "hop_size"))
def multi_resolution_spec(x, win_length_list=WIN_LENGTH_LIST, hop_size=HOP_SIZE):
    B, C, T = x.shape
    n_res = len(win_length_list)
    n_fft = max(win_length_list)
    n_freq = n_fft // 2 + 1
    n_freq_pad = _round_up(n_freq, FREQ_TILE)
    n_freq_tiles = n_freq_pad // FREQ_TILE

    pad = n_fft // 2
    if T <= pad:
        raise ValueError(f"reflect padding requires T > n_fft//2 ({pad}); got T={T}")

    # ---- glue: center reflect-pad + frame extraction (torch.stft center=True) ----
    xp = jnp.pad(x, ((0, 0), (0, 0), (pad, pad)), mode="reflect")
    n_frames = 1 + (xp.shape[-1] - n_fft) // hop_size
    idx = jnp.arange(n_frames)[:, None] * hop_size + jnp.arange(n_fft)[None, :]
    # TODO(synk): framing is still an XLA gather (4x-overlapped copy in HBM); an in-kernel
    # strided-DMA framer would cut that traffic further but is not implemented here.
    frames = xp[..., idx].astype(jnp.bfloat16)             # (B, C, n_frames, n_fft)

    M = B * C * n_frames
    m_tile = min(MAX_M_TILE, _round_up(M, 128))
    M_pad = _round_up(M, m_tile)
    frames2 = frames.reshape(M, n_fft)
    if M_pad != M:
        frames2 = jnp.pad(frames2, ((0, M_pad - M), (0, 0)))

    basis = _build_basis(win_length_list, n_fft, n_freq_pad)  # (n_res, n_fft, 2*n_freq_pad)

    # ---- Pallas kernel: grid = (m tile, resolution, frequency tile) ----
    grid = (M_pad // m_tile, n_res, n_freq_tiles)
    out = pl.pallas_call(
        _mrs_kernel,
        out_shape=jax.ShapeDtypeStruct((n_res, n_freq_pad, M_pad), jnp.float32),
        grid_spec=pltpu.PrefetchScalarGridSpec(
            num_scalar_prefetch=0,
            grid=grid,
            in_specs=[
                pl.BlockSpec((m_tile, n_fft), lambda m, r, f: (m, 0)),
                pl.BlockSpec((1, n_fft, 2 * FREQ_TILE), lambda m, r, f: (r, 0, f)),
            ],
            out_specs=pl.BlockSpec((1, FREQ_TILE, m_tile), lambda m, r, f: (r, f, m)),
        ),
        compiler_params=pltpu.CompilerParams(
            dimension_semantics=("parallel", "arbitrary", "parallel"),
            vmem_limit_bytes=32 << 20,                     # ~7 MiB actually used; safe on v7x
        ),
    )(frames2, basis)

    # ---- glue: drop padding, reorder to torch layout (B, n_res*C, freq, time) ----
    out = out[:, :n_freq, :M].reshape(n_res, n_freq, B, C, n_frames)
    out = jnp.transpose(out, (2, 0, 3, 1, 4)).reshape(B, n_res * C, n_freq, n_frames)
    return out


def _reference(x, win_length_list=WIN_LENGTH_LIST, hop_size=HOP_SIZE):
    """Pure-JAX f32 reference (rfft) for a correctness sanity check."""
    n_fft = max(win_length_list)
    pad = n_fft // 2
    xp = jnp.pad(x, ((0, 0), (0, 0), (pad, pad)), mode="reflect")
    n_frames = 1 + (xp.shape[-1] - n_fft) // hop_size
    idx = jnp.arange(n_frames)[:, None] * hop_size + jnp.arange(n_fft)[None, :]
    frames = xp[..., idx]                                   # (B, C, F, n_fft)
    specs = []
    for wl in win_length_list:
        w = jnp.asarray(_hann_window_padded(wl, n_fft), dtype=jnp.float32)
        mag = jnp.abs(jnp.fft.rfft(frames * w, n=n_fft, axis=-1))
        db = 10.0 * jnp.log10(jnp.maximum(mag, AMIN))
        specs.append(jnp.transpose(db, (0, 1, 3, 2)))       # (B, C, freq, F)
    return jnp.concatenate(specs, axis=1)


if __name__ == "__main__":
    key = jax.random.PRNGKey(0)
    B, C, T = 2, 1, 2048                                    # small waveform: 2 batches, mono
    x = jax.random.normal(key, (B, C, T), dtype=jnp.float32)

    out = jax.block_until_ready(multi_resolution_spec(x))

    n_fft = max(WIN_LENGTH_LIST)
    expected_shape = (B, 3 * C, n_fft // 2 + 1, 1 + T // HOP_SIZE)
    assert out.shape == expected_shape, (out.shape, expected_shape)
    assert bool(jnp.all(jnp.isfinite(out)))

    # Numerical check against an FFT-based f32 reference, in the magnitude domain
    # (bf16 MXU inputs -> mixed absolute/relative criterion).
    ref = jax.block_until_ready(_reference(x))
    mag_k = jnp.power(10.0, out / 10.0)
    mag_r = jnp.power(10.0, ref / 10.0)
    max_abs = float(jnp.max(jnp.abs(mag_k - mag_r)))
    mean_rel = float(jnp.mean(jnp.abs(mag_k - mag_r)) / jnp.mean(jnp.abs(mag_r)))
    assert max_abs < 1.0, f"max abs magnitude error too large: {max_abs}"
    assert mean_rel < 1e-2, f"mean relative magnitude error too large: {mean_rel}"

    print("KERNEL_OK")
</pallas_src>

<mosaic_0001>
module attributes {stable_mosaic.version = 11 : i64} {
  func.func @_mrs_kernel(%arg0: i32, %arg1: i32, %arg2: i32, %arg3: memref<128x2048xbf16, #tpu.memory_space<vmem>>, %arg4: memref<1x2048x256xbf16, #tpu.memory_space<vmem>>, %arg5: memref<1x128x128xf32, #tpu.memory_space<vmem>>) attributes {dimension_semantics = [#tpu.dimension_semantics<parallel>, #tpu.dimension_semantics<arbitrary>, #tpu.dimension_semantics<parallel>], iteration_bounds = array<i64: 1, 3, 9>, scalar_prefetch = 0 : i64, scratch_operands = 0 : i64, tpu.core_type = #tpu.core_type<tc>, window_params = [{transform_indices = @transform_0, window_bounds = array<i64: 128, 2048>}, {transform_indices = @transform_1, window_bounds = array<i64: 1, 2048, 256>}, {transform_indices = @transform_2, window_bounds = array<i64: 1, 128, 128>}]} {
    %c0 = arith.constant 0 : index
    %c0_0 = arith.constant 0 : index
    %0 = vector.load %arg3[%c0, %c0_0] : memref<128x2048xbf16, #tpu.memory_space<vmem>>, vector<128x2048xbf16>
    %c0_1 = arith.constant 0 : index
    %c0_2 = arith.constant 0 : index
    %c0_3 = arith.constant 0 : index
    %1 = vector.load %arg4[%c0_1, %c0_2, %c0_3] : memref<1x2048x256xbf16, #tpu.memory_space<vmem>>, vector<1x2048x256xbf16>
    %2 = vector.shape_cast %1 : vector<1x2048x256xbf16> to vector<2048x256xbf16>
    %cst = arith.constant dense<0.000000e+00> : vector<128x256xf32>
    %3 = tpu.matmul %0, %2, %cst {dimension_numbers = #tpu.dot_dimension_numbers<[1], [0], [0], [1], [0, 0, 1, 1], [], []>} : vector<128x2048xbf16>, vector<2048x256xbf16>, vector<128x256xf32> -> vector<128x256xf32>
    %4 = vector.extract_strided_slice %3 {offsets = [0, 0], sizes = [128, 128], strides = [1, 1]} : vector<128x256xf32> to vector<128x128xf32>
    %5 = vector.extract_strided_slice %3 {offsets = [0, 128], sizes = [128, 128], strides = [1, 1]} : vector<128x256xf32> to vector<128x128xf32>
    %6 = arith.mulf %4, %4 : vector<128x128xf32>
    %7 = arith.mulf %5, %5 : vector<128x128xf32>
    %8 = arith.addf %6, %7 : vector<128x128xf32>
    %cst_4 = arith.constant 9.99999968E-21 : f32
    %9 = vector.broadcast %cst_4 : f32 to vector<128x128xf32>
    %10 = arith.maximumf %8, %9 : vector<128x128xf32>
    %11 = math.log %10 : vector<128x128xf32>
    %cst_5 = arith.constant 2.17147231 : f32
    %12 = vector.broadcast %cst_5 : f32 to vector<128x128xf32>
    %13 = arith.mulf %12, %11 : vector<128x128xf32>
    %14 = tpu.transpose %13, [1, 0] : vector<128x128xf32> -> vector<128x128xf32>
    %c0_6 = arith.constant 0 : index
    %c0_7 = arith.constant 0 : index
    %c0_8 = arith.constant 0 : index
    %15 = vector.load %arg5[%c0_6, %c0_7, %c0_8] : memref<1x128x128xf32, #tpu.memory_space<vmem>>, vector<1x128x128xf32>
    %16 = vector.shape_cast %15 : vector<1x128x128xf32> to vector<128x128xf32>
    %17 = vector.shape_cast %14 : vector<128x128xf32> to vector<1x128x128xf32>
    tpu.vector_store %arg5[%c0_6, %c0_7, %c0_8], %17 {strides = array<i32>} : memref<1x128x128xf32, #tpu.memory_space<vmem>>, vector<1x128x128xf32>,
    return
  }
  func.func @transform_0(%arg0: i32, %arg1: i32, %arg2: i32) -> (i32, i32) {
    %c0_i32 = arith.constant 0 : i32
    %c0_i32_0 = arith.constant 0 : i32
    return %arg0, %c0_i32 : i32, i32
  }
  func.func @transform_1(%arg0: i32, %arg1: i32, %arg2: i32) -> (i32, i32, i32) {
    %c0_i32 = arith.constant 0 : i32
    %c0_i32_0 = arith.constant 0 : i32
    return %arg1, %c0_i32, %arg2 : i32, i32, i32
  }
  func.func @transform_2(%arg0: i32, %arg1: i32, %arg2: i32) -> (i32, i32, i32) {
    %c0_i32 = arith.constant 0 : i32
    return %arg1, %arg2, %arg0 : i32, i32, i32
  }
}

</mosaic_0001>

<llo_original>
// kernel: multi_resolution_spec.1
$region0: #{multi_resolution_spec.1}
  #allocation0 [shape = 'u32[]', space=smem, size = 0x4, offset = 0x4, fixed_abs, tag = 'smem constant byte address 0x4 - core index']
  #allocation1 [shape = 'u32[144,128]{1,0:T(1,128)}', space=vmem, size = 0x12000, scoped, tag = 'internal scratch']
  %s0 = inlined_call_operand.vmem [shape: bf16[128,2048], index: 0, kind: input, shape index: {}]
  %s1 = inlined_call_operand.vmem [shape: bf16[3,2048,2304], index: 1, kind: input, shape index: {}]
  %s2 = inlined_call_operand.vmem [shape: f32[3,1152,128], index: 2, kind: output, shape index: {}]
  %s3 = sld [smem:[#allocation0]]
  $region79: #{multi_resolution_spec.1} parent=0
    _
  %s5 = ssub.s32 1, %s3
  %s6 = scalar_select 0, %s5, %s3
  $region1: #{multi_resolution_spec.1} parent=0
    #allocation2 [shape = 'u8[2097152]{0}', space=vmem, size = 0x200000, scoped, tag = 'input window, operand 1']
    loop: start=0, step=1, limit=29
    $region2: #{multi_resolution_spec.1} parent=1 // loop_pre_header
      _
    $region3: #{multi_resolution_spec.1} parent=1 // loop_header
      %s8 = sphi 0, %s12
      %p9 = scmp.ge.s32.totalorder %s8, 29
      %s15 = sphi 0, %s34
      %s16 = sphi 0, %s30
      %s17 = sphi 0, %s26
      %s18 = sphi 0, %s15
      %s19 = sphi 0, %s16
      %s20 = sphi 0, %s17
      %s21 = sphi 0, %s18
      %s22 = sphi 0, %s19
      %s23 = sphi 0, %s20
      %s37 = sphi 0, %s39
      %s40 = sphi 0, %s37
      %s41 = sphi 0, %s40
      %s57 = sphi 0, %s41
      %s65 = sphi 0, %s67
      %s68 = sphi 0, %s65
      %s69 = sphi 0, %s68
      %s85 = sphi 0, %s69
      %s95 = sphi 0, %s97
      %s98 = sphi 0, %s95
      %s99 = sphi 0, %s98
      %s115 = sphi 0, %s99
    $region4: #{multi_resolution_spec.1} parent=1 // loop_header_branch
      %11 = sbr.rel (%p9) target = $region8
    $region5: #{multi_resolution_spec.1} parent=1 // loop_body
      %s13 = ssub.s32 %s8, 1
      %s14 = ssub.s32 %s8, 2
      %s24 = sadd.s32 1, %s17
      %p25 = scmp.ge.s32.totalorder %s24, 9
      %s26 = scalar_select %p25, 0, %s24
      %s27 = sadd.s32 1, %s16
      %s28 = scalar_select %p25, %s27, %s16
      %p29 = scmp.ge.s32.totalorder %s28, 3
      %s30 = scalar_select %p29, 0, %s28
      %s31 = sadd.s32 1, %s15
      %s32 = scalar_select %p29, %s31, %s15
      %p33 = scmp.ge.s32.totalorder %s32, 1
      %s34 = scalar_select %p33, 0, %s32
      %s35 = ssub.s32 %s15, %s34
      %p36 = scmp.eq.s32.totalorder %s35, 0
      %s38 = sadd.s32 %s37, 1
      %s39 = scalar_select %p36, %s37, %s38
      %p42 = pneg %p36
      %p43 = scmp.eq.s32.totalorder %s8, 26
      %p44 = por %p42, %p43
      %p45 = scmp.ne.s32.totalorder %s37, %s40
      %p46 = scmp.eq.s32.totalorder %s8, 0
      %p47 = por %p45, %p46
      %p48 = scmp.ne.s32.totalorder %s37, %s40
      %p49 = scmp.eq.s32.totalorder %s13, 26
      %p50 = por %p48, %p49
      %p51 = scmp.ne.s32.totalorder %s40, %s41
      %p52 = scmp.eq.s32.totalorder %s13, 0
      %p53 = por %p51, %p52
      %p54 = scmp.ne.s32.totalorder %s40, %s41
      %p55 = scmp.eq.s32.totalorder %s14, 26
      %p56 = por %p54, %p55
      %p58 = scmp.ne.s32.totalorder %s41, %s57
      %p59 = scmp.eq.s32.totalorder %s14, 0
      %p60 = por %p58, %p59
      %s61 = ssub.s32 %s16, %s30
      %s62 = ssub.s32 %s17, %s26
      %s63 = sor.u32 %s61, %s62
      %p64 = scmp.eq.s32.totalorder %s63, 0
      %s66 = sadd.s32 %s65, 1
      %s67 = scalar_select %p64, %s65, %s66
      %p70 = pneg %p64
      %p71 = scmp.eq.s32.totalorder %s8, 26
      %p72 = por %p70, %p71
      %p73 = scmp.ne.s32.totalorder %s65, %s68
      %p74 = scmp.eq.s32.totalorder %s8, 0
      %p75 = por %p73, %p74
      %p76 = scmp.ne.s32.totalorder %s65, %s68
      %p77 = scmp.eq.s32.totalorder %s13, 26
      %p78 = por %p76, %p77
      %p79 = scmp.ne.s32.totalorder %s68, %s69
      %p80 = scmp.eq.s32.totalorder %s13, 0
      %p81 = por %p79, %p80
      %p82 = scmp.ne.s32.totalorder %s68, %s69
      %p83 = scmp.eq.s32.totalorder %s14, 26
      %p84 = por %p82, %p83
      %p86 = scmp.ne.s32.totalorder %s69, %s85
      %p87 = scmp.eq.s32.totalorder %s14, 0
      %p88 = por %p86, %p87
      %s89 = ssub.s32 %s16, %s30
      %s90 = ssub.s32 %s17, %s26
      %s91 = sor.u32 %s89, %s90
      %s92 = ssub.s32 %s15, %s34
      %s93 = sor.u32 %s91, %s92
      %p94 = scmp.eq.s32.totalorder %s93, 0
      %s96 = sadd.s32 %s95, 1
      %s97 = scalar_select %p94, %s95, %s96
      %p100 = pneg %p94
      %p101 = scmp.eq.s32.totalorder %s8, 26
      %p102 = por %p100, %p101
      %p103 = scmp.ne.s32.totalorder %s95, %s98
      %p104 = scmp.eq.s32.totalorder %s8, 0
      %p105 = por %p103, %p104
      %p106 = scmp.ne.s32.totalorder %s95, %s98
      %p107 = scmp.eq.s32.totalorder %s13, 26
      %p108 = por %p106, %p107
      %p109 = scmp.ne.s32.totalorder %s98, %s99
      %p110 = scmp.eq.s32.totalorder %s13, 0
      %p111 = por %p109, %p110
      %p112 = scmp.ne.s32.totalorder %s98, %s99
      %p113 = scmp.eq.s32.totalorder %s14, 26
      %p114 = por %p112, %p113
      %p116 = scmp.ne.s32.totalorder %s99, %s115
      %p117 = scmp.eq.s32.totalorder %s14, 0
      %p118 = por %p116, %p117
      %p119 = scmp.le.s32.totalorder 1, %s8
      %p120 = scmp.lt.s32.totalorder %s8, 28
      %p121 = pnand %p119, %p120
      %p122 = pneg %p121
      // Predicated region
      $region9: #{multi_resolution_spec.1} parent=5 // pred_check
        _
      $region10: #{multi_resolution_spec.1} parent=5 // pred_check_branch
        %124 = sbr.rel (%p121) target = $region12
      $region11: #{multi_resolution_spec.1} parent=5 // pred_region
        %s125 = ssub.s32 %s8, 1
        // Predicated region
        $region13: #{multi_resolution_spec.1} parent=11 // pred_check
          %p126 = pneg %p53
        $region14: #{multi_resolution_spec.1} parent=11 // pred_check_branch
          %128 = sbr.rel (%p126) target = $region16
        $region15: #{multi_resolution_spec.1} parent=11 // pred_region
          %s129 = smul.u32 16, %s18
          %p130 = scmp.lt.s32.totalorder %s129, 15
          %s131 = scalar_select %p130, %s129, 15
          %s132 = smul.addr %s131, 16
          %s133 = smul.addr %s132, 4
          %s134 = scalar_lea.vmem %s0, %s133
          %s135 = smul.u32 16, %s18
        $region16: #{multi_resolution_spec.1} parent=11 // pred_fallthru
          _
      $region12: #{multi_resolution_spec.1} parent=5 // pred_fallthru
        _
      %p136 = scmp.lt.s32.totalorder %s8, 27
      // Predicated region
      $region17: #{multi_resolution_spec.1} parent=5 // pred_check
        %p137 = pneg %p136
      $region18: #{multi_resolution_spec.1} parent=5 // pred_check_branch
        %139 = sbr.rel (%p137) target = $region20
      $region19: #{multi_resolution_spec.1} parent=5 // pred_region
        // Predicated region
        $region21: #{multi_resolution_spec.1} parent=19 // pred_check
          %p140 = pneg %p75
        $region22: #{multi_resolution_spec.1} parent=19 // pred_check_branch
          %142 = sbr.rel (%p140) target = $region24
        $region23: #{multi_resolution_spec.1} parent=19 // pred_region
          %s143 = sand.u32 %s65, 1
          %s144 = sand.u32 %s65, 1
          %s145 = smul.addr %s144, 2048
          %s146 = scalar_lea.vmem [#allocation2], %s145
          %s147 = smul.u32 2, %s17
          %s148 = smul.addr %s16, 4608
          %s149 = sadd.s32 %s147, %s148
          %s150 = smul.addr %s149, 4
          %s151 = scalar_lea.vmem %s1, %s150
          // Predicated region
          $region25: #{multi_resolution_spec.1} parent=23 // pred_check
            _
          $region26: #{multi_resolution_spec.1} parent=23 // pred_check_branch
            %153 = sbr.rel (0) target = $region28
          $region27: #{multi_resolution_spec.1} parent=23 // pred_region
            // Predicated region
            $region29: #{multi_resolution_spec.1} parent=27 // pred_check
              _
            $region30: #{multi_resolution_spec.1} parent=27 // pred_check_branch
              %155 = sbr.rel (0) target = $region32
            $region31: #{multi_resolution_spec.1} parent=27 // pred_region
              // Predicated region
              $region44: #{multi_resolution_spec.1} parent=31 // pred_check
                _
              $region45: #{multi_resolution_spec.1} parent=31 // pred_check_branch
                %680 = sbr.rel (0) target = $region47
              $region46: #{multi_resolution_spec.1} parent=31 // pred_region
                loop: start=0, step=1, limit=1
                $region48: #{multi_resolution_spec.1} parent=46 // loop_pre_header
                  _
                $region49: #{multi_resolution_spec.1} parent=46 // loop_header
                  %s682 = sphi 0, %s686
                  %p683 = scmp.ge.s32.totalorder %s682, 1
                  %s687 = sphi %s151, %s151
                  %s688 = sphi %s146, %s146
                $region50: #{multi_resolution_spec.1} parent=46 // loop_header_branch
                  %685 = sbr.rel (%p683) target = $region54
                $region51: #{multi_resolution_spec.1} parent=46 // loop_body
                  %v689 = vld [vmem:[%s687] sm:$0xff]
                  %690 = vst [vmem:[%s688] sm:$0xff] %v689
                  %v691 = vld [vmem:[%s687 + $0x48] sm:$0xff]
                  %692 = vst [vmem:[%s688 + $0x8] sm:$0xff] %v691
                  %v693 = vld [vmem:[%s687 + $0x90] sm:$0xff]
                  %694 = vst [vmem:[%s688 + $0x10] sm:$0xff] %v693
                  %v695 = vld [vmem:[%s687 + $0xd8] sm:$0xff]
                  %696 = vst [vmem:[%s688 + $0x18] sm:$0xff] %v695
                  %v697 = vld [vmem:[%s687 + $0x120] sm:$0xff]
                  %698 = vst [vmem:[%s688 + $0x20] sm:$0xff] %v697
                  %v699 = vld [vmem:[%s687 + $0x168] sm:$0xff]
                  %700 = vst [vmem:[%s688 + $0x28] sm:$0xff] %v699
                  %v701 = vld [vmem:[%s687 + $0x1b0] sm:$0xff]
                  %702 = vst [vmem:[%s688 + $0x30] sm:$0xff] %v701
                  %v703 = vld [vmem:[%s687 + $0x1f8] sm:$0xff]
                  %704 = vst [vmem:[%s688 + $0x38] sm:$0xff] %v703
                  %v705 = vld [vmem:[%s687 + $0x240] sm:$0xff]
                  %706 = vst [vmem:[%s688 + $0x40] sm:$0xff] %v705
                  %v707 = vld [vmem:[%s687 + $0x288] sm:$0xff]
                  %708 = vst [vmem:[%s688 + $0x48] sm:$0xff] %v707
                  %v709 = vld [vmem:[%s687 + $0x2d0] sm:$0xff]
                  %710 = vst [vmem:[%s688 + $0x50] sm:$0xff] %v709
                  %v711 = vld [vmem:[%s687 + $0x318] sm:$0xff]
                  %712 = vst [vmem:[%s688 + $0x58] sm:$0xff] %v711
                  %v713 = vld [vmem:[%s687 + $0x360] sm:$0xff]
                  %714 = vst [vmem:[%s688 + $0x60] sm:$0xff] %v713
                  %v715 = vld [vmem:[%s687 + $0x3a8] sm:$0xff]
                  %716 = vst [vmem:[%s688 + $0x68] sm:$0xff] %v715
                  %v717 = vld [vmem:[%s687 + $0x3f0] sm:$0xff]
                  %718 = vst [vmem:[%s688 + $0x70] sm:$0xff] %v717
                  %v719 = vld [vmem:[%s687 + $0x438] sm:$0xff]
                  %720 = vst [vmem:[%s688 + $0x78] sm:$0xff] %v719
                  %v721 = vld [vmem:[%s687 + $0x480] sm:$0xff]
                  %722 = vst [vmem:[%s688 + $0x80] sm:$0xff] %v721
                  %v723 = vld [vmem:[%s687 + $0x4c8] sm:$0xff]
                  %724 = vst [vmem:[%s688 + $0x88] sm:$0xff] %v723
                  %v725 = vld [vmem:[%s687 + $0x510] sm:$0xff]
                  %726 = vst [vmem:[%s688 + $0x90] sm:$0xff] %v725
                  %v727 = vld [vmem:[%s687 + $0x558] sm:$0xff]
                  %728 = vst [vmem:[%s688 + $0x98] sm:$0xff] %v727
                  %v729 = vld [vmem:[%s687 + $0x5a0] sm:$0xff]
                  %730 = vst [vmem:[%s688 + $0xa0] sm:$0xff] %v729
                  %v731 = vld [vmem:[%s687 + $0x5e8] sm:$0xff]
                  %732 = vst [vmem:[%s688 + $0xa8] sm:$0xff] %v731
                  %v733 = vld [vmem:[%s687 + $0x630] sm:$0xff]
                  %734 = vst [vmem:[%s688 + $0xb0] sm:$0xff] %v733
                  %v735 = vld [vmem:[%s687 + $0x678] sm:$0xff]
                  %736 = vst [vmem:[%s688 + $0xb8] sm:$0xff] %v735
                  %v737 = vld [vmem:[%s687 + $0x6c0] sm:$0xff]
                  %738 = vst [vmem:[%s688 + $0xc0] sm:$0xff] %v737
                  %v739 = vld [vmem:[%s687 + $0x708] sm:$0xff]
                  %740 = vst [vmem:[%s688 + $0xc8] sm:$0xff] %v739
                  %v741 = vld [vmem:[%s687 + $0x750] sm:$0xff]
                  %742 = vst [vmem:[%s688 + $0xd0] sm:$0xff] %v741
                  %v743 = vld [vmem:[%s687 + $0x798] sm:$0xff]
                  %744 = vst [vmem:[%s688 + $0xd8] sm:$0xff] %v743
                  %v745 = vld [vmem:[%s687 + $0x7e0] sm:$0xff]
                  %746 = vst [vmem:[%s688 + $0xe0] sm:$0xff] %v745
                  %v747 = vld [vmem:[%s687 + $0x828] sm:$0xff]
                  %748 = vst [vmem:[%s688 + $0xe8] sm:$0xff] %v747
                  %v749 = vld [vmem:[%s687 + $0x870] sm:$0xff]
                  %750 = vst [vmem:[%s688 + $0xf0] sm:$0xff] %v749
                  %v751 = vld [vmem:[%s687 + $0x8b8] sm:$0xff]
                  %752 = vst [vmem:[%s688 + $0xf8] sm:$0xff] %v751
                  %v753 = vld [vmem:[%s687 + $0x900] sm:$0xff]
                  %754 = vst [vmem:[%s688 + $0x100] sm:$0xff] %v753
                  %v755 = vld [vmem:[%s687 + $0x948] sm:$0xff]
                  %756 = vst [vmem:[%s688 + $0x108] sm:$0xff] %v755
                  %v757 = vld [vmem:[%s687 + $0x990] sm:$0xff]
                  %758 = vst [vmem:[%s688 + $0x110] sm:$0xff] %v757
                  %v759 = vld [vmem:[%s687 + $0x9d8] sm:$0xff]
                  %760 = vst [vmem:[%s688 + $0x118] sm:$0xff] %v759
                  %v761 = vld [vmem:[%s687 + $0xa20] sm:$0xff]
                  %762 = vst [vmem:[%s688 + $0x120] sm:$0xff] %v761
                  %v763 = vld [vmem:[%s687 + $0xa68] sm:$0xff]
                  %764 = vst [vmem:[%s688 + $0x128] sm:$0xff] %v763
                  %v765 = vld [vmem:[%s687 + $0xab0] sm:$0xff]
                  %766 = vst [vmem:[%s688 + $0x130] sm:$0xff] %v765
                  %v767 = vld [vmem:[%s687 + $0xaf8] sm:$0xff]
                  %768 = vst [vmem:[%s688 + $0x138] sm:$0xff] %v767
                  %v769 = vld [vmem:[%s687 + $0xb40] sm:$0xff]
                  %770 = vst [vmem:[%s688 + $0x140] sm:$0xff] %v769
                  %v771 = vld [vmem:[%s687 + $0xb88] sm:$0xff]
                  %772 = vst [vmem:[%s688 + $0x148] sm:$0xff] %v771
                  %v773 = vld [vmem:[%s687 + $0xbd0] sm:$0xff]
                  %774 = vst [vmem:[%s688 + $0x150] sm:$0xff] %v773
                  %v775 = vld [vmem:[%s687 + $0xc18] sm:$0xff]
                  %776 = vst [vmem:[%s688 + $0x158] sm:$0xff] %v775
                  %v777 = vld [vmem:[%s687 + $0xc60] sm:$0xff]
                  %778 = vst [vmem:[%s688 + $0x160] sm:$0xff] %v777
                  %v779 = vld [vmem:[%s687 + $0xca8] sm:$0xff]
                  %780 = vst [vmem:[%s688 + $0x168] sm:$0xff] %v779
                  %v781 = vld [vmem:[%s687 + $0xcf0] sm:$0xff]
                  %782 = vst [vmem:[%s688 + $0x170] sm:$0xff] %v781
                  %v783 = vld [vmem:[%s687 + $0xd38] sm:$0xff]
                  %784 = vst [vmem:[%s688 + $0x178] sm:$0xff] %v783
                  %v785 = vld [vmem:[%s687 + $0xd80] sm:$0xff]
                  %786 = vst [vmem:[%s688 + $0x180] sm:$0xff] %v785
                  %v787 = vld [vmem:[%s687 + $0xdc8] sm:$0xff]
                  %788 = vst [vmem:[%s688 + $0x188] sm:$0xff] %v787
                  %v789 = vld [vmem:[%s687 + $0xe10] sm:$0xff]
                  %790 = vst [vmem:[%s688 + $0x190] sm:$0xff] %v789
                  %v791 = vld [vmem:[%s687 + $0xe58] sm:$0xff]
                  %792 = vst [vmem:[%s688 + $0x198] sm:$0xff] %v791
                  %v793 = vld [vmem:[%s687 + $0xea0] sm:$0xff]
                  %794 = vst [vmem:[%s688 + $0x1a0] sm:$0xff] %v793
                  %v795 = vld [vmem:[%s687 + $0xee8] sm:$0xff]
                  %796 = vst [vmem:[%s688 + $0x1a8] sm:$0xff] %v795
                  %v797 = vld [vmem:[%s687 + $0xf30] sm:$0xff]
                  %798 = vst [vmem:[%s688 + $0x1b0] sm:$0xff] %v797
                  %v799 = vld [vmem:[%s687 + $0xf78] sm:$0xff]
                  %800 = vst [vmem:[%s688 + $0x1b8] sm:$0xff] %v799
                  %v801 = vld [vmem:[%s687 + $0xfc0] sm:$0xff]
                  %802 = vst [vmem:[%s688 + $0x1c0] sm:$0xff] %v801
                  %v803 = vld [vmem:[%s687 + $0x1008] sm:$0xff]
                  %804 = vst [vmem:[%s688 + $0x1c8] sm:$0xff] %v803
                  %v805 = vld [vmem:[%s687 + $0x1050] sm:$0xff]
                  %806 = vst [vmem:[%s688 + $0x1d0] sm:$0xff] %v805
                  %v807 = vld [vmem:[%s687 + $0x1098] sm:$0xff]
                  %808 = vst [vmem:[%s688 + $0x1d8] sm:$0xff] %v807
                  %v809 = vld [vmem:[%s687 + $0x10e0] sm:$0xff]
                  %810 = vst [vmem:[%s688 + $0x1e0] sm:$0xff] %v809
                  %v811 = vld [vmem:[%s687 + $0x1128] sm:$0xff]
                  %812 = vst [vmem:[%s688 + $0x1e8] sm:$0xff] %v811
                  %v813 = vld [vmem:[%s687 + $0x1170] sm:$0xff]
                  %814 = vst [vmem:[%s688 + $0x1f0] sm:$0xff] %v813
                  %v815 = vld [vmem:[%s687 + $0x11b8] sm:$0xff]
                  %816 = vst [vmem:[%s688 + $0x1f8] sm:$0xff] %v815
                  %v817 = vld [vmem:[%s687 + $0x1200] sm:$0xff]
                  %818 = vst [vmem:[%s688 + $0x200] sm:$0xff] %v817
                  %v819 = vld [vmem:[%s687 + $0x1248] sm:$0xff]
                  %820 = vst [vmem:[%s688 + $0x208] sm:$0xff] %v819
                  %v821 = vld [vmem:[%s687 + $0x1290] sm:$0xff]
                  %822 = vst [vmem:[%s688 + $0x210] sm:$0xff] %v821
                  %v823 = vld [vmem:[%s687 + $0x12d8] sm:$0xff]
                  %824 = vst [vmem:[%s688 + $0x218] sm:$0xff] %v823
                  %v825 = vld [vmem:[%s687 + $0x1320] sm:$0xff]
                  %826 = vst [vmem:[%s688 + $0x220] sm:$0xff] %v825
                  %v827 = vld [vmem:[%s687 + $0x1368] sm:$0xff]
                  %828 = vst [vmem:[%s688 + $0x228] sm:$0xff] %v827
                  %v829 = vld [vmem:[%s687 + $0x13b0] sm:$0xff]
                  %830 = vst [vmem:[%s688 + $0x230] sm:$0xff] %v829
                  %v831 = vld [vmem:[%s687 + $0x13f8] sm:$0xff]
                  %832 = vst [vmem:[%s688 + $0x238] sm:$0xff] %v831
                  %v833 = vld [vmem:[%s687 + $0x1440] sm:$0xff]
                  %834 = vst [vmem:[%s688 + $0x240] sm:$0xff] %v833
                  %v835 = vld [vmem:[%s687 + $0x1488] sm:$0xff]
                  %836 = vst [vmem:[%s688 + $0x248] sm:$0xff] %v835
                  %v837 = vld [vmem:[%s687 + $0x14d0] sm:$0xff]
                  %838 = vst [vmem:[%s688 + $0x250] sm:$0xff] %v837
                  %v839 = vld [vmem:[%s687 + $0x1518] sm:$0xff]
                  %840 = vst [vmem:[%s688 + $0x258] sm:$0xff] %v839
                  %v841 = vld [vmem:[%s687 + $0x1560] sm:$0xff]
                  %842 = vst [vmem:[%s688 + $0x260] sm:$0xff] %v841
                  %v843 = vld [vmem:[%s687 + $0x15a8] sm:$0xff]
                  %844 = vst [vmem:[%s688 + $0x268] sm:$0xff] %v843
                  %v845 = vld [vmem:[%s687 + $0x15f0] sm:$0xff]
                  %846 = vst [vmem:[%s688 + $0x270] sm:$0xff] %v845
                  %v847 = vld [vmem:[%s687 + $0x1638] sm:$0xff]
                  %848 = vst [vmem:[%s688 + $0x278] sm:$0xff] %v847
                  %v849 = vld [vmem:[%s687 + $0x1680] sm:$0xff]
                  %850 = vst [vmem:[%s688 + $0x280] sm:$0xff] %v849
                  %v851 = vld [vmem:[%s687 + $0x16c8] sm:$0xff]
                  %852 = vst [vmem:[%s688 + $0x288] sm:$0xff] %v851
                  %v853 = vld [vmem:[%s687 + $0x1710] sm:$0xff]
                  %854 = vst [vmem:[%s688 + $0x290] sm:$0xff] %v853
                  %v855 = vld [vmem:[%s687 + $0x1758] sm:$0xff]
                  %856 = vst [vmem:[%s688 + $0x298] sm:$0xff] %v855
                  %v857 = vld [vmem:[%s687 + $0x17a0] sm:$0xff]
                  %858 = vst [vmem:[%s688 + $0x2a0] sm:$0xff] %v857
                  %v859 = vld [vmem:[%s687 + $0x17e8] sm:$0xff]
                  %860 = vst [vmem:[%s688 + $0x2a8] sm:$0xff] %v859
                  %v861 = vld [vmem:[%s687 + $0x1830] sm:$0xff]
                  %862 = vst [vmem:[%s688 + $0x2b0] sm:$0xff] %v861
                  %v863 = vld [vmem:[%s687 + $0x1878] sm:$0xff]
                  %864 = vst [vmem:[%s688 + $0x2b8] sm:$0xff] %v863
                  %v865 = vld [vmem:[%s687 + $0x18c0] sm:$0xff]
                  %866 = vst [vmem:[%s688 + $0x2c0] sm:$0xff] %v865
                  %v867 = vld [vmem:[%s687 + $0x1908] sm:$0xff]
                  %868 = vst [vmem:[%s688 + $0x2c8] sm:$0xff] %v867
                  %v869 = vld [vmem:[%s687 + $0x1950] sm:$0xff]
                  %870 = vst [vmem:[%s688 + $0x2d0] sm:$0xff] %v869
                  %v871 = vld [vmem:[%s687 + $0x1998] sm:$0xff]
                  %872 = vst [vmem:[%s688 + $0x2d8] sm:$0xff] %v871
                  %v873 = vld [vmem:[%s687 + $0x19e0] sm:$0xff]
                  %874 = vst [vmem:[%s688 + $0x2e0] sm:$0xff] %v873
                  %v875 = vld [vmem:[%s687 + $0x1a28] sm:$0xff]
                  %876 = vst [vmem:[%s688 + $0x2e8] sm:$0xff] %v875
                  %v877 = vld [vmem:[%s687 + $0x1a70] sm:$0xff]
                  %878 = vst [vmem:[%s688 + $0x2f0] sm:$0xff] %v877
                  %v879 = vld [vmem:[%s687 + $0x1ab8] sm:$0xff]
                  %880 = vst [vmem:[%s688 + $0x2f8] sm:$0xff] %v879
                  %v881 = vld [vmem:[%s687 + $0x1b00] sm:$0xff]
                  %882 = vst [vmem:[%s688 + $0x300] sm:$0xff] %v881
                  %v883 = vld [vmem:[%s687 + $0x1b48] sm:$0xff]
                  %884 = vst [vmem:[%s688 + $0x308] sm:$0xff] %v883
                  %v885 = vld [vmem:[%s687 + $0x1b90] sm:$0xff]
                  %886 = vst [vmem:[%s688 + $0x310] sm:$0xff] %v885
                  %v887 = vld [vmem:[%s687 + $0x1bd8] sm:$0xff]
                  %888 = vst [vmem:[%s688 + $0x318] sm:$0xff] %v887
                  %v889 = vld [vmem:[%s687 + $0x1c20] sm:$0xff]
                  %890 = vst [vmem:[%s688 + $0x320] sm:$0xff] %v889
                  %v891 = vld [vmem:[%s687 + $0x1c68] sm:$0xff]
                  %892 = vst [vmem:[%s688 + $0x328] sm:$0xff] %v891
                  %v893 = vld [vmem:[%s687 + $0x1cb0] sm:$0xff]
                  %894 = vst [vmem:[%s688 + $0x330] sm:$0xff] %v893
                  %v895 = vld [vmem:[%s687 + $0x1cf8] sm:$0xff]
                  %896 = vst [vmem:[%s688 + $0x338] sm:$0xff] %v895
                  %v897 = vld [vmem:[%s687 + $0x1d40] sm:$0xff]
                  %898 = vst [vmem:[%s688 + $0x340] sm:$0xff] %v897
                  %v899 = vld [vmem:[%s687 + $0x1d88] sm:$0xff]
                  %900 = vst [vmem:[%s688 + $0x348] sm:$0xff] %v899
                  %v901 = vld [vmem:[%s687 + $0x1dd0] sm:$0xff]
                  %902 = vst [vmem:[%s688 + $0x350] sm:$0xff] %v901
                  %v903 = vld [vmem:[%s687 + $0x1e18] sm:$0xff]
                  %904 = vst [vmem:[%s688 + $0x358] sm:$0xff] %v903
                  %v905 = vld [vmem:[%s687 + $0x1e60] sm:$0xff]
                  %906 = vst [vmem:[%s688 + $0x360] sm:$0xff] %v905
                  %v907 = vld [vmem:[%s687 + $0x1ea8] sm:$0xff]
                  %908 = vst [vmem:[%s688 + $0x368] sm:$0xff] %v907
                  %v909 = vld [vmem:[%s687 + $0x1ef0] sm:$0xff]
                  %910 = vst [vmem:[%s688 + $0x370] sm:$0xff] %v909
                  %v911 = vld [vmem:[%s687 + $0x1f38] sm:$0xff]
                  %912 = vst [vmem:[%s688 + $0x378] sm:$0xff] %v911
                  %v913 = vld [vmem:[%s687 + $0x1f80] sm:$0xff]
                  %914 = vst [vmem:[%s688 + $0x380] sm:$0xff] %v913
                  %v915 = vld [vmem:[%s687 + $0x1fc8] sm:$0xff]
                  %916 = vst [vmem:[%s688 + $0x388] sm:$0xff] %v915
                  %v917 = vld [vmem:[%s687 + $0x2010] sm:$0xff]
                  %918 = vst [vmem:[%s688 + $0x390] sm:$0xff] %v917
                  %v919 = vld [vmem:[%s687 + $0x2058] sm:$0xff]
                  %920 = vst [vmem:[%s688 + $0x398] sm:$0xff] %v919
                  %v921 = vld [vmem:[%s687 + $0x20a0] sm:$0xff]
                  %922 = vst [vmem:[%s688 + $0x3a0] sm:$0xff] %v921
                  %v923 = vld [vmem:[%s687 + $0x20e8] sm:$0xff]
                  %924 = vst [vmem:[%s688 + $0x3a8] sm:$0xff] %v923
                  %v925 = vld [vmem:[%s687 + $0x2130] sm:$0xff]
                  %926 = vst [vmem:[%s688 + $0x3b0] sm:$0xff] %v925
                  %v927 = vld [vmem:[%s687 + $0x2178] sm:$0xff]
                  %928 = vst [vmem:[%s688 + $0x3b8] sm:$0xff] %v927
                  %v929 = vld [vmem:[%s687 + $0x21c0] sm:$0xff]
                  %930 = vst [vmem:[%s688 + $0x3c0] sm:$0xff] %v929
                  %v931 = vld [vmem:[%s687 + $0x2208] sm:$0xff]
                  %932 = vst [vmem:[%s688 + $0x3c8] sm:$0xff] %v931
                  %v933 = vld [vmem:[%s687 + $0x2250] sm:$0xff]
                  %934 = vst [vmem:[%s688 + $0x3d0] sm:$0xff] %v933
                  %v935 = vld [vmem:[%s687 + $0x2298] sm:$0xff]
                  %936 = vst [vmem:[%s688 + $0x3d8] sm:$0xff] %v935
                  %v937 = vld [vmem:[%s687 + $0x22e0] sm:$0xff]
                  %938 = vst [vmem:[%s688 + $0x3e0] sm:$0xff] %v937
                  %v939 = vld [vmem:[%s687 + $0x2328] sm:$0xff]
                  %940 = vst [vmem:[%s688 + $0x3e8] sm:$0xff] %v939
                  %v941 = vld [vmem:[%s687 + $0x2370] sm:$0xff]
                  %942 = vst [vmem:[%s688 + $0x3f0] sm:$0xff] %v941
                  %v943 = vld [vmem:[%s687 + $0x23b8] sm:$0xff]
                  %944 = vst [vmem:[%s688 + $0x3f8] sm:$0xff] %v943
                  %v945 = vld [vmem:[%s687 + $0x2400] sm:$0xff]
                  %946 = vst [vmem:[%s688 + $0x400] sm:$0xff] %v945
                  %v947 = vld [vmem:[%s687 + $0x2448] sm:$0xff]
                  %948 = vst [vmem:[%s688 + $0x408] sm:$0xff] %v947
                  %v949 = vld [vmem:[%s687 + $0x2490] sm:$0xff]
                  %950 = vst [vmem:[%s688 + $0x410] sm:$0xff] %v949
                  %v951 = vld [vmem:[%s687 + $0x24d8] sm:$0xff]
                  %952 = vst [vmem:[%s688 + $0x418] sm:$0xff] %v951
                  %v953 = vld [vmem:[%s687 + $0x2520] sm:$0xff]
                  %954 = vst [vmem:[%s688 + $0x420] sm:$0xff] %v953
                  %v955 = vld [vmem:[%s687 + $0x2568] sm:$0xff]
                  %956 = vst [vmem:[%s688 + $0x428] sm:$0xff] %v955
                  %v957 = vld [vmem:[%s687 + $0x25b0] sm:$0xff]
                  %958 = vst [vmem:[%s688 + $0x430] sm:$0xff] %v957
                  %v959 = vld [vmem:[%s687 + $0x25f8] sm:$0xff]
                  %960 = vst [vmem:[%s688 + $0x438] sm:$0xff] %v959
                  %v961 = vld [vmem:[%s687 + $0x2640] sm:$0xff]
                  %962 = vst [vmem:[%s688 + $0x440] sm:$0xff] %v961
                  %v963 = vld [vmem:[%s687 + $0x2688] sm:$0xff]
                  %964 = vst [vmem:[%s688 + $0x448] sm:$0xff] %v963
                  %v965 = vld [vmem:[%s687 + $0x26d0] sm:$0xff]
                  %966 = vst [vmem:[%s688 + $0x450] sm:$0xff] %v965
                  %v967 = vld [vmem:[%s687 + $0x2718] sm:$0xff]
                  %968 = vst [vmem:[%s688 + $0x458] sm:$0xff] %v967
                  %v969 = vld [vmem:[%s687 + $0x2760] sm:$0xff]
                  %970 = vst [vmem:[%s688 + $0x460] sm:$0xff] %v969
                  %v971 = vld [vmem:[%s687 + $0x27a8] sm:$0xff]
                  %972 = vst [vmem:[%s688 + $0x468] sm:$0xff] %v971
                  %v973 = vld [vmem:[%s687 + $0x27f0] sm:$0xff]
                  %974 = vst [vmem:[%s688 + $0x470] sm:$0xff] %v973
                  %v975 = vld [vmem:[%s687 + $0x2838] sm:$0xff]
                  %976 = vst [vmem:[%s688 + $0x478] sm:$0xff] %v975
                  %v977 = vld [vmem:[%s687 + $0x2880] sm:$0xff]
                  %978 = vst [vmem:[%s688 + $0x480] sm:$0xff] %v977
                  %v979 = vld [vmem:[%s687 + $0x28c8] sm:$0xff]
                  %980 = vst [vmem:[%s688 + $0x488] sm:$0xff] %v979
                  %v981 = vld [vmem:[%s687 + $0x2910] sm:$0xff]
                  %982 = vst [vmem:[%s688 + $0x490] sm:$0xff] %v981
                  %v983 = vld [vmem:[%s687 + $0x2958] sm:$0xff]
                  %984 = vst [vmem:[%s688 + $0x498] sm:$0xff] %v983
                  %v985 = vld [vmem:[%s687 + $0x29a0] sm:$0xff]
                  %986 = vst [vmem:[%s688 + $0x4a0] sm:$0xff] %v985
                  %v987 = vld [vmem:[%s687 + $0x29e8] sm:$0xff]
                  %988 = vst [vmem:[%s688 + $0x4a8] sm:$0xff] %v987
                  %v989 = vld [vmem:[%s687 + $0x2a30] sm:$0xff]
                  %990 = vst [vmem:[%s688 + $0x4b0] sm:$0xff] %v989
                  %v991 = vld [vmem:[%s687 + $0x2a78] sm:$0xff]
                  %992 = vst [vmem:[%s688 + $0x4b8] sm:$0xff] %v991
                  %v993 = vld [vmem:[%s687 + $0x2ac0] sm:$0xff]
                  %994 = vst [vmem:[%s688 + $0x4c0] sm:$0xff] %v993
                  %v995 = vld [vmem:[%s687 + $0x2b08] sm:$0xff]
                  %996 = vst [vmem:[%s688 + $0x4c8] sm:$0xff] %v995
                  %v997 = vld [vmem:[%s687 + $0x2b50] sm:$0xff]
                  %998 = vst [vmem:[%s688 + $0x4d0] sm:$0xff] %v997
                  %v999 = vld [vmem:[%s687 + $0x2b98] sm:$0xff]
                  %1000 = vst [vmem:[%s688 + $0x4d8] sm:$0xff] %v999
                  %v1001 = vld [vmem:[%s687 + $0x2be0] sm:$0xff]
                  %1002 = vst [vmem:[%s688 + $0x4e0] sm:$0xff] %v1001
                  %v1003 = vld [vmem:[%s687 + $0x2c28] sm:$0xff]
                  %1004 = vst [vmem:[%s688 + $0x4e8] sm:$0xff] %v1003
                  %v1005 = vld [vmem:[%s687 + $0x2c70] sm:$0xff]
                  %1006 = vst [vmem:[%s688 + $0x4f0] sm:$0xff] %v1005
                  %v1007 = vld [vmem:[%s687 + $0x2cb8] sm:$0xff]
                  %1008 = vst [vmem:[%s688 + $0x4f8] sm:$0xff] %v1007
                  %v1009 = vld [vmem:[%s687 + $0x2d00] sm:$0xff]
                  %1010 = vst [vmem:[%s688 + $0x500] sm:$0xff] %v1009
                  %v1011 = vld [vmem:[%s687 + $0x2d48] sm:$0xff]
                  %1012 = vst [vmem:[%s688 + $0x508] sm:$0xff] %v1011
                  %v1013 = vld [vmem:[%s687 + $0x2d90] sm:$0xff]
                  %1014 = vst [vmem:[%s688 + $0x510] sm:$0xff] %v1013
                  %v1015 = vld [vmem:[%s687 + $0x2dd8] sm:$0xff]
                  %1016 = vst [vmem:[%s688 + $0x518] sm:$0xff] %v1015
                  %v1017 = vld [vmem:[%s687 + $0x2e20] sm:$0xff]
                  %1018 = vst [vmem:[%s688 + $0x520] sm:$0xff] %v1017
                  %v1019 = vld [vmem:[%s687 + $0x2e68] sm:$0xff]
                  %1020 = vst [vmem:[%s688 + $0x528] sm:$0xff] %v1019
                  %v1021 = vld [vmem:[%s687 + $0x2eb0] sm:$0xff]
                  %1022 = vst [vmem:[%s688 + $0x530] sm:$0xff] %v1021
                  %v1023 = vld [vmem:[%s687 + $0x2ef8] sm:$0xff]
                  %1024 = vst [vmem:[%s688 + $0x538] sm:$0xff] %v1023
                  %v1025 = vld [vmem:[%s687 + $0x2f40] sm:$0xff]
                  %1026 = vst [vmem:[%s688 + $0x540] sm:$0xff] %v1025
                  %v1027 = vld [vmem:[%s687 + $0x2f88] sm:$0xff]
                  %1028 = vst [vmem:[%s688 + $0x548] sm:$0xff] %v1027
                  %v1029 = vld [vmem:[%s687 + $0x2fd0] sm:$0xff]
                  %1030 = vst [vmem:[%s688 + $0x550] sm:$0xff] %v1029
                  %v1031 = vld [vmem:[%s687 + $0x3018] sm:$0xff]
                  %1032 = vst [vmem:[%s688 + $0x558] sm:$0xff] %v1031
                  %v1033 = vld [vmem:[%s687 + $0x3060] sm:$0xff]
                  %1034 = vst [vmem:[%s688 + $0x560] sm:$0xff] %v1033
                  %v1035 = vld [vmem:[%s687 + $0x30a8] sm:$0xff]
                  %1036 = vst [vmem:[%s688 + $0x568] sm:$0xff] %v1035
                  %v1037 = vld [vmem:[%s687 + $0x30f0] sm:$0xff]
                  %1038 = vst [vmem:[%s688 + $0x570] sm:$0xff] %v1037
                  %v1039 = vld [vmem:[%s687 + $0x3138] sm:$0xff]
                  %1040 = vst [vmem:[%s688 + $0x578] sm:$0xff] %v1039
                  %v1041 = vld [vmem:[%s687 + $0x3180] sm:$0xff]
                  %1042 = vst [vmem:[%s688 + $0x580] sm:$0xff] %v1041
                  %v1043 = vld [vmem:[%s687 + $0x31c8] sm:$0xff]
                  %1044 = vst [vmem:[%s688 + $0x588] sm:$0xff] %v1043
                  %v1045 = vld [vmem:[%s687 + $0x3210] sm:$0xff]
                  %1046 = vst [vmem:[%s688 + $0x590] sm:$0xff] %v1045
                  %v1047 = vld [vmem:[%s687 + $0x3258] sm:$0xff]
                  %1048 = vst [vmem:[%s688 + $0x598] sm:$0xff] %v1047
                  %v1049 = vld [vmem:[%s687 + $0x32a0] sm:$0xff]
                  %1050 = vst [vmem:[%s688 + $0x5a0] sm:$0xff] %v1049
                  %v1051 = vld [vmem:[%s687 + $0x32e8] sm:$0xff]
                  %1052 = vst [vmem:[%s688 + $0x5a8] sm:$0xff] %v1051
                  %v1053 = vld [vmem:[%s687 + $0x3330] sm:$0xff]
                  %1054 = vst [vmem:[%s688 + $0x5b0] sm:$0xff] %v1053
                  %v1055 = vld [vmem:[%s687 + $0x3378] sm:$0xff]
                  %1056 = vst [vmem:[%s688 + $0x5b8] sm:$0xff] %v1055
                  %v1057 = vld [vmem:[%s687 + $0x33c0] sm:$0xff]
                  %1058 = vst [vmem:[%s688 + $0x5c0] sm:$0xff] %v1057
                  %v1059 = vld [vmem:[%s687 + $0x3408] sm:$0xff]
                  %1060 = vst [vmem:[%s688 + $0x5c8] sm:$0xff] %v1059
                  %v1061 = vld [vmem:[%s687 + $0x3450] sm:$0xff]
                  %1062 = vst [vmem:[%s688 + $0x5d0] sm:$0xff] %v1061
                  %v1063 = vld [vmem:[%s687 + $0x3498] sm:$0xff]
                  %1064 = vst [vmem:[%s688 + $0x5d8] sm:$0xff] %v1063
                  %v1065 = vld [vmem:[%s687 + $0x34e0] sm:$0xff]
                  %1066 = vst [vmem:[%s688 + $0x5e0] sm:$0xff] %v1065
                  %v1067 = vld [vmem:[%s687 + $0x3528] sm:$0xff]
                  %1068 = vst [vmem:[%s688 + $0x5e8] sm:$0xff] %v1067
                  %v1069 = vld [vmem:[%s687 + $0x3570] sm:$0xff]
                  %1070 = vst [vmem:[%s688 + $0x5f0] sm:$0xff] %v1069
                  %v1071 = vld [vmem:[%s687 + $0x35b8] sm:$0xff]
                  %1072 = vst [vmem:[%s688 + $0x5f8] sm:$0xff] %v1071
                  %v1073 = vld [vmem:[%s687 + $0x3600] sm:$0xff]
                  %1074 = vst [vmem:[%s688 + $0x600] sm:$0xff] %v1073
                  %v1075 = vld [vmem:[%s687 + $0x3648] sm:$0xff]
                  %1076 = vst [vmem:[%s688 + $0x608] sm:$0xff] %v1075
                  %v1077 = vld [vmem:[%s687 + $0x3690] sm:$0xff]
                  %1078 = vst [vmem:[%s688 + $0x610] sm:$0xff] %v1077
                  %v1079 = vld [vmem:[%s687 + $0x36d8] sm:$0xff]
                  %1080 = vst [vmem:[%s688 + $0x618] sm:$0xff] %v1079
                  %v1081 = vld [vmem:[%s687 + $0x3720] sm:$0xff]
                  %1082 = vst [vmem:[%s688 + $0x620] sm:$0xff] %v1081
                  %v1083 = vld [vmem:[%s687 + $0x3768] sm:$0xff]
                  %1084 = vst [vmem:[%s688 + $0x628] sm:$0xff] %v1083
                  %v1085 = vld [vmem:[%s687 + $0x37b0] sm:$0xff]
                  %1086 = vst [vmem:[%s688 + $0x630] sm:$0xff] %v1085
                  %v1087 = vld [vmem:[%s687 + $0x37f8] sm:$0xff]
                  %1088 = vst [vmem:[%s688 + $0x638] sm:$0xff] %v1087
                  %v1089 = vld [vmem:[%s687 + $0x3840] sm:$0xff]
                  %1090 = vst [vmem:[%s688 + $0x640] sm:$0xff] %v1089
                  %v1091 = vld [vmem:[%s687 + $0x3888] sm:$0xff]
                  %1092 = vst [vmem:[%s688 + $0x648] sm:$0xff] %v1091
                  %v1093 = vld [vmem:[%s687 + $0x38d0] sm:$0xff]
                  %1094 = vst [vmem:[%s688 + $0x650] sm:$0xff] %v1093
                  %v1095 = vld [vmem:[%s687 + $0x3918] sm:$0xff]
                  %1096 = vst [vmem:[%s688 + $0x658] sm:$0xff] %v1095
                  %v1097 = vld [vmem:[%s687 + $0x3960] sm:$0xff]
                  %1098 = vst [vmem:[%s688 + $0x660] sm:$0xff] %v1097
                  %v1099 = vld [vmem:[%s687 + $0x39a8] sm:$0xff]
                  %1100 = vst [vmem:[%s688 + $0x668] sm:$0xff] %v1099
                  %v1101 = vld [vmem:[%s687 + $0x39f0] sm:$0xff]
                  %1102 = vst [vmem:[%s688 + $0x670] sm:$0xff] %v1101
                  %v1103 = vld [vmem:[%s687 + $0x3a38] sm:$0xff]
                  %1104 = vst [vmem:[%s688 + $0x678] sm:$0xff] %v1103
                  %v1105 = vld [vmem:[%s687 + $0x3a80] sm:$0xff]
                  %1106 = vst [vmem:[%s688 + $0x680] sm:$0xff] %v1105
                  %v1107 = vld [vmem:[%s687 + $0x3ac8] sm:$0xff]
                  %1108 = vst [vmem:[%s688 + $0x688] sm:$0xff] %v1107
                  %v1109 = vld [vmem:[%s687 + $0x3b10] sm:$0xff]
                  %1110 = vst [vmem:[%s688 + $0x690] sm:$0xff] %v1109
                  %v1111 = vld [vmem:[%s687 + $0x3b58] sm:$0xff]
                  %1112 = vst [vmem:[%s688 + $0x698] sm:$0xff] %v1111
                  %v1113 = vld [vmem:[%s687 + $0x3ba0] sm:$0xff]
                  %1114 = vst [vmem:[%s688 + $0x6a0] sm:$0xff] %v1113
                  %v1115 = vld [vmem:[%s687 + $0x3be8] sm:$0xff]
                  %1116 = vst [vmem:[%s688 + $0x6a8] sm:$0xff] %v1115
                  %v1117 = vld [vmem:[%s687 + $0x3c30] sm:$0xff]
                  %1118 = vst [vmem:[%s688 + $0x6b0] sm:$0xff] %v1117
                  %v1119 = vld [vmem:[%s687 + $0x3c78] sm:$0xff]
                  %1120 = vst [vmem:[%s688 + $0x6b8] sm:$0xff] %v1119
                  %v1121 = vld [vmem:[%s687 + $0x3cc0] sm:$0xff]
                  %1122 = vst [vmem:[%s688 + $0x6c0] sm:$0xff] %v1121
                  %v1123 = vld [vmem:[%s687 + $0x3d08] sm:$0xff]
                  %1124 = vst [vmem:[%s688 + $0x6c8] sm:$0xff] %v1123
                  %v1125 = vld [vmem:[%s687 + $0x3d50] sm:$0xff]
                  %1126 = vst [vmem:[%s688 + $0x6d0] sm:$0xff] %v1125
                  %v1127 = vld [vmem:[%s687 + $0x3d98] sm:$0xff]
                  %1128 = vst [vmem:[%s688 + $0x6d8] sm:$0xff] %v1127
                  %v1129 = vld [vmem:[%s687 + $0x3de0] sm:$0xff]
                  %1130 = vst [vmem:[%s688 + $0x6e0] sm:$0xff] %v1129
                  %v1131 = vld [vmem:[%s687 + $0x3e28] sm:$0xff]
                  %1132 = vst [vmem:[%s688 + $0x6e8] sm:$0xff] %v1131
                  %v1133 = vld [vmem:[%s687 + $0x3e70] sm:$0xff]
                  %1134 = vst [vmem:[%s688 + $0x6f0] sm:$0xff] %v1133
                  %v1135 = vld [vmem:[%s687 + $0x3eb8] sm:$0xff]
                  %1136 = vst [vmem:[%s688 + $0x6f8] sm:$0xff] %v1135
                  %v1137 = vld [vmem:[%s687 + $0x3f00] sm:$0xff]
                  %1138 = vst [vmem:[%s688 + $0x700] sm:$0xff] %v1137
                  %v1139 = vld [vmem:[%s687 + $0x3f48] sm:$0xff]
                  %1140 = vst [vmem:[%s688 + $0x708] sm:$0xff] %v1139
                  %v1141 = vld [vmem:[%s687 + $0x3f90] sm:$0xff]
                  %1142 = vst [vmem:[%s688 + $0x710] sm:$0xff] %v1141
                  %v1143 = vld [vmem:[%s687 + $0x3fd8] sm:$0xff]
                  %1144 = vst [vmem:[%s688 + $0x718] sm:$0xff] %v1143
                  %v1145 = vld [vmem:[%s687 + $0x4020] sm:$0xff]
                  %1146 = vst [vmem:[%s688 + $0x720] sm:$0xff] %v1145
                  %v1147 = vld [vmem:[%s687 + $0x4068] sm:$0xff]
                  %1148 = vst [vmem:[%s688 + $0x728] sm:$0xff] %v1147
                  %v1149 = vld [vmem:[%s687 + $0x40b0] sm:$0xff]
                  %1150 = vst [vmem:[%s688 + $0x730] sm:$0xff] %v1149
                  %v1151 = vld [vmem:[%s687 + $0x40f8] sm:$0xff]
                  %1152 = vst [vmem:[%s688 + $0x738] sm:$0xff] %v1151
                  %v1153 = vld [vmem:[%s687 + $0x4140] sm:$0xff]
                  %1154 = vst [vmem:[%s688 + $0x740] sm:$0xff] %v1153
                  %v1155 = vld [vmem:[%s687 + $0x4188] sm:$0xff]
                  %1156 = vst [vmem:[%s688 + $0x748] sm:$0xff] %v1155
                  %v1157 = vld [vmem:[%s687 + $0x41d0] sm:$0xff]
                  %1158 = vst [vmem:[%s688 + $0x750] sm:$0xff] %v1157
                  %v1159 = vld [vmem:[%s687 + $0x4218] sm:$0xff]
                  %1160 = vst [vmem:[%s688 + $0x758] sm:$0xff] %v1159
                  %v1161 = vld [vmem:[%s687 + $0x4260] sm:$0xff]
                  %1162 = vst [vmem:[%s688 + $0x760] sm:$0xff] %v1161
                  %v1163 = vld [vmem:[%s687 + $0x42a8] sm:$0xff]
                  %1164 = vst [vmem:[%s688 + $0x768] sm:$0xff] %v1163
                  %v1165 = vld [vmem:[%s687 + $0x42f0] sm:$0xff]
                  %1166 = vst [vmem:[%s688 + $0x770] sm:$0xff] %v1165
                  %v1167 = vld [vmem:[%s687 + $0x4338] sm:$0xff]
                  %1168 = vst [vmem:[%s688 + $0x778] sm:$0xff] %v1167
                  %v1169 = vld [vmem:[%s687 + $0x4380] sm:$0xff]
                  %1170 = vst [vmem:[%s688 + $0x780] sm:$0xff] %v1169
                  %v1171 = vld [vmem:[%s687 + $0x43c8] sm:$0xff]
                  %1172 = vst [vmem:[%s688 + $0x788] sm:$0xff] %v1171
                  %v1173 = vld [vmem:[%s687 + $0x4410] sm:$0xff]
                  %1174 = vst [vmem:[%s688 + $0x790] sm:$0xff] %v1173
                  %v1175 = vld [vmem:[%s687 + $0x4458] sm:$0xff]
                  %1176 = vst [vmem:[%s688 + $0x798] sm:$0xff] %v1175
                  %v1177 = vld [vmem:[%s687 + $0x44a0] sm:$0xff]
                  %1178 = vst [vmem:[%s688 + $0x7a0] sm:$0xff] %v1177
                  %v1179 = vld [vmem:[%s687 + $0x44e8] sm:$0xff]
                  %1180 = vst [vmem:[%s688 + $0x7a8] sm:$0xff] %v1179
                  %v1181 = vld [vmem:[%s687 + $0x4530] sm:$0xff]
                  %1182 = vst [vmem:[%s688 + $0x7b0] sm:$0xff] %v1181
                  %v1183 = vld [vmem:[%s687 + $0x4578] sm:$0xff]
                  %1184 = vst [vmem:[%s688 + $0x7b8] sm:$0xff] %v1183
                  %v1185 = vld [vmem:[%s687 + $0x45c0] sm:$0xff]
                  %1186 = vst [vmem:[%s688 + $0x7c0] sm:$0xff] %v1185
                  %v1187 = vld [vmem:[%s687 + $0x4608] sm:$0xff]
                  %1188 = vst [vmem:[%s688 + $0x7c8] sm:$0xff] %v1187
                  %v1189 = vld [vmem:[%s687 + $0x4650] sm:$0xff]
                  %1190 = vst [vmem:[%s688 + $0x7d0] sm:$0xff] %v1189
                  %v1191 = vld [vmem:[%s687 + $0x4698] sm:$0xff]
                  %1192 = vst [vmem:[%s688 + $0x7d8] sm:$0xff] %v1191
                  %v1193 = vld [vmem:[%s687 + $0x46e0] sm:$0xff]
                  %1194 = vst [vmem:[%s688 + $0x7e0] sm:$0xff] %v1193
                  %v1195 = vld [vmem:[%s687 + $0x4728] sm:$0xff]
                  %1196 = vst [vmem:[%s688 + $0x7e8] sm:$0xff] %v1195
                  %v1197 = vld [vmem:[%s687 + $0x4770] sm:$0xff]
                  %1198 = vst [vmem:[%s688 + $0x7f0] sm:$0xff] %v1197
                  %v1199 = vld [vmem:[%s687 + $0x47b8] sm:$0xff]
                  %1200 = vst [vmem:[%s688 + $0x7f8] sm:$0xff] %v1199
                $region52: #{multi_resolution_spec.1} parent=46 // loop_footer
                  %s686 = sadd.s32 1, %s682
                $region53: #{multi_resolution_spec.1} parent=46 // loop_footer_branch
                  %681 = sbr.rel target = $region49
                $region54: #{multi_resolution_spec.1} parent=46 // loop_exit
                  _
              $region47: #{multi_resolution_spec.1} parent=31 // pred_fallthru
                _
              // Predicated region
              $region55: #{multi_resolution_spec.1} parent=31 // pred_check
                _
              $region56: #{multi_resolution_spec.1} parent=31 // pred_check_branch
                %1202 = sbr.rel target = $region58
              $region57: #{multi_resolution_spec.1} parent=31 // pred_region
                _
              $region58: #{multi_resolution_spec.1} parent=31 // pred_fallthru
                _
            $region32: #{multi_resolution_spec.1} parent=27 // pred_fallthru
              _
            // Predicated region
            $region33: #{multi_resolution_spec.1} parent=27 // pred_check
              _
            $region34: #{multi_resolution_spec.1} parent=27 // pred_check_branch
              %157 = sbr.rel target = $region36
            $region35: #{multi_resolution_spec.1} parent=27 // pred_region
              loop: start=0, step=1, limit=1
              $region37: #{multi_resolution_spec.1} parent=35 // loop_pre_header
                _
              $region38: #{multi_resolution_spec.1} parent=35 // loop_header
                %s160 = sphi 0, %s164
                %p161 = scmp.ge.s32.totalorder %s160, 1
                %s165 = sphi %s151, %s151
                %s166 = sphi %s146, %s146
              $region39: #{multi_resolution_spec.1} parent=35 // loop_header_branch
                %163 = sbr.rel (%p161) target = $region43
              $region40: #{multi_resolution_spec.1} parent=35 // loop_body
                %v167 = vld [vmem:[%s165] sm:$0xff]
                %168 = vst [vmem:[%s166] sm:$0xff] %v167
                %v169 = vld [vmem:[%s165 + $0x48] sm:$0xff]
                %170 = vst [vmem:[%s166 + $0x8] sm:$0xff] %v169
                %v171 = vld [vmem:[%s165 + $0x90] sm:$0xff]
                %172 = vst [vmem:[%s166 + $0x10] sm:$0xff] %v171
                %v173 = vld [vmem:[%s165 + $0xd8] sm:$0xff]
                %174 = vst [vmem:[%s166 + $0x18] sm:$0xff] %v173
                %v175 = vld [vmem:[%s165 + $0x120] sm:$0xff]
                %176 = vst [vmem:[%s166 + $0x20] sm:$0xff] %v175
                %v177 = vld [vmem:[%s165 + $0x168] sm:$0xff]
                %178 = vst [vmem:[%s166 + $0x28] sm:$0xff] %v177
                %v179 = vld [vmem:[%s165 + $0x1b0] sm:$0xff]
                %180 = vst [vmem:[%s166 + $0x30] sm:$0xff] %v179
                %v181 = vld [vmem:[%s165 + $0x1f8] sm:$0xff]
                %182 = vst [vmem:[%s166 + $0x38] sm:$0xff] %v181
                %v183 = vld [vmem:[%s165 + $0x240] sm:$0xff]
                %184 = vst [vmem:[%s166 + $0x40] sm:$0xff] %v183
                %v185 = vld [vmem:[%s165 + $0x288] sm:$0xff]
                %186 = vst [vmem:[%s166 + $0x48] sm:$0xff] %v185
                %v187 = vld [vmem:[%s165 + $0x2d0] sm:$0xff]
                %188 = vst [vmem:[%s166 + $0x50] sm:$0xff] %v187
                %v189 = vld [vmem:[%s165 + $0x318] sm:$0xff]
                %190 = vst [vmem:[%s166 + $0x58] sm:$0xff] %v189
                %v191 = vld [vmem:[%s165 + $0x360] sm:$0xff]
                %192 = vst [vmem:[%s166 + $0x60] sm:$0xff] %v191
                %v193 = vld [vmem:[%s165 + $0x3a8] sm:$0xff]
                %194 = vst [vmem:[%s166 + $0x68] sm:$0xff] %v193
                %v195 = vld [vmem:[%s165 + $0x3f0] sm:$0xff]
                %196 = vst [vmem:[%s166 + $0x70] sm:$0xff] %v195
                %v197 = vld [vmem:[%s165 + $0x438] sm:$0xff]
                %198 = vst [vmem:[%s166 + $0x78] sm:$0xff] %v197
                %v199 = vld [vmem:[%s165 + $0x480] sm:$0xff]
                %200 = vst [vmem:[%s166 + $0x80] sm:$0xff] %v199
                %v201 = vld [vmem:[%s165 + $0x4c8] sm:$0xff]
                %202 = vst [vmem:[%s166 + $0x88] sm:$0xff] %v201
                %v203 = vld [vmem:[%s165 + $0x510] sm:$0xff]
                %204 = vst [vmem:[%s166 + $0x90] sm:$0xff] %v203
                %v205 = vld [vmem:[%s165 + $0x558] sm:$0xff]
                %206 = vst [vmem:[%s166 + $0x98] sm:$0xff] %v205
                %v207 = vld [vmem:[%s165 + $0x5a0] sm:$0xff]
                %208 = vst [vmem:[%s166 + $0xa0] sm:$0xff] %v207
                %v209 = vld [vmem:[%s165 + $0x5e8] sm:$0xff]
                %210 = vst [vmem:[%s166 + $0xa8] sm:$0xff] %v209
                %v211 = vld [vmem:[%s165 + $0x630] sm:$0xff]
                %212 = vst [vmem:[%s166 + $0xb0] sm:$0xff] %v211
                %v213 = vld [vmem:[%s165 + $0x678] sm:$0xff]
                %214 = vst [vmem:[%s166 + $0xb8] sm:$0xff] %v213
                %v215 = vld [vmem:[%s165 + $0x6c0] sm:$0xff]
                %216 = vst [vmem:[%s166 + $0xc0] sm:$0xff] %v215
                %v217 = vld [vmem:[%s165 + $0x708] sm:$0xff]
                %218 = vst [vmem:[%s166 + $0xc8] sm:$0xff] %v217
                %v219 = vld [vmem:[%s165 + $0x750] sm:$0xff]
                %220 = vst [vmem:[%s166 + $0xd0] sm:$0xff] %v219
                %v221 = vld [vmem:[%s165 + $0x798] sm:$0xff]
                %222 = vst [vmem:[%s166 + $0xd8] sm:$0xff] %v221
                %v223 = vld [vmem:[%s165 + $0x7e0] sm:$0xff]
                %224 = vst [vmem:[%s166 + $0xe0] sm:$0xff] %v223
                %v225 = vld [vmem:[%s165 + $0x828] sm:$0xff]
                %226 = vst [vmem:[%s166 + $0xe8] sm:$0xff] %v225
                %v227 = vld [vmem:[%s165 + $0x870] sm:$0xff]
                %228 = vst [vmem:[%s166 + $0xf0] sm:$0xff] %v227
                %v229 = vld [vmem:[%s165 + $0x8b8] sm:$0xff]
                %230 = vst [vmem:[%s166 + $0xf8] sm:$0xff] %v229
                %v231 = vld [vmem:[%s165 + $0x900] sm:$0xff]
                %232 = vst [vmem:[%s166 + $0x100] sm:$0xff] %v231
                %v233 = vld [vmem:[%s165 + $0x948] sm:$0xff]
                %234 = vst [vmem:[%s166 + $0x108] sm:$0xff] %v233
                %v235 = vld [vmem:[%s165 + $0x990] sm:$0xff]
                %236 = vst [vmem:[%s166 + $0x110] sm:$0xff] %v235
                %v237 = vld [vmem:[%s165 + $0x9d8] sm:$0xff]
                %238 = vst [vmem:[%s166 + $0x118] sm:$0xff] %v237
                %v239 = vld [vmem:[%s165 + $0xa20] sm:$0xff]
                %240 = vst [vmem:[%s166 + $0x120] sm:$0xff] %v239
                %v241 = vld [vmem:[%s165 + $0xa68] sm:$0xff]
                %242 = vst [vmem:[%s166 + $0x128] sm:$0xff] %v241
                %v243 = vld [vmem:[%s165 + $0xab0] sm:$0xff]
                %244 = vst [vmem:[%s166 + $0x130] sm:$0xff] %v243
                %v245 = vld [vmem:[%s165 + $0xaf8] sm:$0xff]
                %246 = vst [vmem:[%s166 + $0x138] sm:$0xff] %v245
                %v247 = vld [vmem:[%s165 + $0xb40] sm:$0xff]
                %248 = vst [vmem:[%s166 + $0x140] sm:$0xff] %v247
                %v249 = vld [vmem:[%s165 + $0xb88] sm:$0xff]
                %250 = vst [vmem:[%s166 + $0x148] sm:$0xff] %v249
                %v251 = vld [vmem:[%s165 + $0xbd0] sm:$0xff]
                %252 = vst [vmem:[%s166 + $0x150] sm:$0xff] %v251
                %v253 = vld [vmem:[%s165 + $0xc18] sm:$0xff]
                %254 = vst [vmem:[%s166 + $0x158] sm:$0xff] %v253
                %v255 = vld [vmem:[%s165 + $0xc60] sm:$0xff]
                %256 = vst [vmem:[%s166 + $0x160] sm:$0xff] %v255
                %v257 = vld [vmem:[%s165 + $0xca8] sm:$0xff]
                %258 = vst [vmem:[%s166 + $0x168] sm:$0xff] %v257
                %v259 = vld [vmem:[%s165 + $0xcf0] sm:$0xff]
                %260 = vst [vmem:[%s166 + $0x170] sm:$0xff] %v259
                %v261 = vld [vmem:[%s165 + $0xd38] sm:$0xff]
                %262 = vst [vmem:[%s166 + $0x178] sm:$0xff] %v261
                %v263 = vld [vmem:[%s165 + $0xd80] sm:$0xff]
                %264 = vst [vmem:[%s166 + $0x180] sm:$0xff] %v263
                %v265 = vld [vmem:[%s165 + $0xdc8] sm:$0xff]
                %266 = vst [vmem:[%s166 + $0x188] sm:$0xff] %v265
                %v267 = vld [vmem:[%s165 + $0xe10] sm:$0xff]
                %268 = vst [vmem:[%s166 + $0x190] sm:$0xff] %v267
                %v269 = vld [vmem:[%s165 + $0xe58] sm:$0xff]
                %270 = vst [vmem:[%s166 + $0x198] sm:$0xff] %v269
                %v271 = vld [vmem:[%s165 + $0xea0] sm:$0xff]
                %272 = vst [vmem:[%s166 + $0x1a0] sm:$0xff] %v271
                %v273 = vld [vmem:[%s165 + $0xee8] sm:$0xff]
                %274 = vst [vmem:[%s166 + $0x1a8] sm:$0xff] %v273
                %v275 = vld [vmem:[%s165 + $0xf30] sm:$0xff]
                %276 = vst [vmem:[%s166 + $0x1b0] sm:$0xff] %v275
                %v277 = vld [vmem:[%s165 + $0xf78] sm:$0xff]
                %278 = vst [vmem:[%s166 + $0x1b8] sm:$0xff] %v277
                %v279 = vld [vmem:[%s165 + $0xfc0] sm:$0xff]
                %280 = vst [vmem:[%s166 + $0x1c0] sm:$0xff] %v279
                %v281 = vld [vmem:[%s165 + $0x1008] sm:$0xff]
                %282 = vst [vmem:[%s166 + $0x1c8] sm:$0xff] %v281
                %v283 = vld [vmem:[%s165 + $0x1050] sm:$0xff]
                %284 = vst [vmem:[%s166 + $0x1d0] sm:$0xff] %v283
                %v285 = vld [vmem:[%s165 + $0x1098] sm:$0xff]
                %286 = vst [vmem:[%s166 + $0x1d8] sm:$0xff] %v285
                %v287 = vld [vmem:[%s165 + $0x10e0] sm:$0xff]
                %288 = vst [vmem:[%s166 + $0x1e0] sm:$0xff] %v287
                %v289 = vld [vmem:[%s165 + $0x1128] sm:$0xff]
                %290 = vst [vmem:[%s166 + $0x1e8] sm:$0xff] %v289
                %v291 = vld [vmem:[%s165 + $0x1170] sm:$0xff]
                %292 = vst [vmem:[%s166 + $0x1f0] sm:$0xff] %v291
                %v293 = vld [vmem:[%s165 + $0x11b8] sm:$0xff]
                %294 = vst [vmem:[%s166 + $0x1f8] sm:$0xff] %v293
                %v295 = vld [vmem:[%s165 + $0x1200] sm:$0xff]
                %296 = vst [vmem:[%s166 + $0x200] sm:$0xff] %v295
                %v297 = vld [vmem:[%s165 + $0x1248] sm:$0xff]
                %298 = vst [vmem:[%s166 + $0x208] sm:$0xff] %v297
                %v299 = vld [vmem:[%s165 + $0x1290] sm:$0xff]
                %300 = vst [vmem:[%s166 + $0x210] sm:$0xff] %v299
                %v301 = vld [vmem:[%s165 + $0x12d8] sm:$0xff]
                %302 = vst [vmem:[%s166 + $0x218] sm:$0xff] %v301
                %v303 = vld [vmem:[%s165 + $0x1320] sm:$0xff]
                %304 = vst [vmem:[%s166 + $0x220] sm:$0xff] %v303
                %v305 = vld [vmem:[%s165 + $0x1368] sm:$0xff]
                %306 = vst [vmem:[%s166 + $0x228] sm:$0xff] %v305
                %v307 = vld [vmem:[%s165 + $0x13b0] sm:$0xff]
                %308 = vst [vmem:[%s166 + $0x230] sm:$0xff] %v307
                %v309 = vld [vmem:[%s165 + $0x13f8] sm:$0xff]
                %310 = vst [vmem:[%s166 + $0x238] sm:$0xff] %v309
                %v311 = vld [vmem:[%s165 + $0x1440] sm:$0xff]
                %312 = vst [vmem:[%s166 + $0x240] sm:$0xff] %v311
                %v313 = vld [vmem:[%s165 + $0x1488] sm:$0xff]
                %314 = vst [vmem:[%s166 + $0x248] sm:$0xff] %v313
                %v315 = vld [vmem:[%s165 + $0x14d0] sm:$0xff]
                %316 = vst [vmem:[%s166 + $0x250] sm:$0xff] %v315
                %v317 = vld [vmem:[%s165 + $0x1518] sm:$0xff]
                %318 = vst [vmem:[%s166 + $0x258] sm:$0xff] %v317
                %v319 = vld [vmem:[%s165 + $0x1560] sm:$0xff]
                %320 = vst [vmem:[%s166 + $0x260] sm:$0xff] %v319
                %v321 = vld [vmem:[%s165 + $0x15a8] sm:$0xff]
                %322 = vst [vmem:[%s166 + $0x268] sm:$0xff] %v321
                %v323 = vld [vmem:[%s165 + $0x15f0] sm:$0xff]
                %324 = vst [vmem:[%s166 + $0x270] sm:$0xff] %v323
                %v325 = vld [vmem:[%s165 + $0x1638] sm:$0xff]
                %326 = vst [vmem:[%s166 + $0x278] sm:$0xff] %v325
                %v327 = vld [vmem:[%s165 + $0x1680] sm:$0xff]
                %328 = vst [vmem:[%s166 + $0x280] sm:$0xff] %v327
                %v329 = vld [vmem:[%s165 + $0x16c8] sm:$0xff]
                %330 = vst [vmem:[%s166 + $0x288] sm:$0xff] %v329
                %v331 = vld [vmem:[%s165 + $0x1710] sm:$0xff]
                %332 = vst [vmem:[%s166 + $0x290] sm:$0xff] %v331
                %v333 = vld [vmem:[%s165 + $0x1758] sm:$0xff]
                %334 = vst [vmem:[%s166 + $0x298] sm:$0xff] %v333
                %v335 = vld [vmem:[%s165 + $0x17a0] sm:$0xff]
                %336 = vst [vmem:[%s166 + $0x2a0] sm:$0xff] %v335
                %v337 = vld [vmem:[%s165 + $0x17e8] sm:$0xff]
                %338 = vst [vmem:[%s166 + $0x2a8] sm:$0xff] %v337
                %v339 = vld [vmem:[%s165 + $0x1830] sm:$0xff]
                %340 = vst [vmem:[%s166 + $0x2b0] sm:$0xff] %v339
                %v341 = vld [vmem:[%s165 + $0x1878] sm:$0xff]
                %342 = vst [vmem:[%s166 + $0x2b8] sm:$0xff] %v341
                %v343 = vld [vmem:[%s165 + $0x18c0] sm:$0xff]
                %344 = vst [vmem:[%s166 + $0x2c0] sm:$0xff] %v343
                %v345 = vld [vmem:[%s165 + $0x1908] sm:$0xff]
                %346 = vst [vmem:[%s166 + $0x2c8] sm:$0xff] %v345
                %v347 = vld [vmem:[%s165 + $0x1950] sm:$0xff]
                %348 = vst [vmem:[%s166 + $0x2d0] sm:$0xff] %v347
                %v349 = vld [vmem:[%s165 + $0x1998] sm:$0xff]
                %350 = vst [vmem:[%s166 + $0x2d8] sm:$0xff] %v349
                %v351 = vld [vmem:[%s165 + $0x19e0] sm:$0xff]
                %352 = vst [vmem:[%s166 + $0x2e0] sm:$0xff] %v351
                %v353 = vld [vmem:[%s165 + $0x1a28] sm:$0xff]
                %354 = vst [vmem:[%s166 + $0x2e8] sm:$0xff] %v353
                %v355 = vld [vmem:[%s165 + $0x1a70] sm:$0xff]
                %356 = vst [vmem:[%s166 + $0x2f0] sm:$0xff] %v355
                %v357 = vld [vmem:[%s165 + $0x1ab8] sm:$0xff]
                %358 = vst [vmem:[%s166 + $0x2f8] sm:$0xff] %v357
                %v359 = vld [vmem:[%s165 + $0x1b00] sm:$0xff]
                %360 = vst [vmem:[%s166 + $0x300] sm:$0xff] %v359
                %v361 = vld [vmem:[%s165 + $0x1b48] sm:$0xff]
                %362 = vst [vmem:[%s166 + $0x308] sm:$0xff] %v361
                %v363 = vld [vmem:[%s165 + $0x1b90] sm:$0xff]
                %364 = vst [vmem:[%s166 + $0x310] sm:$0xff] %v363
                %v365 = vld [vmem:[%s165 + $0x1bd8] sm:$0xff]
                %366 = vst [vmem:[%s166 + $0x318] sm:$0xff] %v365
                %v367 = vld [vmem:[%s165 + $0x1c20] sm:$0xff]
                %368 = vst [vmem:[%s166 + $0x320] sm:$0xff] %v367
                %v369 = vld [vmem:[%s165 + $0x1c68] sm:$0xff]
                %370 = vst [vmem:[%s166 + $0x328] sm:$0xff] %v369
                %v371 = vld [vmem:[%s165 + $0x1cb0] sm:$0xff]
                %372 = vst [vmem:[%s166 + $0x330] sm:$0xff] %v371
                %v373 = vld [vmem:[%s165 + $0x1cf8] sm:$0xff]
                %374 = vst [vmem:[%s166 + $0x338] sm:$0xff] %v373
                %v375 = vld [vmem:[%s165 + $0x1d40] sm:$0xff]
                %376 = vst [vmem:[%s166 + $0x340] sm:$0xff] %v375
                %v377 = vld [vmem:[%s165 + $0x1d88] sm:$0xff]
                %378 = vst [vmem:[%s166 + $0x348] sm:$0xff] %v377
                %v379 = vld [vmem:[%s165 + $0x1dd0] sm:$0xff]
                %380 = vst [vmem:[%s166 + $0x350] sm:$0xff] %v379
                %v381 = vld [vmem:[%s165 + $0x1e18] sm:$0xff]
                %382 = vst [vmem:[%s166 + $0x358] sm:$0xff] %v381
                %v383 = vld [vmem:[%s165 + $0x1e60] sm:$0xff]
                %384 = vst [vmem:[%s166 + $0x360] sm:$0xff] %v383
                %v385 = vld [vmem:[%s165 + $0x1ea8] sm:$0xff]
                %386 = vst [vmem:[%s166 + $0x368] sm:$0xff] %v385
                %v387 = vld [vmem:[%s165 + $0x1ef0] sm:$0xff]
                %388 = vst [vmem:[%s166 + $0x370] sm:$0xff] %v387
                %v389 = vld [vmem:[%s165 + $0x1f38] sm:$0xff]
                %390 = vst [vmem:[%s166 + $0x378] sm:$0xff] %v389
                %v391 = vld [vmem:[%s165 + $0x1f80] sm:$0xff]
                %392 = vst [vmem:[%s166 + $0x380] sm:$0xff] %v391
                %v393 = vld [vmem:[%s165 + $0x1fc8] sm:$0xff]
                %394 = vst [vmem:[%s166 + $0x388] sm:$0xff] %v393
                %v395 = vld [vmem:[%s165 + $0x2010] sm:$0xff]
                %396 = vst [vmem:[%s166 + $0x390] sm:$0xff] %v395
                %v397 = vld [vmem:[%s165 + $0x2058] sm:$0xff]
                %398 = vst [vmem:[%s166 + $0x398] sm:$0xff] %v397
                %v399 = vld [vmem:[%s165 + $0x20a0] sm:$0xff]
                %400 = vst [vmem:[%s166 + $0x3a0] sm:$0xff] %v399
                %v401 = vld [vmem:[%s165 + $0x20e8] sm:$0xff]
                %402 = vst [vmem:[%s166 + $0x3a8] sm:$0xff] %v401
                %v403 = vld [vmem:[%s165 + $0x2130] sm:$0xff]
                %404 = vst [vmem:[%s166 + $0x3b0] sm:$0xff] %v403
                %v405 = vld [vmem:[%s165 + $0x2178] sm:$0xff]
                %406 = vst [vmem:[%s166 + $0x3b8] sm:$0xff] %v405
                %v407 = vld [vmem:[%s165 + $0x21c0] sm:$0xff]
                %408 = vst [vmem:[%s166 + $0x3c0] sm:$0xff] %v407
                %v409 = vld [vmem:[%s165 + $0x2208] sm:$0xff]
                %410 = vst [vmem:[%s166 + $0x3c8] sm:$0xff] %v409
                %v411 = vld [vmem:[%s165 + $0x2250] sm:$0xff]
                %412 = vst [vmem:[%s166 + $0x3d0] sm:$0xff] %v411
                %v413 = vld [vmem:[%s165 + $0x2298] sm:$0xff]
                %414 = vst [vmem:[%s166 + $0x3d8] sm:$0xff] %v413
                %v415 = vld [vmem:[%s165 + $0x22e0] sm:$0xff]
                %416 = vst [vmem:[%s166 + $0x3e0] sm:$0xff] %v415
                %v417 = vld [vmem:[%s165 + $0x2328] sm:$0xff]
                %418 = vst [vmem:[%s166 + $0x3e8] sm:$0xff] %v417
                %v419 = vld [vmem:[%s165 + $0x2370] sm:$0xff]
                %420 = vst [vmem:[%s166 + $0x3f0] sm:$0xff] %v419
                %v421 = vld [vmem:[%s165 + $0x23b8] sm:$0xff]
                %422 = vst [vmem:[%s166 + $0x3f8] sm:$0xff] %v421
                %v423 = vld [vmem:[%s165 + $0x2400] sm:$0xff]
                %424 = vst [vmem:[%s166 + $0x400] sm:$0xff] %v423
                %v425 = vld [vmem:[%s165 + $0x2448] sm:$0xff]
                %426 = vst [vmem:[%s166 + $0x408] sm:$0xff] %v425
                %v427 = vld [vmem:[%s165 + $0x2490] sm:$0xff]
                %428 = vst [vmem:[%s166 + $0x410] sm:$0xff] %v427
                %v429 = vld [vmem:[%s165 + $0x24d8] sm:$0xff]
                %430 = vst [vmem:[%s166 + $0x418] sm:$0xff] %v429
                %v431 = vld [vmem:[%s165 + $0x2520] sm:$0xff]
                %432 = vst [vmem:[%s166 + $0x420] sm:$0xff] %v431
                %v433 = vld [vmem:[%s165 + $0x2568] sm:$0xff]
                %434 = vst [vmem:[%s166 + $0x428] sm:$0xff] %v433
                %v435 = vld [vmem:[%s165 + $0x25b0] sm:$0xff]
                %436 = vst [vmem:[%s166 + $0x430] sm:$0xff] %v435
                %v437 = vld [vmem:[%s165 + $0x25f8] sm:$0xff]
                %438 = vst [vmem:[%s166 + $0x438] sm:$0xff] %v437
                %v439 = vld [vmem:[%s165 + $0x2640] sm:$0xff]
                %440 = vst [vmem:[%s166 + $0x440] sm:$0xff] %v439
                %v441 = vld [vmem:[%s165 + $0x2688] sm:$0xff]
                %442 = vst [vmem:[%s166 + $0x448] sm:$0xff] %v441
                %v443 = vld [vmem:[%s165 + $0x26d0] sm:$0xff]
                %444 = vst [vmem:[%s166 + $0x450] sm:$0xff] %v443
                %v445 = vld [vmem:[%s165 + $0x2718] sm:$0xff]
                %446 = vst [vmem:[%s166 + $0x458] sm:$0xff] %v445
                %v447 = vld [vmem:[%s165 + $0x2760] sm:$0xff]
                %448 = vst [vmem:[%s166 + $0x460] sm:$0xff] %v447
                %v449 = vld [vmem:[%s165 + $0x27a8] sm:$0xff]
                %450 = vst [vmem:[%s166 + $0x468] sm:$0xff] %v449
                %v451 = vld [vmem:[%s165 + $0x27f0] sm:$0xff]
                %452 = vst [vmem:[%s166 + $0x470] sm:$0xff] %v451
                %v453 = vld [vmem:[%s165 + $0x2838] sm:$0xff]
                %454 = vst [vmem:[%s166 + $0x478] sm:$0xff] %v453
                %v455 = vld [vmem:[%s165 + $0x2880] sm:$0xff]
                %456 = vst [vmem:[%s166 + $0x480] sm:$0xff] %v455
                %v457 = vld [vmem:[%s165 + $0x28c8] sm:$0xff]
                %458 = vst [vmem:[%s166 + $0x488] sm:$0xff] %v457
                %v459 = vld [vmem:[%s165 + $0x2910] sm:$0xff]
                %460 = vst [vmem:[%s166 + $0x490] sm:$0xff] %v459
                %v461 = vld [vmem:[%s165 + $0x2958] sm:$0xff]
                %462 = vst [vmem:[%s166 + $0x498] sm:$0xff] %v461
                %v463 = vld [vmem:[%s165 + $0x29a0] sm:$0xff]
                %464 = vst [vmem:[%s166 + $0x4a0] sm:$0xff] %v463
                %v465 = vld [vmem:[%s165 + $0x29e8] sm:$0xff]
                %466 = vst [vmem:[%s166 + $0x4a8] sm:$0xff] %v465
                %v467 = vld [vmem:[%s165 + $0x2a30] sm:$0xff]
                %468 = vst [vmem:[%s166 + $0x4b0] sm:$0xff] %v467
                %v469 = vld [vmem:[%s165 + $0x2a78] sm:$0xff]
                %470 = vst [vmem:[%s166 + $0x4b8] sm:$0xff] %v469
                %v471 = vld [vmem:[%s165 + $0x2ac0] sm:$0xff]
                %472 = vst [vmem:[%s166 + $0x4c0] sm:$0xff] %v471
                %v473 = vld [vmem:[%s165 + $0x2b08] sm:$0xff]
                %474 = vst [vmem:[%s166 + $0x4c8] sm:$0xff] %v473
                %v475 = vld [vmem:[%s165 + $0x2b50] sm:$0xff]
                %476 = vst [vmem:[%s166 + $0x4d0] sm:$0xff] %v475
                %v477 = vld [vmem:[%s165 + $0x2b98] sm:$0xff]
                %478 = vst [vmem:[%s166 + $0x4d8] sm:$0xff] %v477
                %v479 = vld [vmem:[%s165 + $0x2be0] sm:$0xff]
                %480 = vst [vmem:[%s166 + $0x4e0] sm:$0xff] %v479
                %v481 = vld [vmem:[%s165 + $0x2c28] sm:$0xff]
                %482 = vst [vmem:[%s166 + $0x4e8] sm:$0xff] %v481
                %v483 = vld [vmem:[%s165 + $0x2c70] sm:$0xff]
                %484 = vst [vmem:[%s166 + $0x4f0] sm:$0xff] %v483
                %v485 = vld [vmem:[%s165 + $0x2cb8] sm:$0xff]
                %486 = vst [vmem:[%s166 + $0x4f8] sm:$0xff] %v485
                %v487 = vld [vmem:[%s165 + $0x2d00] sm:$0xff]
                %488 = vst [vmem:[%s166 + $0x500] sm:$0xff] %v487
                %v489 = vld [vmem:[%s165 + $0x2d48] sm:$0xff]
                %490 = vst [vmem:[%s166 + $0x508] sm:$0xff] %v489
                %v491 = vld [vmem:[%s165 + $0x2d90] sm:$0xff]
                %492 = vst [vmem:[%s166 + $0x510] sm:$0xff] %v491
                %v493 = vld [vmem:[%s165 + $0x2dd8] sm:$0xff]
                %494 = vst [vmem:[%s166 + $0x518] sm:$0xff] %v493
                %v495 = vld [vmem:[%s165 + $0x2e20] sm:$0xff]
                %496 = vst [vmem:[%s166 + $0x520] sm:$0xff] %v495
                %v497 = vld [vmem:[%s165 + $0x2e68] sm:$0xff]
                %498 = vst [vmem:[%s166 + $0x528] sm:$0xff] %v497
                %v499 = vld [vmem:[%s165 + $0x2eb0] sm:$0xff]
                %500 = vst [vmem:[%s166 + $0x530] sm:$0xff] %v499
                %v501 = vld [vmem:[%s165 + $0x2ef8] sm:$0xff]
                %502 = vst [vmem:[%s166 + $0x538] sm:$0xff] %v501
                %v503 = vld [vmem:[%s165 + $0x2f40] sm:$0xff]
                %504 = vst [vmem:[%s166 + $0x540] sm:$0xff] %v503
                %v505 = vld [vmem:[%s165 + $0x2f88] sm:$0xff]
                %506 = vst [vmem:[%s166 + $0x548] sm:$0xff] %v505
                %v507 = vld [vmem:[%s165 + $0x2fd0] sm:$0xff]
                %508 = vst [vmem:[%s166 + $0x550] sm:$0xff] %v507
                %v509 = vld [vmem:[%s165 + $0x3018] sm:$0xff]
                %510 = vst [vmem:[%s166 + $0x558] sm:$0xff] %v509
                %v511 = vld [vmem:[%s165 + $0x3060] sm:$0xff]
                %512 = vst [vmem:[%s166 + $0x560] sm:$0xff] %v511
                %v513 = vld [vmem:[%s165 + $0x30a8] sm:$0xff]
                %514 = vst [vmem:[%s166 + $0x568] sm:$0xff] %v513
                %v515 = vld [vmem:[%s165 + $0x30f0] sm:$0xff]
                %516 = vst [vmem:[%s166 + $0x570] sm:$0xff] %v515
                %v517 = vld [vmem:[%s165 + $0x3138] sm:$0xff]
                %518 = vst [vmem:[%s166 + $0x578] sm:$0xff] %v517
                %v519 = vld [vmem:[%s165 + $0x3180] sm:$0xff]
                %520 = vst [vmem:[%s166 + $0x580] sm:$0xff] %v519
                %v521 = vld [vmem:[%s165 + $0x31c8] sm:$0xff]
                %522 = vst [vmem:[%s166 + $0x588] sm:$0xff] %v521
                %v523 = vld [vmem:[%s165 + $0x3210] sm:$0xff]
                %524 = vst [vmem:[%s166 + $0x590] sm:$0xff] %v523
                %v525 = vld [vmem:[%s165 + $0x3258] sm:$0xff]
                %526 = vst [vmem:[%s166 + $0x598] sm:$0xff] %v525
                %v527 = vld [vmem:[%s165 + $0x32a0] sm:$0xff]
                %528 = vst [vmem:[%s166 + $0x5a0] sm:$0xff] %v527
                %v529 = vld [vmem:[%s165 + $0x32e8] sm:$0xff]
                %530 = vst [vmem:[%s166 + $0x5a8] sm:$0xff] %v529
                %v531 = vld [vmem:[%s165 + $0x3330] sm:$0xff]
                %532 = vst [vmem:[%s166 + $0x5b0] sm:$0xff] %v531
                %v533 = vld [vmem:[%s165 + $0x3378] sm:$0xff]
                %534 = vst [vmem:[%s166 + $0x5b8] sm:$0xff] %v533
                %v535 = vld [vmem:[%s165 + $0x33c0] sm:$0xff]
                %536 = vst [vmem:[%s166 + $0x5c0] sm:$0xff] %v535
                %v537 = vld [vmem:[%s165 + $0x3408] sm:$0xff]
                %538 = vst [vmem:[%s166 + $0x5c8] sm:$0xff] %v537
                %v539 = vld [vmem:[%s165 + $0x3450] sm:$0xff]
                %540 = vst [vmem:[%s166 + $0x5d0] sm:$0xff] %v539
                %v541 = vld [vmem:[%s165 + $0x3498] sm:$0xff]
                %542 = vst [vmem:[%s166 + $0x5d8] sm:$0xff] %v541
                %v543 = vld [vmem:[%s165 + $0x34e0] sm:$0xff]
                %544 = vst [vmem:[%s166 + $0x5e0] sm:$0xff] %v543
                %v545 = vld [vmem:[%s165 + $0x3528] sm:$0xff]
                %546 = vst [vmem:[%s166 + $0x5e8] sm:$0xff] %v545
                %v547 = vld [vmem:[%s165 + $0x3570] sm:$0xff]
                %548 = vst [vmem:[%s166 + $0x5f0] sm:$0xff] %v547
                %v549 = vld [vmem:[%s165 + $0x35b8] sm:$0xff]
                %550 = vst [vmem:[%s166 + $0x5f8] sm:$0xff] %v549
                %v551 = vld [vmem:[%s165 + $0x3600] sm:$0xff]
                %552 = vst [vmem:[%s166 + $0x600] sm:$0xff] %v551
                %v553 = vld [vmem:[%s165 + $0x3648] sm:$0xff]
                %554 = vst [vmem:[%s166 + $0x608] sm:$0xff] %v553
                %v555 = vld [vmem:[%s165 + $0x3690] sm:$0xff]
                %556 = vst [vmem:[%s166 + $0x610] sm:$0xff] %v555
                %v557 = vld [vmem:[%s165 + $0x36d8] sm:$0xff]
                %558 = vst [vmem:[%s166 + $0x618] sm:$0xff] %v557
                %v559 = vld [vmem:[%s165 + $0x3720] sm:$0xff]
                %560 = vst [vmem:[%s166 + $0x620] sm:$0xff] %v559
                %v561 = vld [vmem:[%s165 + $0x3768] sm:$0xff]
                %562 = vst [vmem:[%s166 + $0x628] sm:$0xff] %v561
                %v563 = vld [vmem:[%s165 + $0x37b0] sm:$0xff]
                %564 = vst [vmem:[%s166 + $0x630] sm:$0xff] %v563
                %v565 = vld [vmem:[%s165 + $0x37f8] sm:$0xff]
                %566 = vst [vmem:[%s166 + $0x638] sm:$0xff] %v565
                %v567 = vld [vmem:[%s165 + $0x3840] sm:$0xff]
                %568 = vst [vmem:[%s166 + $0x640] sm:$0xff] %v567
                %v569 = vld [vmem:[%s165 + $0x3888] sm:$0xff]
                %570 = vst [vmem:[%s166 + $0x648] sm:$0xff] %v569
                %v571 = vld [vmem:[%s165 + $0x38d0] sm:$0xff]
                %572 = vst [vmem:[%s166 + $0x650] sm:$0xff] %v571
                %v573 = vld [vmem:[%s165 + $0x3918] sm:$0xff]
                %574 = vst [vmem:[%s166 + $0x658] sm:$0xff] %v573
                %v575 = vld [vmem:[%s165 + $0x3960] sm:$0xff]
                %576 = vst [vmem:[%s166 + $0x660] sm:$0xff] %v575
                %v577 = vld [vmem:[%s165 + $0x39a8] sm:$0xff]
                %578 = vst [vmem:[%s166 + $0x668] sm:$0xff] %v577
                %v579 = vld [vmem:[%s165 + $0x39f0] sm:$0xff]
                %580 = vst [vmem:[%s166 + $0x670] sm:$0xff] %v579
                %v581 = vld [vmem:[%s165 + $0x3a38] sm:$0xff]
                %582 = vst [vmem:[%s166 + $0x678] sm:$0xff] %v581
                %v583 = vld [vmem:[%s165 + $0x3a80] sm:$0xff]
                %584 = vst [vmem:[%s166 + $0x680] sm:$0xff] %v583
                %v585 = vld [vmem:[%s165 + $0x3ac8] sm:$0xff]
                %586 = vst [vmem:[%s166 + $0x688] sm:$0xff] %v585
                %v587 = vld [vmem:[%s165 + $0x3b10] sm:$0xff]
                %588 = vst [vmem:[%s166 + $0x690] sm:$0xff] %v587
                %v589 = vld [vmem:[%s165 + $0x3b58] sm:$0xff]
                %590 = vst [vmem:[%s166 + $0x698] sm:$0xff] %v589
                %v591 = vld [vmem:[%s165 + $0x3ba0] sm:$0xff]
                %592 = vst [vmem:[%s166 + $0x6a0] sm:$0xff] %v591
                %v593 = vld [vmem:[%s165 + $0x3be8] sm:$0xff]
                %594 = vst [vmem:[%s166 + $0x6a8] sm:$0xff] %v593
                %v595 = vld [vmem:[%s165 + $0x3c30] sm:$0xff]
                %596 = vst [vmem:[%s166 + $0x6b0] sm:$0xff] %v595
                %v597 = vld [vmem:[%s165 + $0x3c78] sm:$0xff]
                %598 = vst [vmem:[%s166 + $0x6b8] sm:$0xff] %v597
                %v599 = vld [vmem:[%s165 + $0x3cc0] sm:$0xff]
                %600 = vst [vmem:[%s166 + $0x6c0] sm:$0xff] %v599
                %v601 = vld [vmem:[%s165 + $0x3d08] sm:$0xff]
                %602 = vst [vmem:[%s166 + $0x6c8] sm:$0xff] %v601
                %v603 = vld [vmem:[%s165 + $0x3d50] sm:$0xff]
                %604 = vst [vmem:[%s166 + $0x6d0] sm:$0xff] %v603
                %v605 = vld [vmem:[%s165 + $0x3d98] sm:$0xff]
                %606 = vst [vmem:[%s166 + $0x6d8] sm:$0xff] %v605
                %v607 = vld [vmem:[%s165 + $0x3de0] sm:$0xff]
                %608 = vst [vmem:[%s166 + $0x6e0] sm:$0xff] %v607
                %v609 = vld [vmem:[%s165 + $0x3e28] sm:$0xff]
                %610 = vst [vmem:[%s166 + $0x6e8] sm:$0xff] %v609
                %v611 = vld [vmem:[%s165 + $0x3e70] sm:$0xff]
                %612 = vst [vmem:[%s166 + $0x6f0] sm:$0xff] %v611
                %v613 = vld [vmem:[%s165 + $0x3eb8] sm:$0xff]
                %614 = vst [vmem:[%s166 + $0x6f8] sm:$0xff] %v613
                %v615 = vld [vmem:[%s165 + $0x3f00] sm:$0xff]
                %616 = vst [vmem:[%s166 + $0x700] sm:$0xff] %v615
                %v617 = vld [vmem:[%s165 + $0x3f48] sm:$0xff]
                %618 = vst [vmem:[%s166 + $0x708] sm:$0xff] %v617
                %v619 = vld [vmem:[%s165 + $0x3f90] sm:$0xff]
                %620 = vst [vmem:[%s166 + $0x710] sm:$0xff] %v619
                %v621 = vld [vmem:[%s165 + $0x3fd8] sm:$0xff]
                %622 = vst [vmem:[%s166 + $0x718] sm:$0xff] %v621
                %v623 = vld [vmem:[%s165 + $0x4020] sm:$0xff]
                %624 = vst [vmem:[%s166 + $0x720] sm:$0xff] %v623
                %v625 = vld [vmem:[%s165 + $0x4068] sm:$0xff]
                %626 = vst [vmem:[%s166 + $0x728] sm:$0xff] %v625
                %v627 = vld [vmem:[%s165 + $0x40b0] sm:$0xff]
                %628 = vst [vmem:[%s166 + $0x730] sm:$0xff] %v627
                %v629 = vld [vmem:[%s165 + $0x40f8] sm:$0xff]
                %630 = vst [vmem:[%s166 + $0x738] sm:$0xff] %v629
                %v631 = vld [vmem:[%s165 + $0x4140] sm:$0xff]
                %632 = vst [vmem:[%s166 + $0x740] sm:$0xff] %v631
                %v633 = vld [vmem:[%s165 + $0x4188] sm:$0xff]
                %634 = vst [vmem:[%s166 + $0x748] sm:$0xff] %v633
                %v635 = vld [vmem:[%s165 + $0x41d0] sm:$0xff]
                %636 = vst [vmem:[%s166 + $0x750] sm:$0xff] %v635
                %v637 = vld [vmem:[%s165 + $0x4218] sm:$0xff]
                %638 = vst [vmem:[%s166 + $0x758] sm:$0xff] %v637
                %v639 = vld [vmem:[%s165 + $0x4260] sm:$0xff]
                %640 = vst [vmem:[%s166 + $0x760] sm:$0xff] %v639
                %v641 = vld [vmem:[%s165 + $0x42a8] sm:$0xff]
                %642 = vst [vmem:[%s166 + $0x768] sm:$0xff] %v641
                %v643 = vld [vmem:[%s165 + $0x42f0] sm:$0xff]
                %644 = vst [vmem:[%s166 + $0x770] sm:$0xff] %v643
                %v645 = vld [vmem:[%s165 + $0x4338] sm:$0xff]
                %646 = vst [vmem:[%s166 + $0x778] sm:$0xff] %v645
                %v647 = vld [vmem:[%s165 + $0x4380] sm:$0xff]
                %648 = vst [vmem:[%s166 + $0x780] sm:$0xff] %v647
                %v649 = vld [vmem:[%s165 + $0x43c8] sm:$0xff]
                %650 = vst [vmem:[%s166 + $0x788] sm:$0xff] %v649
                %v651 = vld [vmem:[%s165 + $0x4410] sm:$0xff]
                %652 = vst [vmem:[%s166 + $0x790] sm:$0xff] %v651
                %v653 = vld [vmem:[%s165 + $0x4458] sm:$0xff]
                %654 = vst [vmem:[%s166 + $0x798] sm:$0xff] %v653
                %v655 = vld [vmem:[%s165 + $0x44a0] sm:$0xff]
                %656 = vst [vmem:[%s166 + $0x7a0] sm:$0xff] %v655
                %v657 = vld [vmem:[%s165 + $0x44e8] sm:$0xff]
                %658 = vst [vmem:[%s166 + $0x7a8] sm:$0xff] %v657
                %v659 = vld [vmem:[%s165 + $0x4530] sm:$0xff]
                %660 = vst [vmem:[%s166 + $0x7b0] sm:$0xff] %v659
                %v661 = vld [vmem:[%s165 + $0x4578] sm:$0xff]
                %662 = vst [vmem:[%s166 + $0x7b8] sm:$0xff] %v661
                %v663 = vld [vmem:[%s165 + $0x45c0] sm:$0xff]
                %664 = vst [vmem:[%s166 + $0x7c0] sm:$0xff] %v663
                %v665 = vld [vmem:[%s165 + $0x4608] sm:$0xff]
                %666 = vst [vmem:[%s166 + $0x7c8] sm:$0xff] %v665
                %v667 = vld [vmem:[%s165 + $0x4650] sm:$0xff]
                %668 = vst [vmem:[%s166 + $0x7d0] sm:$0xff] %v667
                %v669 = vld [vmem:[%s165 + $0x4698] sm:$0xff]
                %670 = vst [vmem:[%s166 + $0x7d8] sm:$0xff] %v669
                %v671 = vld [vmem:[%s165 + $0x46e0] sm:$0xff]
                %672 = vst [vmem:[%s166 + $0x7e0] sm:$0xff] %v671
                %v673 = vld [vmem:[%s165 + $0x4728] sm:$0xff]
                %674 = vst [vmem:[%s166 + $0x7e8] sm:$0xff] %v673
                %v675 = vld [vmem:[%s165 + $0x4770] sm:$0xff]
                %676 = vst [vmem:[%s166 + $0x7f0] sm:$0xff] %v675
                %v677 = vld [vmem:[%s165 + $0x47b8] sm:$0xff]
                %678 = vst [vmem:[%s166 + $0x7f8] sm:$0xff] %v677
              $region41: #{multi_resolution_spec.1} parent=35 // loop_footer
                %s164 = sadd.s32 1, %s160
              $region42: #{multi_resolution_spec.1} parent=35 // loop_footer_branch
                %159 = sbr.rel target = $region38
              $region43: #{multi_resolution_spec.1} parent=35 // loop_exit
                _
            $region36: #{multi_resolution_spec.1} parent=27 // pred_fallthru
              _
          $region28: #{multi_resolution_spec.1} parent=23 // pred_fallthru
            _
          %1203 = vnop
        $region24: #{multi_resolution_spec.1} parent=19 // pred_fallthru
          _
      $region20: #{multi_resolution_spec.1} parent=5 // pred_fallthru
        _
      %p1204 = scmp.le.s32.totalorder 1, %s8
      %p1205 = scmp.lt.s32.totalorder %s8, 28
      %p1206 = pnand %p1204, %p1205
      %p1207 = pneg %p1206
      // Predicated region
      $region59: #{multi_resolution_spec.1} parent=5 // pred_check
        _
      $region60: #{multi_resolution_spec.1} parent=5 // pred_check_branch
        %1209 = sbr.rel (%p1206) target = $region62
      $region61: #{multi_resolution_spec.1} parent=5 // pred_region
        %s1210 = ssub.s32 %s8, 1
        %s1211 = sand.u32 %s68, 1
        %s1212 = sand.u32 %s68, 1
        %s1213 = smul.addr %s1212, 2048
        %s1214 = scalar_lea.vmem [#allocation2], %s1213
        // Predicated region
        $region63: #{multi_resolution_spec.1} parent=61 // pred_check
          %p1215 = pneg %p81
        $region64: #{multi_resolution_spec.1} parent=61 // pred_check_branch
          %1217 = sbr.rel (%p1215) target = $region66
        $region65: #{multi_resolution_spec.1} parent=61 // pred_region
          _
        $region66: #{multi_resolution_spec.1} parent=61 // pred_fallthru
          _
        %s1218 = smul.u32 16, %s18
        %p1219 = scmp.lt.s32.totalorder %s1218, 15
        %s1220 = scalar_select %p1219, %s1218, 15
        %s1221 = smul.addr %s1220, 16
        %s1222 = smul.addr %s1221, 4
        %s1223 = scalar_lea.vmem %s0, %s1222
        %p1224 = pneg %p53
        %p1225 = pneg %p50
        %s1226 = sand.u32 %s68, 1
        %s1227 = sand.u32 %s68, 1
        %s1228 = smul.addr %s1227, 2048
        %s1229 = scalar_lea.vmem [#allocation2], %s1228
        %p1230 = pneg %p81
        %p1231 = pneg %p78
        %p1232 = pneg %p111
        %p1233 = pneg %p108
        %s1234 = smul.u32 16, %s20
        %p1235 = scmp.lt.s32.totalorder %s19, 2
        %s1236 = scalar_select %p1235, %s19, 2
        %p1237 = scmp.lt.s32.totalorder %s1234, 143
        %s1238 = scalar_select %p1237, %s1234, 143
        %p1239 = scmp.lt.s32.totalorder %s18, 0
        %s1240 = scalar_select %p1239, %s18, 0
        %s1241 = sadd.s32 %s1240, %s1238
        %s1242 = smul.addr %s1236, 144
        %s1243 = sadd.s32 %s1241, %s1242
        %s1244 = smul.addr %s1243, 8
        %s1245 = scalar_lea.vmem %s2, %s1244
        %s1246 = smul.u32 16, %s18
        %p1247 = scmp.lt.s32.totalorder %s1246, 15
        %s1248 = scalar_select %p1247, %s1246, 15
        %s1249 = smul.addr %s1248, 16
        %s1250 = smul.addr %s1249, 4
        %s1251 = scalar_lea.vmem %s0, %s1250
        %s1252 = smul.u32 16, %s18
        %s1253 = smul.u32 2, %s20
        %s1254 = smul.u32 16, %s20
        %p1255 = scmp.lt.s32.totalorder %s19, 2
        %s1256 = scalar_select %p1255, %s19, 2
        %p1257 = scmp.lt.s32.totalorder %s1254, 143
        %s1258 = scalar_select %p1257, %s1254, 143
        %p1259 = scmp.lt.s32.totalorder %s18, 0
        %s1260 = scalar_select %p1259, %s18, 0
        %s1261 = sadd.s32 %s1260, %s1258
        %s1262 = smul.addr %s1256, 144
        %s1263 = sadd.s32 %s1261, %s1262
        %s1264 = smul.addr %s1263, 8
        %s1265 = scalar_lea.vmem %s2, %s1264
        %s1266 = smul.u32 16, %s20
        %v1267 = vld [vmem:[%s1251] sm:$0xff]
        %v1268 = vld [vmem:[%s1251 + $0x8] sm:$0xff]
        %v1269 = vld [vmem:[%s1251 + $0x10] sm:$0xff]
        %v1270 = vld [vmem:[%s1251 + $0x18] sm:$0xff]
        %v1271 = vld [vmem:[%s1251 + $0x20] sm:$0xff]
        %v1272 = vld [vmem:[%s1251 + $0x28] sm:$0xff]
        %v1273 = vld [vmem:[%s1251 + $0x30] sm:$0xff]
        %v1274 = vld [vmem:[%s1251 + $0x38] sm:$0xff]
        %v1275 = vld [vmem:[%s1251 + $0x40] sm:$0xff]
        %v1276 = vld [vmem:[%s1251 + $0x48] sm:$0xff]
        %v1277 = vld [vmem:[%s1251 + $0x50] sm:$0xff]
        %v1278 = vld [vmem:[%s1251 + $0x58] sm:$0xff]
        %v1279 = vld [vmem:[%s1251 + $0x60] sm:$0xff]
        %v1280 = vld [vmem:[%s1251 + $0x68] sm:$0xff]
        %v1281 = vld [vmem:[%s1251 + $0x70] sm:$0xff]
        %v1282 = vld [vmem:[%s1251 + $0x78] sm:$0xff]
        %v1283 = vld [vmem:[%s1251 + $0x80] sm:$0xff]
        %v1284 = vld [vmem:[%s1251 + $0x88] sm:$0xff]
        %v1285 = vld [vmem:[%s1251 + $0x90] sm:$0xff]
        %v1286 = vld [vmem:[%s1251 + $0x98] sm:$0xff]
        %v1287 = vld [vmem:[%s1251 + $0xa0] sm:$0xff]
        %v1288 = vld [vmem:[%s1251 + $0xa8] sm:$0xff]
        %v1289 = vld [vmem:[%s1251 + $0xb0] sm:$0xff]
        %v1290 = vld [vmem:[%s1251 + $0xb8] sm:$0xff]
        %v1291 = vld [vmem:[%s1251 + $0xc0] sm:$0xff]
        %v1292 = vld [vmem:[%s1251 + $0xc8] sm:$0xff]
        %v1293 = vld [vmem:[%s1251 + $0xd0] sm:$0xff]
        %v1294 = vld [vmem:[%s1251 + $0xd8] sm:$0xff]
        %v1295 = vld [vmem:[%s1251 + $0xe0] sm:$0xff]
        %v1296 = vld [vmem:[%s1251 + $0xe8] sm:$0xff]
        %v1297 = vld [vmem:[%s1251 + $0xf0] sm:$0xff]
        %v1298 = vld [vmem:[%s1251 + $0xf8] sm:$0xff]
        %v1299 = vld [vmem:[%s1251 + $0x100] sm:$0xff]
        %v1300 = vld [vmem:[%s1251 + $0x108] sm:$0xff]
        %v1301 = vld [vmem:[%s1251 + $0x110] sm:$0xff]
        %v1302 = vld [vmem:[%s1251 + $0x118] sm:$0xff]
        %v1303 = vld [vmem:[%s1251 + $0x120] sm:$0xff]
        %v1304 = vld [vmem:[%s1251 + $0x128] sm:$0xff]
        %v1305 = vld [vmem:[%s1251 + $0x130] sm:$0xff]
        %v1306 = vld [vmem:[%s1251 + $0x138] sm:$0xff]
        %v1307 = vld [vmem:[%s1251 + $0x140] sm:$0xff]
        %v1308 = vld [vmem:[%s1251 + $0x148] sm:$0xff]
        %v1309 = vld [vmem:[%s1251 + $0x150] sm:$0xff]
        %v1310 = vld [vmem:[%s1251 + $0x158] sm:$0xff]
        %v1311 = vld [vmem:[%s1251 + $0x160] sm:$0xff]
        %v1312 = vld [vmem:[%s1251 + $0x168] sm:$0xff]
        %v1313 = vld [vmem:[%s1251 + $0x170] sm:$0xff]
        %v1314 = vld [vmem:[%s1251 + $0x178] sm:$0xff]
        %v1315 = vld [vmem:[%s1251 + $0x180] sm:$0xff]
        %v1316 = vld [vmem:[%s1251 + $0x188] sm:$0xff]
        %v1317 = vld [vmem:[%s1251 + $0x190] sm:$0xff]
        %v1318 = vld [vmem:[%s1251 + $0x198] sm:$0xff]
        %v1319 = vld [vmem:[%s1251 + $0x1a0] sm:$0xff]
        %v1320 = vld [vmem:[%s1251 + $0x1a8] sm:$0xff]
        %v1321 = vld [vmem:[%s1251 + $0x1b0] sm:$0xff]
        %v1322 = vld [vmem:[%s1251 + $0x1b8] sm:$0xff]
        %v1323 = vld [vmem:[%s1251 + $0x1c0] sm:$0xff]
        %v1324 = vld [vmem:[%s1251 + $0x1c8] sm:$0xff]
        %v1325 = vld [vmem:[%s1251 + $0x1d0] sm:$0xff]
        %v1326 = vld [vmem:[%s1251 + $0x1d8] sm:$0xff]
        %v1327 = vld [vmem:[%s1251 + $0x1e0] sm:$0xff]
        %v1328 = vld [vmem:[%s1251 + $0x1e8] sm:$0xff]
        %v1329 = vld [vmem:[%s1251 + $0x1f0] sm:$0xff]
        %v1330 = vld [vmem:[%s1251 + $0x1f8] sm:$0xff]
        %v1331 = vld [vmem:[%s1251 + $0x200] sm:$0xff]
        %v1332 = vld [vmem:[%s1251 + $0x208] sm:$0xff]
        %v1333 = vld [vmem:[%s1251 + $0x210] sm:$0xff]
        %v1334 = vld [vmem:[%s1251 + $0x218] sm:$0xff]
        %v1335 = vld [vmem:[%s1251 + $0x220] sm:$0xff]
        %v1336 = vld [vmem:[%s1251 + $0x228] sm:$0xff]
        %v1337 = vld [vmem:[%s1251 + $0x230] sm:$0xff]
        %v1338 = vld [vmem:[%s1251 + $0x238] sm:$0xff]
        %v1339 = vld [vmem:[%s1251 + $0x240] sm:$0xff]
        %v1340 = vld [vmem:[%s1251 + $0x248] sm:$0xff]
        %v1341 = vld [vmem:[%s1251 + $0x250] sm:$0xff]
        %v1342 = vld [vmem:[%s1251 + $0x258] sm:$0xff]
        %v1343 = vld [vmem:[%s1251 + $0x260] sm:$0xff]
        %v1344 = vld [vmem:[%s1251 + $0x268] sm:$0xff]
        %v1345 = vld [vmem:[%s1251 + $0x270] sm:$0xff]
        %v1346 = vld [vmem:[%s1251 + $0x278] sm:$0xff]
        %v1347 = vld [vmem:[%s1251 + $0x280] sm:$0xff]
        %v1348 = vld [vmem:[%s1251 + $0x288] sm:$0xff]
        %v1349 = vld [vmem:[%s1251 + $0x290] sm:$0xff]
        %v1350 = vld [vmem:[%s1251 + $0x298] sm:$0xff]
        %v1351 = vld [vmem:[%s1251 + $0x2a0] sm:$0xff]
        %v1352 = vld [vmem:[%s1251 + $0x2a8] sm:$0xff]
        %v1353 = vld [vmem:[%s1251 + $0x2b0] sm:$0xff]
        %v1354 = vld [vmem:[%s1251 + $0x2b8] sm:$0xff]
        %v1355 = vld [vmem:[%s1251 + $0x2c0] sm:$0xff]
        %v1356 = vld [vmem:[%s1251 + $0x2c8] sm:$0xff]
        %v1357 = vld [vmem:[%s1251 + $0x2d0] sm:$0xff]
        %v1358 = vld [vmem:[%s1251 + $0x2d8] sm:$0xff]
        %v1359 = vld [vmem:[%s1251 + $0x2e0] sm:$0xff]
        %v1360 = vld [vmem:[%s1251 + $0x2e8] sm:$0xff]
        %v1361 = vld [vmem:[%s1251 + $0x2f0] sm:$0xff]
        %v1362 = vld [vmem:[%s1251 + $0x2f8] sm:$0xff]
        %v1363 = vld [vmem:[%s1251 + $0x300] sm:$0xff]
        %v1364 = vld [vmem:[%s1251 + $0x308] sm:$0xff]
        %v1365 = vld [vmem:[%s1251 + $0x310] sm:$0xff]
        %v1366 = vld [vmem:[%s1251 + $0x318] sm:$0xff]
        %v1367 = vld [vmem:[%s1251 + $0x320] sm:$0xff]
        %v1368 = vld [vmem:[%s1251 + $0x328] sm:$0xff]
        %v1369 = vld [vmem:[%s1251 + $0x330] sm:$0xff]
        %v1370 = vld [vmem:[%s1251 + $0x338] sm:$0xff]
        %v1371 = vld [vmem:[%s1251 + $0x340] sm:$0xff]
        %v1372 = vld [vmem:[%s1251 + $0x348] sm:$0xff]
        %v1373 = vld [vmem:[%s1251 + $0x350] sm:$0xff]
        %v1374 = vld [vmem:[%s1251 + $0x358] sm:$0xff]
        %v1375 = vld [vmem:[%s1251 + $0x360] sm:$0xff]
        %v1376 = vld [vmem:[%s1251 + $0x368] sm:$0xff]
        %v1377 = vld [vmem:[%s1251 + $0x370] sm:$0xff]
        %v1378 = vld [vmem:[%s1251 + $0x378] sm:$0xff]
        %v1379 = vld [vmem:[%s1251 + $0x380] sm:$0xff]
        %v1380 = vld [vmem:[%s1251 + $0x388] sm:$0xff]
        %v1381 = vld [vmem:[%s1251 + $0x390] sm:$0xff]
        %v1382 = vld [vmem:[%s1251 + $0x398] sm:$0xff]
        %v1383 = vld [vmem:[%s1251 + $0x3a0] sm:$0xff]
        %v1384 = vld [vmem:[%s1251 + $0x3a8] sm:$0xff]
        %v1385 = vld [vmem:[%s1251 + $0x3b0] sm:$0xff]
        %v1386 = vld [vmem:[%s1251 + $0x3b8] sm:$0xff]
        %v1387 = vld [vmem:[%s1251 + $0x3c0] sm:$0xff]
        %v1388 = vld [vmem:[%s1251 + $0x3c8] sm:$0xff]
        %v1389 = vld [vmem:[%s1251 + $0x3d0] sm:$0xff]
        %v1390 = vld [vmem:[%s1251 + $0x3d8] sm:$0xff]
        %v1391 = vld [vmem:[%s1251 + $0x3e0] sm:$0xff]
        %v1392 = vld [vmem:[%s1251 + $0x3e8] sm:$0xff]
        %v1393 = vld [vmem:[%s1251 + $0x3f0] sm:$0xff]
        %v1394 = vld [vmem:[%s1251 + $0x3f8] sm:$0xff]
        %v1395 = vld [vmem:[%s1214] sm:$0xff]
        %v1396 = vld [vmem:[%s1214 + $0x8] sm:$0xff]
        %v1397 = vld [vmem:[%s1214 + $0x10] sm:$0xff]
        %v1398 = vld [vmem:[%s1214 + $0x18] sm:$0xff]
        %v1399 = vld [vmem:[%s1214 + $0x20] sm:$0xff]
        %v1400 = vld [vmem:[%s1214 + $0x28] sm:$0xff]
        %v1401 = vld [vmem:[%s1214 + $0x30] sm:$0xff]
        %v1402 = vld [vmem:[%s1214 + $0x38] sm:$0xff]
        %v1403 = vld [vmem:[%s1214 + $0x40] sm:$0xff]
        %v1404 = vld [vmem:[%s1214 + $0x48] sm:$0xff]
        %v1405 = vld [vmem:[%s1214 + $0x50] sm:$0xff]
        %v1406 = vld [vmem:[%s1214 + $0x58] sm:$0xff]
        %v1407 = vld [vmem:[%s1214 + $0x60] sm:$0xff]
        %v1408 = vld [vmem:[%s1214 + $0x68] sm:$0xff]
        %v1409 = vld [vmem:[%s1214 + $0x70] sm:$0xff]
        %v1410 = vld [vmem:[%s1214 + $0x78] sm:$0xff]
        %v1411 = vld [vmem:[%s1214 + $0x80] sm:$0xff]
        %v1412 = vld [vmem:[%s1214 + $0x88] sm:$0xff]
        %v1413 = vld [vmem:[%s1214 + $0x90] sm:$0xff]
        %v1414 = vld [vmem:[%s1214 + $0x98] sm:$0xff]
        %v1415 = vld [vmem:[%s1214 + $0xa0] sm:$0xff]
        %v1416 = vld [vmem:[%s1214 + $0xa8] sm:$0xff]
        %v1417 = vld [vmem:[%s1214 + $0xb0] sm:$0xff]
        %v1418 = vld [vmem:[%s1214 + $0xb8] sm:$0xff]
        %v1419 = vld [vmem:[%s1214 + $0xc0] sm:$0xff]
        %v1420 = vld [vmem:[%s1214 + $0xc8] sm:$0xff]
        %v1421 = vld [vmem:[%s1214 + $0xd0] sm:$0xff]
        %v1422 = vld [vmem:[%s1214 + $0xd8] sm:$0xff]
        %v1423 = vld [vmem:[%s1214 + $0xe0] sm:$0xff]
        %v1424 = vld [vmem:[%s1214 + $0xe8] sm:$0xff]
        %v1425 = vld [vmem:[%s1214 + $0xf0] sm:$0xff]
        %v1426 = vld [vmem:[%s1214 + $0xf8] sm:$0xff]
        %v1427 = vld [vmem:[%s1214 + $0x100] sm:$0xff]
        %v1428 = vld [vmem:[%s1214 + $0x108] sm:$0xff]
        %v1429 = vld [vmem:[%s1214 + $0x110] sm:$0xff]
        %v1430 = vld [vmem:[%s1214 + $0x118] sm:$0xff]
        %v1431 = vld [vmem:[%s1214 + $0x120] sm:$0xff]
        %v1432 = vld [vmem:[%s1214 + $0x128] sm:$0xff]
        %v1433 = vld [vmem:[%s1214 + $0x130] sm:$0xff]
        %v1434 = vld [vmem:[%s1214 + $0x138] sm:$0xff]
        %v1435 = vld [vmem:[%s1214 + $0x140] sm:$0xff]
        %v1436 = vld [vmem:[%s1214 + $0x148] sm:$0xff]
        %v1437 = vld [vmem:[%s1214 + $0x150] sm:$0xff]
        %v1438 = vld [vmem:[%s1214 + $0x158] sm:$0xff]
        %v1439 = vld [vmem:[%s1214 + $0x160] sm:$0xff]
        %v1440 = vld [vmem:[%s1214 + $0x168] sm:$0xff]
        %v1441 = vld [vmem:[%s1214 + $0x170] sm:$0xff]
        %v1442 = vld [vmem:[%s1214 + $0x178] sm:$0xff]
        %v1443 = vld [vmem:[%s1214 + $0x180] sm:$0xff]
        %v1444 = vld [vmem:[%s1214 + $0x188] sm:$0xff]
        %v1445 = vld [vmem:[%s1214 + $0x190] sm:$0xff]
        %v1446 = vld [vmem:[%s1214 + $0x198] sm:$0xff]
        %v1447 = vld [vmem:[%s1214 + $0x1a0] sm:$0xff]
        %v1448 = vld [vmem:[%s1214 + $0x1a8] sm:$0xff]
        %v1449 = vld [vmem:[%s1214 + $0x1b0] sm:$0xff]
        %v1450 = vld [vmem:[%s1214 + $0x1b8] sm:$0xff]
        %v1451 = vld [vmem:[%s1214 + $0x1c0] sm:$0xff]
        %v1452 = vld [vmem:[%s1214 + $0x1c8] sm:$0xff]
        %v1453 = vld [vmem:[%s1214 + $0x1d0] sm:$0xff]
        %v1454 = vld [vmem:[%s1214 + $0x1d8] sm:$0xff]
        %v1455 = vld [vmem:[%s1214 + $0x1e0] sm:$0xff]
        %v1456 = vld [vmem:[%s1214 + $0x1e8] sm:$0xff]
        %v1457 = vld [vmem:[%s1214 + $0x1f0] sm:$0xff]
        %v1458 = vld [vmem:[%s1214 + $0x1f8] sm:$0xff]
        %v1459 = vld [vmem:[%s1214 + $0x200] sm:$0xff]
        %v1460 = vld [vmem:[%s1214 + $0x208] sm:$0xff]
        %v1461 = vld [vmem:[%s1214 + $0x210] sm:$0xff]
        %v1462 = vld [vmem:[%s1214 + $0x218] sm:$0xff]
        %v1463 = vld [vmem:[%s1214 + $0x220] sm:$0xff]
        %v1464 = vld [vmem:[%s1214 + $0x228] sm:$0xff]
        %v1465 = vld [vmem:[%s1214 + $0x230] sm:$0xff]
        %v1466 = vld [vmem:[%s1214 + $0x238] sm:$0xff]
        %v1467 = vld [vmem:[%s1214 + $0x240] sm:$0xff]
        %v1468 = vld [vmem:[%s1214 + $0x248] sm:$0xff]
        %v1469 = vld [vmem:[%s1214 + $0x250] sm:$0xff]
        %v1470 = vld [vmem:[%s1214 + $0x258] sm:$0xff]
        %v1471 = vld [vmem:[%s1214 + $0x260] sm:$0xff]
        %v1472 = vld [vmem:[%s1214 + $0x268] sm:$0xff]
        %v1473 = vld [vmem:[%s1214 + $0x270] sm:$0xff]
        %v1474 = vld [vmem:[%s1214 + $0x278] sm:$0xff]
        %v1475 = vld [vmem:[%s1214 + $0x280] sm:$0xff]
        %v1476 = vld [vmem:[%s1214 + $0x288] sm:$0xff]
        %v1477 = vld [vmem:[%s1214 + $0x290] sm:$0xff]
        %v1478 = vld [vmem:[%s1214 + $0x298] sm:$0xff]
        %v1479 = vld [vmem:[%s1214 + $0x2a0] sm:$0xff]
        %v1480 = vld [vmem:[%s1214 + $0x2a8] sm:$0xff]
        %v1481 = vld [vmem:[%s1214 + $0x2b0] sm:$0xff]
        %v1482 = vld [vmem:[%s1214 + $0x2b8] sm:$0xff]
        %v1483 = vld [vmem:[%s1214 + $0x2c0] sm:$0xff]
        %v1484 = vld [vmem:[%s1214 + $0x2c8] sm:$0xff]
        %v1485 = vld [vmem:[%s1214 + $0x2d0] sm:$0xff]
        %v1486 = vld [vmem:[%s1214 + $0x2d8] sm:$0xff]
        %v1487 = vld [vmem:[%s1214 + $0x2e0] sm:$0xff]
        %v1488 = vld [vmem:[%s1214 + $0x2e8] sm:$0xff]
        %v1489 = vld [vmem:[%s1214 + $0x2f0] sm:$0xff]
        %v1490 = vld [vmem:[%s1214 + $0x2f8] sm:$0xff]
        %v1491 = vld [vmem:[%s1214 + $0x300] sm:$0xff]
        %v1492 = vld [vmem:[%s1214 + $0x308] sm:$0xff]
        %v1493 = vld [vmem:[%s1214 + $0x310] sm:$0xff]
        %v1494 = vld [vmem:[%s1214 + $0x318] sm:$0xff]
        %v1495 = vld [vmem:[%s1214 + $0x320] sm:$0xff]
        %v1496 = vld [vmem:[%s1214 + $0x328] sm:$0xff]
        %v1497 = vld [vmem:[%s1214 + $0x330] sm:$0xff]
        %v1498 = vld [vmem:[%s1214 + $0x338] sm:$0xff]
        %v1499 = vld [vmem:[%s1214 + $0x340] sm:$0xff]
        %v1500 = vld [vmem:[%s1214 + $0x348] sm:$0xff]
        %v1501 = vld [vmem:[%s1214 + $0x350] sm:$0xff]
        %v1502 = vld [vmem:[%s1214 + $0x358] sm:$0xff]
        %v1503 = vld [vmem:[%s1214 + $0x360] sm:$0xff]
        %v1504 = vld [vmem:[%s1214 + $0x368] sm:$0xff]
        %v1505 = vld [vmem:[%s1214 + $0x370] sm:$0xff]
        %v1506 = vld [vmem:[%s1214 + $0x378] sm:$0xff]
        %v1507 = vld [vmem:[%s1214 + $0x380] sm:$0xff]
        %v1508 = vld [vmem:[%s1214 + $0x388] sm:$0xff]
        %v1509 = vld [vmem:[%s1214 + $0x390] sm:$0xff]
        %v1510 = vld [vmem:[%s1214 + $0x398] sm:$0xff]
        %v1511 = vld [vmem:[%s1214 + $0x3a0] sm:$0xff]
        %v1512 = vld [vmem:[%s1214 + $0x3a8] sm:$0xff]
        %v1513 = vld [vmem:[%s1214 + $0x3b0] sm:$0xff]
        %v1514 = vld [vmem:[%s1214 + $0x3b8] sm:$0xff]
        %v1515 = vld [vmem:[%s1214 + $0x3c0] sm:$0xff]
        %v1516 = vld [vmem:[%s1214 + $0x3c8] sm:$0xff]
        %v1517 = vld [vmem:[%s1214 + $0x3d0] sm:$0xff]
        %v1518 = vld [vmem:[%s1214 + $0x3d8] sm:$0xff]
        %v1519 = vld [vmem:[%s1214 + $0x3e0] sm:$0xff]
        %v1520 = vld [vmem:[%s1214 + $0x3e8] sm:$0xff]
        %v1521 = vld [vmem:[%s1214 + $0x3f0] sm:$0xff]
        %v1522 = vld [vmem:[%s1214 + $0x3f8] sm:$0xff]
        %v1523 = vld [vmem:[%s1214 + $0x400] sm:$0xff]
        %v1524 = vld [vmem:[%s1214 + $0x408] sm:$0xff]
        %v1525 = vld [vmem:[%s1214 + $0x410] sm:$0xff]
        %v1526 = vld [vmem:[%s1214 + $0x418] sm:$0xff]
        %v1527 = vld [vmem:[%s1214 + $0x420] sm:$0xff]
        %v1528 = vld [vmem:[%s1214 + $0x428] sm:$0xff]
        %v1529 = vld [vmem:[%s1214 + $0x430] sm:$0xff]
        %v1530 = vld [vmem:[%s1214 + $0x438] sm:$0xff]
        %v1531 = vld [vmem:[%s1214 + $0x440] sm:$0xff]
        %v1532 = vld [vmem:[%s1214 + $0x448] sm:$0xff]
        %v1533 = vld [vmem:[%s1214 + $0x450] sm:$0xff]
        %v1534 = vld [vmem:[%s1214 + $0x458] sm:$0xff]
        %v1535 = vld [vmem:[%s1214 + $0x460] sm:$0xff]
        %v1536 = vld [vmem:[%s1214 + $0x468] sm:$0xff]
        %v1537 = vld [vmem:[%s1214 + $0x470] sm:$0xff]
        %v1538 = vld [vmem:[%s1214 + $0x478] sm:$0xff]
        %v1539 = vld [vmem:[%s1214 + $0x480] sm:$0xff]
        %v1540 = vld [vmem:[%s1214 + $0x488] sm:$0xff]
        %v1541 = vld [vmem:[%s1214 + $0x490] sm:$0xff]
        %v1542 = vld [vmem:[%s1214 + $0x498] sm:$0xff]
        %v1543 = vld [vmem:[%s1214 + $0x4a0] sm:$0xff]
        %v1544 = vld [vmem:[%s1214 + $0x4a8] sm:$0xff]
        %v1545 = vld [vmem:[%s1214 + $0x4b0] sm:$0xff]
        %v1546 = vld [vmem:[%s1214 + $0x4b8] sm:$0xff]
        %v1547 = vld [vmem:[%s1214 + $0x4c0] sm:$0xff]
        %v1548 = vld [vmem:[%s1214 + $0x4c8] sm:$0xff]
        %v1549 = vld [vmem:[%s1214 + $0x4d0] sm:$0xff]
        %v1550 = vld [vmem:[%s1214 + $0x4d8] sm:$0xff]
        %v1551 = vld [vmem:[%s1214 + $0x4e0] sm:$0xff]
        %v1552 = vld [vmem:[%s1214 + $0x4e8] sm:$0xff]
        %v1553 = vld [vmem:[%s1214 + $0x4f0] sm:$0xff]
        %v1554 = vld [vmem:[%s1214 + $0x4f8] sm:$0xff]
        %v1555 = vld [vmem:[%s1214 + $0x500] sm:$0xff]
        %v1556 = vld [vmem:[%s1214 + $0x508] sm:$0xff]
        %v1557 = vld [vmem:[%s1214 + $0x510] sm:$0xff]
        %v1558 = vld [vmem:[%s1214 + $0x518] sm:$0xff]
        %v1559 = vld [vmem:[%s1214 + $0x520] sm:$0xff]
        %v1560 = vld [vmem:[%s1214 + $0x528] sm:$0xff]
        %v1561 = vld [vmem:[%s1214 + $0x530] sm:$0xff]
        %v1562 = vld [vmem:[%s1214 + $0x538] sm:$0xff]
        %v1563 = vld [vmem:[%s1214 + $0x540] sm:$0xff]
        %v1564 = vld [vmem:[%s1214 + $0x548] sm:$0xff]
        %v1565 = vld [vmem:[%s1214 + $0x550] sm:$0xff]
        %v1566 = vld [vmem:[%s1214 + $0x558] sm:$0xff]
        %v1567 = vld [vmem:[%s1214 + $0x560] sm:$0xff]
        %v1568 = vld [vmem:[%s1214 + $0x568] sm:$0xff]
        %v1569 = vld [vmem:[%s1214 + $0x570] sm:$0xff]
        %v1570 = vld [vmem:[%s1214 + $0x578] sm:$0xff]
        %v1571 = vld [vmem:[%s1214 + $0x580] sm:$0xff]
        %v1572 = vld [vmem:[%s1214 + $0x588] sm:$0xff]
        %v1573 = vld [vmem:[%s1214 + $0x590] sm:$0xff]
        %v1574 = vld [vmem:[%s1214 + $0x598] sm:$0xff]
        %v1575 = vld [vmem:[%s1214 + $0x5a0] sm:$0xff]
        %v1576 = vld [vmem:[%s1214 + $0x5a8] sm:$0xff]
        %v1577 = vld [vmem:[%s1214 + $0x5b0] sm:$0xff]
        %v1578 = vld [vmem:[%s1214 + $0x5b8] sm:$0xff]
        %v1579 = vld [vmem:[%s1214 + $0x5c0] sm:$0xff]
        %v1580 = vld [vmem:[%s1214 + $0x5c8] sm:$0xff]
        %v1581 = vld [vmem:[%s1214 + $0x5d0] sm:$0xff]
        %v1582 = vld [vmem:[%s1214 + $0x5d8] sm:$0xff]
        %v1583 = vld [vmem:[%s1214 + $0x5e0] sm:$0xff]
        %v1584 = vld [vmem:[%s1214 + $0x5e8] sm:$0xff]
        %v1585 = vld [vmem:[%s1214 + $0x5f0] sm:$0xff]
        %v1586 = vld [vmem:[%s1214 + $0x5f8] sm:$0xff]
        %v1587 = vld [vmem:[%s1214 + $0x600] sm:$0xff]
        %v1588 = vld [vmem:[%s1214 + $0x608] sm:$0xff]
        %v1589 = vld [vmem:[%s1214 + $0x610] sm:$0xff]
        %v1590 = vld [vmem:[%s1214 + $0x618] sm:$0xff]
        %v1591 = vld [vmem:[%s1214 + $0x620] sm:$0xff]
        %v1592 = vld [vmem:[%s1214 + $0x628] sm:$0xff]
        %v1593 = vld [vmem:[%s1214 + $0x630] sm:$0xff]
        %v1594 = vld [vmem:[%s1214 + $0x638] sm:$0xff]
        %v1595 = vld [vmem:[%s1214 + $0x640] sm:$0xff]
        %v1596 = vld [vmem:[%s1214 + $0x648] sm:$0xff]
        %v1597 = vld [vmem:[%s1214 + $0x650] sm:$0xff]
        %v1598 = vld [vmem:[%s1214 + $0x658] sm:$0xff]
        %v1599 = vld [vmem:[%s1214 + $0x660] sm:$0xff]
        %v1600 = vld [vmem:[%s1214 + $0x668] sm:$0xff]
        %v1601 = vld [vmem:[%s1214 + $0x670] sm:$0xff]
        %v1602 = vld [vmem:[%s1214 + $0x678] sm:$0xff]
        %v1603 = vld [vmem:[%s1214 + $0x680] sm:$0xff]
        %v1604 = vld [vmem:[%s1214 + $0x688] sm:$0xff]
        %v1605 = vld [vmem:[%s1214 + $0x690] sm:$0xff]
        %v1606 = vld [vmem:[%s1214 + $0x698] sm:$0xff]
        %v1607 = vld [vmem:[%s1214 + $0x6a0] sm:$0xff]
        %v1608 = vld [vmem:[%s1214 + $0x6a8] sm:$0xff]
        %v1609 = vld [vmem:[%s1214 + $0x6b0] sm:$0xff]
        %v1610 = vld [vmem:[%s1214 + $0x6b8] sm:$0xff]
        %v1611 = vld [vmem:[%s1214 + $0x6c0] sm:$0xff]
        %v1612 = vld [vmem:[%s1214 + $0x6c8] sm:$0xff]
        %v1613 = vld [vmem:[%s1214 + $0x6d0] sm:$0xff]
        %v1614 = vld [vmem:[%s1214 + $0x6d8] sm:$0xff]
        %v1615 = vld [vmem:[%s1214 + $0x6e0] sm:$0xff]
        %v1616 = vld [vmem:[%s1214 + $0x6e8] sm:$0xff]
        %v1617 = vld [vmem:[%s1214 + $0x6f0] sm:$0xff]
        %v1618 = vld [vmem:[%s1214 + $0x6f8] sm:$0xff]
        %v1619 = vld [vmem:[%s1214 + $0x700] sm:$0xff]
        %v1620 = vld [vmem:[%s1214 + $0x708] sm:$0xff]
        %v1621 = vld [vmem:[%s1214 + $0x710] sm:$0xff]
        %v1622 = vld [vmem:[%s1214 + $0x718] sm:$0xff]
        %v1623 = vld [vmem:[%s1214 + $0x720] sm:$0xff]
        %v1624 = vld [vmem:[%s1214 + $0x728] sm:$0xff]
        %v1625 = vld [vmem:[%s1214 + $0x730] sm:$0xff]
        %v1626 = vld [vmem:[%s1214 + $0x738] sm:$0xff]
        %v1627 = vld [vmem:[%s1214 + $0x740] sm:$0xff]
        %v1628 = vld [vmem:[%s1214 + $0x748] sm:$0xff]
        %v1629 = vld [vmem:[%s1214 + $0x750] sm:$0xff]
        %v1630 = vld [vmem:[%s1214 + $0x758] sm:$0xff]
        %v1631 = vld [vmem:[%s1214 + $0x760] sm:$0xff]
        %v1632 = vld [vmem:[%s1214 + $0x768] sm:$0xff]
        %v1633 = vld [vmem:[%s1214 + $0x770] sm:$0xff]
        %v1634 = vld [vmem:[%s1214 + $0x778] sm:$0xff]
        %v1635 = vld [vmem:[%s1214 + $0x780] sm:$0xff]
        %v1636 = vld [vmem:[%s1214 + $0x788] sm:$0xff]
        %v1637 = vld [vmem:[%s1214 + $0x790] sm:$0xff]
        %v1638 = vld [vmem:[%s1214 + $0x798] sm:$0xff]
        %v1639 = vld [vmem:[%s1214 + $0x7a0] sm:$0xff]
        %v1640 = vld [vmem:[%s1214 + $0x7a8] sm:$0xff]
        %v1641 = vld [vmem:[%s1214 + $0x7b0] sm:$0xff]
        %v1642 = vld [vmem:[%s1214 + $0x7b8] sm:$0xff]
        %v1643 = vld [vmem:[%s1214 + $0x7c0] sm:$0xff]
        %v1644 = vld [vmem:[%s1214 + $0x7c8] sm:$0xff]
        %v1645 = vld [vmem:[%s1214 + $0x7d0] sm:$0xff]
        %v1646 = vld [vmem:[%s1214 + $0x7d8] sm:$0xff]
        %v1647 = vld [vmem:[%s1214 + $0x7e0] sm:$0xff]
        %v1648 = vld [vmem:[%s1214 + $0x7e8] sm:$0xff]
        %v1649 = vld [vmem:[%s1214 + $0x7f0] sm:$0xff]
        %v1650 = vld [vmem:[%s1214 + $0x7f8] sm:$0xff]
        %v1779 = vunpack.c.l.b16 %v1267
        %v1780 = vunpack.c.h.b16 %v1267
        %v1781 = vunpack.c.l.b16 %v1268
        %v1782 = vunpack.c.h.b16 %v1268
        %v1783 = vunpack.c.l.b16 %v1269
        %v1784 = vunpack.c.h.b16 %v1269
        %v1785 = vunpack.c.l.b16 %v1270
        %v1786 = vunpack.c.h.b16 %v1270
        %v1787 = vunpack.c.l.b16 %v1271
        %v1788 = vunpack.c.h.b16 %v1271
        %v1789 = vunpack.c.l.b16 %v1272
        %v1790 = vunpack.c.h.b16 %v1272
        %v1791 = vunpack.c.l.b16 %v1273
        %v1792 = vunpack.c.h.b16 %v1273
        %v1793 = vunpack.c.l.b16 %v1274
        %v1794 = vunpack.c.h.b16 %v1274
        %v1795 = vunpack.c.l.b16 %v1275
        %v1796 = vunpack.c.h.b16 %v1275
        %v1797 = vunpack.c.l.b16 %v1276
        %v1798 = vunpack.c.h.b16 %v1276
        %v1799 = vunpack.c.l.b16 %v1277
        %v1800 = vunpack.c.h.b16 %v1277
        %v1801 = vunpack.c.l.b16 %v1278
        %v1802 = vunpack.c.h.b16 %v1278
        %v1803 = vunpack.c.l.b16 %v1279
        %v1804 = vunpack.c.h.b16 %v1279
        %v1805 = vunpack.c.l.b16 %v1280
        %v1806 = vunpack.c.h.b16 %v1280
        %v1807 = vunpack.c.l.b16 %v1281
        %v1808 = vunpack.c.h.b16 %v1281
        %v1809 = vunpack.c.l.b16 %v1282
        %v1810 = vunpack.c.h.b16 %v1282
        %v1811 = vunpack.c.l.b16 %v1283
        %v1812 = vunpack.c.h.b16 %v1283
        %v1813 = vunpack.c.l.b16 %v1284
        %v1814 = vunpack.c.h.b16 %v1284
        %v1815 = vunpack.c.l.b16 %v1285
        %v1816 = vunpack.c.h.b16 %v1285
        %v1817 = vunpack.c.l.b16 %v1286
        %v1818 = vunpack.c.h.b16 %v1286
        %v1819 = vunpack.c.l.b16 %v1287
        %v1820 = vunpack.c.h.b16 %v1287
        %v1821 = vunpack.c.l.b16 %v1288
        %v1822 = vunpack.c.h.b16 %v1288
        %v1823 = vunpack.c.l.b16 %v1289
        %v1824 = vunpack.c.h.b16 %v1289
        %v1825 = vunpack.c.l.b16 %v1290
        %v1826 = vunpack.c.h.b16 %v1290
        %v1827 = vunpack.c.l.b16 %v1291
        %v1828 = vunpack.c.h.b16 %v1291
        %v1829 = vunpack.c.l.b16 %v1292
        %v1830 = vunpack.c.h.b16 %v1292
        %v1831 = vunpack.c.l.b16 %v1293
        %v1832 = vunpack.c.h.b16 %v1293
        %v1833 = vunpack.c.l.b16 %v1294
        %v1834 = vunpack.c.h.b16 %v1294
        %v1835 = vunpack.c.l.b16 %v1295
        %v1836 = vunpack.c.h.b16 %v1295
        %v1837 = vunpack.c.l.b16 %v1296
        %v1838 = vunpack.c.h.b16 %v1296
        %v1839 = vunpack.c.l.b16 %v1297
        %v1840 = vunpack.c.h.b16 %v1297
        %v1841 = vunpack.c.l.b16 %v1298
        %v1842 = vunpack.c.h.b16 %v1298
        %v1843 = vunpack.c.l.b16 %v1299
        %v1844 = vunpack.c.h.b16 %v1299
        %v1845 = vunpack.c.l.b16 %v1300
        %v1846 = vunpack.c.h.b16 %v1300
        %v1847 = vunpack.c.l.b16 %v1301
        %v1848 = vunpack.c.h.b16 %v1301
        %v1849 = vunpack.c.l.b16 %v1302
        %v1850 = vunpack.c.h.b16 %v1302
        %v1851 = vunpack.c.l.b16 %v1303
        %v1852 = vunpack.c.h.b16 %v1303
        %v1853 = vunpack.c.l.b16 %v1304
        %v1854 = vunpack.c.h.b16 %v1304
        %v1855 = vunpack.c.l.b16 %v1305
        %v1856 = vunpack.c.h.b16 %v1305
        %v1857 = vunpack.c.l.b16 %v1306
        %v1858 = vunpack.c.h.b16 %v1306
        %v1859 = vunpack.c.l.b16 %v1307
        %v1860 = vunpack.c.h.b16 %v1307
        %v1861 = vunpack.c.l.b16 %v1308
        %v1862 = vunpack.c.h.b16 %v1308
        %v1863 = vunpack.c.l.b16 %v1309
        %v1864 = vunpack.c.h.b16 %v1309
        %v1865 = vunpack.c.l.b16 %v1310
        %v1866 = vunpack.c.h.b16 %v1310
        %v1867 = vunpack.c.l.b16 %v1311
        %v1868 = vunpack.c.h.b16 %v1311
        %v1869 = vunpack.c.l.b16 %v1312
        %v1870 = vunpack.c.h.b16 %v1312
        %v1871 = vunpack.c.l.b16 %v1313
        %v1872 = vunpack.c.h.b16 %v1313
        %v1873 = vunpack.c.l.b16 %v1314
        %v1874 = vunpack.c.h.b16 %v1314
        %v1875 = vunpack.c.l.b16 %v1315
        %v1876 = vunpack.c.h.b16 %v1315
        %v1877 = vunpack.c.l.b16 %v1316
        %v1878 = vunpack.c.h.b16 %v1316
        %v1879 = vunpack.c.l.b16 %v1317
        %v1880 = vunpack.c.h.b16 %v1317
        %v1881 = vunpack.c.l.b16 %v1318
        %v1882 = vunpack.c.h.b16 %v1318
        %v1883 = vunpack.c.l.b16 %v1319
        %v1884 = vunpack.c.h.b16 %v1319
        %v1885 = vunpack.c.l.b16 %v1320
        %v1886 = vunpack.c.h.b16 %v1320
        %v1887 = vunpack.c.l.b16 %v1321
        %v1888 = vunpack.c.h.b16 %v1321
        %v1889 = vunpack.c.l.b16 %v1322
        %v1890 = vunpack.c.h.b16 %v1322
        %v1891 = vunpack.c.l.b16 %v1323
        %v1892 = vunpack.c.h.b16 %v1323
        %v1893 = vunpack.c.l.b16 %v1324
        %v1894 = vunpack.c.h.b16 %v1324
        %v1895 = vunpack.c.l.b16 %v1325
        %v1896 = vunpack.c.h.b16 %v1325
        %v1897 = vunpack.c.l.b16 %v1326
        %v1898 = vunpack.c.h.b16 %v1326
        %v1899 = vunpack.c.l.b16 %v1327
        %v1900 = vunpack.c.h.b16 %v1327
        %v1901 = vunpack.c.l.b16 %v1328
        %v1902 = vunpack.c.h.b16 %v1328
        %v1903 = vunpack.c.l.b16 %v1329
        %v1904 = vunpack.c.h.b16 %v1329
        %v1905 = vunpack.c.l.b16 %v1330
        %v1906 = vunpack.c.h.b16 %v1330
        %v1907 = vunpack.c.l.b16 %v1331
        %v1908 = vunpack.c.h.b16 %v1331
        %v1909 = vunpack.c.l.b16 %v1332
        %v1910 = vunpack.c.h.b16 %v1332
        %v1911 = vunpack.c.l.b16 %v1333
        %v1912 = vunpack.c.h.b16 %v1333
        %v1913 = vunpack.c.l.b16 %v1334
        %v1914 = vunpack.c.h.b16 %v1334
        %v1915 = vunpack.c.l.b16 %v1335
        %v1916 = vunpack.c.h.b16 %v1335
        %v1917 = vunpack.c.l.b16 %v1336
        %v1918 = vunpack.c.h.b16 %v1336
        %v1919 = vunpack.c.l.b16 %v1337
        %v1920 = vunpack.c.h.b16 %v1337
        %v1921 = vunpack.c.l.b16 %v1338
        %v1922 = vunpack.c.h.b16 %v1338
        %v1923 = vunpack.c.l.b16 %v1339
        %v1924 = vunpack.c.h.b16 %v1339
        %v1925 = vunpack.c.l.b16 %v1340
        %v1926 = vunpack.c.h.b16 %v1340
        %v1927 = vunpack.c.l.b16 %v1341
        %v1928 = vunpack.c.h.b16 %v1341
        %v1929 = vunpack.c.l.b16 %v1342
        %v1930 = vunpack.c.h.b16 %v1342
        %v1931 = vunpack.c.l.b16 %v1343
        %v1932 = vunpack.c.h.b16 %v1343
        %v1933 = vunpack.c.l.b16 %v1344
        %v1934 = vunpack.c.h.b16 %v1344
        %v1935 = vunpack.c.l.b16 %v1345
        %v1936 = vunpack.c.h.b16 %v1345
        %v1937 = vunpack.c.l.b16 %v1346
        %v1938 = vunpack.c.h.b16 %v1346
        %v1939 = vunpack.c.l.b16 %v1347
        %v1940 = vunpack.c.h.b16 %v1347
        %v1941 = vunpack.c.l.b16 %v1348
        %v1942 = vunpack.c.h.b16 %v1348
        %v1943 = vunpack.c.l.b16 %v1349
        %v1944 = vunpack.c.h.b16 %v1349
        %v1945 = vunpack.c.l.b16 %v1350
        %v1946 = vunpack.c.h.b16 %v1350
        %v1947 = vunpack.c.l.b16 %v1351
        %v1948 = vunpack.c.h.b16 %v1351
        %v1949 = vunpack.c.l.b16 %v1352
        %v1950 = vunpack.c.h.b16 %v1352
        %v1951 = vunpack.c.l.b16 %v1353
        %v1952 = vunpack.c.h.b16 %v1353
        %v1953 = vunpack.c.l.b16 %v1354
        %v1954 = vunpack.c.h.b16 %v1354
        %v1955 = vunpack.c.l.b16 %v1355
        %v1956 = vunpack.c.h.b16 %v1355
        %v1957 = vunpack.c.l.b16 %v1356
        %v1958 = vunpack.c.h.b16 %v1356
        %v1959 = vunpack.c.l.b16 %v1357
        %v1960 = vunpack.c.h.b16 %v1357
        %v1961 = vunpack.c.l.b16 %v1358
        %v1962 = vunpack.c.h.b16 %v1358
        %v1963 = vunpack.c.l.b16 %v1359
        %v1964 = vunpack.c.h.b16 %v1359
        %v1965 = vunpack.c.l.b16 %v1360
        %v1966 = vunpack.c.h.b16 %v1360
        %v1967 = vunpack.c.l.b16 %v1361
        %v1968 = vunpack.c.h.b16 %v1361
        %v1969 = vunpack.c.l.b16 %v1362
        %v1970 = vunpack.c.h.b16 %v1362
        %v1971 = vunpack.c.l.b16 %v1363
        %v1972 = vunpack.c.h.b16 %v1363
        %v1973 = vunpack.c.l.b16 %v1364
        %v1974 = vunpack.c.h.b16 %v1364
        %v1975 = vunpack.c.l.b16 %v1365
        %v1976 = vunpack.c.h.b16 %v1365
        %v1977 = vunpack.c.l.b16 %v1366
        %v1978 = vunpack.c.h.b16 %v1366
        %v1979 = vunpack.c.l.b16 %v1367
        %v1980 = vunpack.c.h.b16 %v1367
        %v1981 = vunpack.c.l.b16 %v1368
        %v1982 = vunpack.c.h.b16 %v1368
        %v1983 = vunpack.c.l.b16 %v1369
        %v1984 = vunpack.c.h.b16 %v1369
        %v1985 = vunpack.c.l.b16 %v1370
        %v1986 = vunpack.c.h.b16 %v1370
        %v1987 = vunpack.c.l.b16 %v1371
        %v1988 = vunpack.c.h.b16 %v1371
        %v1989 = vunpack.c.l.b16 %v1372
        %v1990 = vunpack.c.h.b16 %v1372
        %v1991 = vunpack.c.l.b16 %v1373
        %v1992 = vunpack.c.h.b16 %v1373
        %v1993 = vunpack.c.l.b16 %v1374
        %v1994 = vunpack.c.h.b16 %v1374
        %v1995 = vunpack.c.l.b16 %v1375
        %v1996 = vunpack.c.h.b16 %v1375
        %v1997 = vunpack.c.l.b16 %v1376
        %v1998 = vunpack.c.h.b16 %v1376
        %v1999 = vunpack.c.l.b16 %v1377
        %v2000 = vunpack.c.h.b16 %v1377
        %v2001 = vunpack.c.l.b16 %v1378
        %v2002 = vunpack.c.h.b16 %v1378
        %v2003 = vunpack.c.l.b16 %v1379
        %v2004 = vunpack.c.h.b16 %v1379
        %v2005 = vunpack.c.l.b16 %v1380
        %v2006 = vunpack.c.h.b16 %v1380
        %v2007 = vunpack.c.l.b16 %v1381
        %v2008 = vunpack.c.h.b16 %v1381
        %v2009 = vunpack.c.l.b16 %v1382
        %v2010 = vunpack.c.h.b16 %v1382
        %v2011 = vunpack.c.l.b16 %v1383
        %v2012 = vunpack.c.h.b16 %v1383
        %v2013 = vunpack.c.l.b16 %v1384
        %v2014 = vunpack.c.h.b16 %v1384
        %v2015 = vunpack.c.l.b16 %v1385
        %v2016 = vunpack.c.h.b16 %v1385
        %v2017 = vunpack.c.l.b16 %v1386
        %v2018 = vunpack.c.h.b16 %v1386
        %v2019 = vunpack.c.l.b16 %v1387
        %v2020 = vunpack.c.h.b16 %v1387
        %v2021 = vunpack.c.l.b16 %v1388
        %v2022 = vunpack.c.h.b16 %v1388
        %v2023 = vunpack.c.l.b16 %v1389
        %v2024 = vunpack.c.h.b16 %v1389
        %v2025 = vunpack.c.l.b16 %v1390
        %v2026 = vunpack.c.h.b16 %v1390
        %v2027 = vunpack.c.l.b16 %v1391
        %v2028 = vunpack.c.h.b16 %v1391
        %v2029 = vunpack.c.l.b16 %v1392
        %v2030 = vunpack.c.h.b16 %v1392
        %v2031 = vunpack.c.l.b16 %v1393
        %v2032 = vunpack.c.h.b16 %v1393
        %v2033 = vunpack.c.l.b16 %v1394
        %v2034 = vunpack.c.h.b16 %v1394
        %v2035 = vpack.c.b16 %v1795, %v1779
        %v2036 = vpack.c.b16 %v1796, %v1780
        %v2037 = vpack.c.b16 %v1797, %v1781
        %v2038 = vpack.c.b16 %v1798, %v1782
        %v2039 = vpack.c.b16 %v1799, %v1783
        %v2040 = vpack.c.b16 %v1800, %v1784
        %v2041 = vpack.c.b16 %v1801, %v1785
        %v2042 = vpack.c.b16 %v1802, %v1786
        %v2043 = vpack.c.b16 %v1803, %v1787
        %v2044 = vpack.c.b16 %v1804, %v1788
        %v2045 = vpack.c.b16 %v1805, %v1789
        %v2046 = vpack.c.b16 %v1806, %v1790
        %v2047 = vpack.c.b16 %v1807, %v1791
        %v2048 = vpack.c.b16 %v1808, %v1792
        %v2049 = vpack.c.b16 %v1809, %v1793
        %v2050 = vpack.c.b16 %v1810, %v1794
        %v2051 = vpack.c.b16 %v1827, %v1811
        %v2052 = vpack.c.b16 %v1828, %v1812
        %v2053 = vpack.c.b16 %v1829, %v1813
        %v2054 = vpack.c.b16 %v1830, %v1814
        %v2055 = vpack.c.b16 %v1831, %v1815
        %v2056 = vpack.c.b16 %v1832, %v1816
        %v2057 = vpack.c.b16 %v1833, %v1817
        %v2058 = vpack.c.b16 %v1834, %v1818
        %v2059 = vpack.c.b16 %v1835, %v1819
        %v2060 = vpack.c.b16 %v1836, %v1820
        %v2061 = vpack.c.b16 %v1837, %v1821
        %v2062 = vpack.c.b16 %v1838, %v1822
        %v2063 = vpack.c.b16 %v1839, %v1823
        %v2064 = vpack.c.b16 %v1840, %v1824
        %v2065 = vpack.c.b16 %v1841, %v1825
        %v2066 = vpack.c.b16 %v1842, %v1826
        %v2067 = vpack.c.b16 %v1859, %v1843
        %v2068 = vpack.c.b16 %v1860, %v1844
        %v2069 = vpack.c.b16 %v1861, %v1845
        %v2070 = vpack.c.b16 %v1862, %v1846
        %v2071 = vpack.c.b16 %v1863, %v1847
        %v2072 = vpack.c.b16 %v1864, %v1848
        %v2073 = vpack.c.b16 %v1865, %v1849
        %v2074 = vpack.c.b16 %v1866, %v1850
        %v2075 = vpack.c.b16 %v1867, %v1851
        %v2076 = vpack.c.b16 %v1868, %v1852
        %v2077 = vpack.c.b16 %v1869, %v1853
        %v2078 = vpack.c.b16 %v1870, %v1854
        %v2079 = vpack.c.b16 %v1871, %v1855
        %v2080 = vpack.c.b16 %v1872, %v1856
        %v2081 = vpack.c.b16 %v1873, %v1857
        %v2082 = vpack.c.b16 %v1874, %v1858
        %v2083 = vpack.c.b16 %v1891, %v1875
        %v2084 = vpack.c.b16 %v1892, %v1876
        %v2085 = vpack.c.b16 %v1893, %v1877
        %v2086 = vpack.c.b16 %v1894, %v1878
        %v2087 = vpack.c.b16 %v1895, %v1879
        %v2088 = vpack.c.b16 %v1896, %v1880
        %v2089 = vpack.c.b16 %v1897, %v1881
        %v2090 = vpack.c.b16 %v1898, %v1882
        %v2091 = vpack.c.b16 %v1899, %v1883
        %v2092 = vpack.c.b16 %v1900, %v1884
        %v2093 = vpack.c.b16 %v1901, %v1885
        %v2094 = vpack.c.b16 %v1902, %v1886
        %v2095 = vpack.c.b16 %v1903, %v1887
        %v2096 = vpack.c.b16 %v1904, %v1888
        %v2097 = vpack.c.b16 %v1905, %v1889
        %v2098 = vpack.c.b16 %v1906, %v1890
        %v2099 = vpack.c.b16 %v1923, %v1907
        %v2100 = vpack.c.b16 %v1924, %v1908
        %v2101 = vpack.c.b16 %v1925, %v1909
        %v2102 = vpack.c.b16 %v1926, %v1910
        %v2103 = vpack.c.b16 %v1927, %v1911
        %v2104 = vpack.c.b16 %v1928, %v1912
        %v2105 = vpack.c.b16 %v1929, %v1913
        %v2106 = vpack.c.b16 %v1930, %v1914
        %v2107 = vpack.c.b16 %v1931, %v1915
        %v2108 = vpack.c.b16 %v1932, %v1916
        %v2109 = vpack.c.b16 %v1933, %v1917
        %v2110 = vpack.c.b16 %v1934, %v1918
        %v2111 = vpack.c.b16 %v1935, %v1919
        %v2112 = vpack.c.b16 %v1936, %v1920
        %v2113 = vpack.c.b16 %v1937, %v1921
        %v2114 = vpack.c.b16 %v1938, %v1922
        %v2115 = vpack.c.b16 %v1955, %v1939
        %v2116 = vpack.c.b16 %v1956, %v1940
        %v2117 = vpack.c.b16 %v1957, %v1941
        %v2118 = vpack.c.b16 %v1958, %v1942
        %v2119 = vpack.c.b16 %v1959, %v1943
        %v2120 = vpack.c.b16 %v1960, %v1944
        %v2121 = vpack.c.b16 %v1961, %v1945
        %v2122 = vpack.c.b16 %v1962, %v1946
        %v2123 = vpack.c.b16 %v1963, %v1947
        %v2124 = vpack.c.b16 %v1964, %v1948
        %v2125 = vpack.c.b16 %v1965, %v1949
        %v2126 = vpack.c.b16 %v1966, %v1950
        %v2127 = vpack.c.b16 %v1967, %v1951
        %v2128 = vpack.c.b16 %v1968, %v1952
        %v2129 = vpack.c.b16 %v1969, %v1953
        %v2130 = vpack.c.b16 %v1970, %v1954
        %v2131 = vpack.c.b16 %v1987, %v1971
        %v2132 = vpack.c.b16 %v1988, %v1972
        %v2133 = vpack.c.b16 %v1989, %v1973
        %v2134 = vpack.c.b16 %v1990, %v1974
        %v2135 = vpack.c.b16 %v1991, %v1975
        %v2136 = vpack.c.b16 %v1992, %v1976
        %v2137 = vpack.c.b16 %v1993, %v1977
        %v2138 = vpack.c.b16 %v1994, %v1978
        %v2139 = vpack.c.b16 %v1995, %v1979
        %v2140 = vpack.c.b16 %v1996, %v1980
        %v2141 = vpack.c.b16 %v1997, %v1981
        %v2142 = vpack.c.b16 %v1998, %v1982
        %v2143 = vpack.c.b16 %v1999, %v1983
        %v2144 = vpack.c.b16 %v2000, %v1984
        %v2145 = vpack.c.b16 %v2001, %v1985
        %v2146 = vpack.c.b16 %v2002, %v1986
        %v2147 = vpack.c.b16 %v2019, %v2003
        %v2148 = vpack.c.b16 %v2020, %v2004
        %v2149 = vpack.c.b16 %v2021, %v2005
        %v2150 = vpack.c.b16 %v2022, %v2006
        %v2151 = vpack.c.b16 %v2023, %v2007
        %v2152 = vpack.c.b16 %v2024, %v2008
        %v2153 = vpack.c.b16 %v2025, %v2009
        %v2154 = vpack.c.b16 %v2026, %v2010
        %v2155 = vpack.c.b16 %v2027, %v2011
        %v2156 = vpack.c.b16 %v2028, %v2012
        %v2157 = vpack.c.b16 %v2029, %v2013
        %v2158 = vpack.c.b16 %v2030, %v2014
        %v2159 = vpack.c.b16 %v2031, %v2015
        %v2160 = vpack.c.b16 %v2032, %v2016
        %v2161 = vpack.c.b16 %v2033, %v2017
        %v2162 = vpack.c.b16 %v2034, %v2018
        %v2547 = vunpack.c.l.b16 %v1395
        %v2548 = vunpack.c.h.b16 %v1395
        %v2549 = vunpack.c.l.b16 %v1396
        %v2550 = vunpack.c.h.b16 %v1396
        %v2551 = vunpack.c.l.b16 %v1397
        %v2552 = vunpack.c.h.b16 %v1397
        %v2553 = vunpack.c.l.b16 %v1398
        %v2554 = vunpack.c.h.b16 %v1398
        %v2555 = vunpack.c.l.b16 %v1399
        %v2556 = vunpack.c.h.b16 %v1399
        %v2557 = vunpack.c.l.b16 %v1400
        %v2558 = vunpack.c.h.b16 %v1400
        %v2559 = vunpack.c.l.b16 %v1401
        %v2560 = vunpack.c.h.b16 %v1401
        %v2561 = vunpack.c.l.b16 %v1402
        %v2562 = vunpack.c.h.b16 %v1402
        %v2563 = vunpack.c.l.b16 %v1403
        %v2564 = vunpack.c.h.b16 %v1403
        %v2565 = vunpack.c.l.b16 %v1404
        %v2566 = vunpack.c.h.b16 %v1404
        %v2567 = vunpack.c.l.b16 %v1405
        %v2568 = vunpack.c.h.b16 %v1405
        %v2569 = vunpack.c.l.b16 %v1406
        %v2570 = vunpack.c.h.b16 %v1406
        %v2571 = vunpack.c.l.b16 %v1407
        %v2572 = vunpack.c.h.b16 %v1407
        %v2573 = vunpack.c.l.b16 %v1408
        %v2574 = vunpack.c.h.b16 %v1408
        %v2575 = vunpack.c.l.b16 %v1409
        %v2576 = vunpack.c.h.b16 %v1409
        %v2577 = vunpack.c.l.b16 %v1410
        %v2578 = vunpack.c.h.b16 %v1410
        %v2579 = vunpack.c.l.b16 %v1411
        %v2580 = vunpack.c.h.b16 %v1411
        %v2581 = vunpack.c.l.b16 %v1412
        %v2582 = vunpack.c.h.b16 %v1412
        %v2583 = vunpack.c.l.b16 %v1413
        %v2584 = vunpack.c.h.b16 %v1413
        %v2585 = vunpack.c.l.b16 %v1414
        %v2586 = vunpack.c.h.b16 %v1414
        %v2587 = vunpack.c.l.b16 %v1415
        %v2588 = vunpack.c.h.b16 %v1415
        %v2589 = vunpack.c.l.b16 %v1416
        %v2590 = vunpack.c.h.b16 %v1416
        %v2591 = vunpack.c.l.b16 %v1417
        %v2592 = vunpack.c.h.b16 %v1417
        %v2593 = vunpack.c.l.b16 %v1418
        %v2594 = vunpack.c.h.b16 %v1418
        %v2595 = vunpack.c.l.b16 %v1419
        %v2596 = vunpack.c.h.b16 %v1419
        %v2597 = vunpack.c.l.b16 %v1420
        %v2598 = vunpack.c.h.b16 %v1420
        %v2599 = vunpack.c.l.b16 %v1421
        %v2600 = vunpack.c.h.b16 %v1421
        %v2601 = vunpack.c.l.b16 %v1422
        %v2602 = vunpack.c.h.b16 %v1422
        %v2603 = vunpack.c.l.b16 %v1423
        %v2604 = vunpack.c.h.b16 %v1423
        %v2605 = vunpack.c.l.b16 %v1424
        %v2606 = vunpack.c.h.b16 %v1424
        %v2607 = vunpack.c.l.b16 %v1425
        %v2608 = vunpack.c.h.b16 %v1425
        %v2609 = vunpack.c.l.b16 %v1426
        %v2610 = vunpack.c.h.b16 %v1426
        %v2611 = vunpack.c.l.b16 %v1427
        %v2612 = vunpack.c.h.b16 %v1427
        %v2613 = vunpack.c.l.b16 %v1428
        %v2614 = vunpack.c.h.b16 %v1428
        %v2615 = vunpack.c.l.b16 %v1429
        %v2616 = vunpack.c.h.b16 %v1429
        %v2617 = vunpack.c.l.b16 %v1430
        %v2618 = vunpack.c.h.b16 %v1430
        %v2619 = vunpack.c.l.b16 %v1431
        %v2620 = vunpack.c.h.b16 %v1431
        %v2621 = vunpack.c.l.b16 %v1432
        %v2622 = vunpack.c.h.b16 %v1432
        %v2623 = vunpack.c.l.b16 %v1433
        %v2624 = vunpack.c.h.b16 %v1433
        %v2625 = vunpack.c.l.b16 %v1434
        %v2626 = vunpack.c.h.b16 %v1434
        %v2627 = vunpack.c.l.b16 %v1435
        %v2628 = vunpack.c.h.b16 %v1435
        %v2629 = vunpack.c.l.b16 %v1436
        %v2630 = vunpack.c.h.b16 %v1436
        %v2631 = vunpack.c.l.b16 %v1437
        %v2632 = vunpack.c.h.b16 %v1437
        %v2633 = vunpack.c.l.b16 %v1438
        %v2634 = vunpack.c.h.b16 %v1438
        %v2635 = vunpack.c.l.b16 %v1439
        %v2636 = vunpack.c.h.b16 %v1439
        %v2637 = vunpack.c.l.b16 %v1440
        %v2638 = vunpack.c.h.b16 %v1440
        %v2639 = vunpack.c.l.b16 %v1441
        %v2640 = vunpack.c.h.b16 %v1441
        %v2641 = vunpack.c.l.b16 %v1442
        %v2642 = vunpack.c.h.b16 %v1442
        %v2643 = vunpack.c.l.b16 %v1443
        %v2644 = vunpack.c.h.b16 %v1443
        %v2645 = vunpack.c.l.b16 %v1444
        %v2646 = vunpack.c.h.b16 %v1444
        %v2647 = vunpack.c.l.b16 %v1445
        %v2648 = vunpack.c.h.b16 %v1445
        %v2649 = vunpack.c.l.b16 %v1446
        %v2650 = vunpack.c.h.b16 %v1446
        %v2651 = vunpack.c.l.b16 %v1447
        %v2652 = vunpack.c.h.b16 %v1447
        %v2653 = vunpack.c.l.b16 %v1448
        %v2654 = vunpack.c.h.b16 %v1448
        %v2655 = vunpack.c.l.b16 %v1449
        %v2656 = vunpack.c.h.b16 %v1449
        %v2657 = vunpack.c.l.b16 %v1450
        %v2658 = vunpack.c.h.b16 %v1450
        %v2659 = vunpack.c.l.b16 %v1451
        %v2660 = vunpack.c.h.b16 %v1451
        %v2661 = vunpack.c.l.b16 %v1452
        %v2662 = vunpack.c.h.b16 %v1452
        %v2663 = vunpack.c.l.b16 %v1453
        %v2664 = vunpack.c.h.b16 %v1453
        %v2665 = vunpack.c.l.b16 %v1454
        %v2666 = vunpack.c.h.b16 %v1454
        %v2667 = vunpack.c.l.b16 %v1455
        %v2668 = vunpack.c.h.b16 %v1455
        %v2669 = vunpack.c.l.b16 %v1456
        %v2670 = vunpack.c.h.b16 %v1456
        %v2671 = vunpack.c.l.b16 %v1457
        %v2672 = vunpack.c.h.b16 %v1457
        %v2673 = vunpack.c.l.b16 %v1458
        %v2674 = vunpack.c.h.b16 %v1458
        %v2675 = vunpack.c.l.b16 %v1459
        %v2676 = vunpack.c.h.b16 %v1459
        %v2677 = vunpack.c.l.b16 %v1460
        %v2678 = vunpack.c.h.b16 %v1460
        %v2679 = vunpack.c.l.b16 %v1461
        %v2680 = vunpack.c.h.b16 %v1461
        %v2681 = vunpack.c.l.b16 %v1462
        %v2682 = vunpack.c.h.b16 %v1462
        %v2683 = vunpack.c.l.b16 %v1463
        %v2684 = vunpack.c.h.b16 %v1463
        %v2685 = vunpack.c.l.b16 %v1464
        %v2686 = vunpack.c.h.b16 %v1464
        %v2687 = vunpack.c.l.b16 %v1465
        %v2688 = vunpack.c.h.b16 %v1465
        %v2689 = vunpack.c.l.b16 %v1466
        %v2690 = vunpack.c.h.b16 %v1466
        %v2691 = vunpack.c.l.b16 %v1467
        %v2692 = vunpack.c.h.b16 %v1467
        %v2693 = vunpack.c.l.b16 %v1468
        %v2694 = vunpack.c.h.b16 %v1468
        %v2695 = vunpack.c.l.b16 %v1469
        %v2696 = vunpack.c.h.b16 %v1469
        %v2697 = vunpack.c.l.b16 %v1470
        %v2698 = vunpack.c.h.b16 %v1470
        %v2699 = vunpack.c.l.b16 %v1471
        %v2700 = vunpack.c.h.b16 %v1471
        %v2701 = vunpack.c.l.b16 %v1472
        %v2702 = vunpack.c.h.b16 %v1472
        %v2703 = vunpack.c.l.b16 %v1473
        %v2704 = vunpack.c.h.b16 %v1473
        %v2705 = vunpack.c.l.b16 %v1474
        %v2706 = vunpack.c.h.b16 %v1474
        %v2707 = vunpack.c.l.b16 %v1475
        %v2708 = vunpack.c.h.b16 %v1475
        %v2709 = vunpack.c.l.b16 %v1476
        %v2710 = vunpack.c.h.b16 %v1476
        %v2711 = vunpack.c.l.b16 %v1477
        %v2712 = vunpack.c.h.b16 %v1477
        %v2713 = vunpack.c.l.b16 %v1478
        %v2714 = vunpack.c.h.b16 %v1478
        %v2715 = vunpack.c.l.b16 %v1479
        %v2716 = vunpack.c.h.b16 %v1479
        %v2717 = vunpack.c.l.b16 %v1480
        %v2718 = vunpack.c.h.b16 %v1480
        %v2719 = vunpack.c.l.b16 %v1481
        %v2720 = vunpack.c.h.b16 %v1481
        %v2721 = vunpack.c.l.b16 %v1482
        %v2722 = vunpack.c.h.b16 %v1482
        %v2723 = vunpack.c.l.b16 %v1483
        %v2724 = vunpack.c.h.b16 %v1483
        %v2725 = vunpack.c.l.b16 %v1484
        %v2726 = vunpack.c.h.b16 %v1484
        %v2727 = vunpack.c.l.b16 %v1485
        %v2728 = vunpack.c.h.b16 %v1485
        %v2729 = vunpack.c.l.b16 %v1486
        %v2730 = vunpack.c.h.b16 %v1486
        %v2731 = vunpack.c.l.b16 %v1487
        %v2732 = vunpack.c.h.b16 %v1487
        %v2733 = vunpack.c.l.b16 %v1488
        %v2734 = vunpack.c.h.b16 %v1488
        %v2735 = vunpack.c.l.b16 %v1489
        %v2736 = vunpack.c.h.b16 %v1489
        %v2737 = vunpack.c.l.b16 %v1490
        %v2738 = vunpack.c.h.b16 %v1490
        %v2739 = vunpack.c.l.b16 %v1491
        %v2740 = vunpack.c.h.b16 %v1491
        %v2741 = vunpack.c.l.b16 %v1492
        %v2742 = vunpack.c.h.b16 %v1492
        %v2743 = vunpack.c.l.b16 %v1493
        %v2744 = vunpack.c.h.b16 %v1493
        %v2745 = vunpack.c.l.b16 %v1494
        %v2746 = vunpack.c.h.b16 %v1494
        %v2747 = vunpack.c.l.b16 %v1495
        %v2748 = vunpack.c.h.b16 %v1495
        %v2749 = vunpack.c.l.b16 %v1496
        %v2750 = vunpack.c.h.b16 %v1496
        %v2751 = vunpack.c.l.b16 %v1497
        %v2752 = vunpack.c.h.b16 %v1497
        %v2753 = vunpack.c.l.b16 %v1498
        %v2754 = vunpack.c.h.b16 %v1498
        %v2755 = vunpack.c.l.b16 %v1499
        %v2756 = vunpack.c.h.b16 %v1499
        %v2757 = vunpack.c.l.b16 %v1500
        %v2758 = vunpack.c.h.b16 %v1500
        %v2759 = vunpack.c.l.b16 %v1501
        %v2760 = vunpack.c.h.b16 %v1501
        %v2761 = vunpack.c.l.b16 %v1502
        %v2762 = vunpack.c.h.b16 %v1502
        %v2763 = vunpack.c.l.b16 %v1503
        %v2764 = vunpack.c.h.b16 %v1503
        %v2765 = vunpack.c.l.b16 %v1504
        %v2766 = vunpack.c.h.b16 %v1504
        %v2767 = vunpack.c.l.b16 %v1505
        %v2768 = vunpack.c.h.b16 %v1505
        %v2769 = vunpack.c.l.b16 %v1506
        %v2770 = vunpack.c.h.b16 %v1506
        %v2771 = vunpack.c.l.b16 %v1507
        %v2772 = vunpack.c.h.b16 %v1507
        %v2773 = vunpack.c.l.b16 %v1508
        %v2774 = vunpack.c.h.b16 %v1508
        %v2775 = vunpack.c.l.b16 %v1509
        %v2776 = vunpack.c.h.b16 %v1509
        %v2777 = vunpack.c.l.b16 %v1510
        %v2778 = vunpack.c.h.b16 %v1510
        %v2779 = vunpack.c.l.b16 %v1511
        %v2780 = vunpack.c.h.b16 %v1511
        %v2781 = vunpack.c.l.b16 %v1512
        %v2782 = vunpack.c.h.b16 %v1512
        %v2783 = vunpack.c.l.b16 %v1513
        %v2784 = vunpack.c.h.b16 %v1513
        %v2785 = vunpack.c.l.b16 %v1514
        %v2786 = vunpack.c.h.b16 %v1514
        %v2787 = vunpack.c.l.b16 %v1515
        %v2788 = vunpack.c.h.b16 %v1515
        %v2789 = vunpack.c.l.b16 %v1516
        %v2790 = vunpack.c.h.b16 %v1516
        %v2791 = vunpack.c.l.b16 %v1517
        %v2792 = vunpack.c.h.b16 %v1517
        %v2793 = vunpack.c.l.b16 %v1518
        %v2794 = vunpack.c.h.b16 %v1518
        %v2795 = vunpack.c.l.b16 %v1519
        %v2796 = vunpack.c.h.b16 %v1519
        %v2797 = vunpack.c.l.b16 %v1520
        %v2798 = vunpack.c.h.b16 %v1520
        %v2799 = vunpack.c.l.b16 %v1521
        %v2800 = vunpack.c.h.b16 %v1521
        %v2801 = vunpack.c.l.b16 %v1522
        %v2802 = vunpack.c.h.b16 %v1522
        %v2803 = vunpack.c.l.b16 %v1523
        %v2804 = vunpack.c.h.b16 %v1523
        %v2805 = vunpack.c.l.b16 %v1524
        %v2806 = vunpack.c.h.b16 %v1524
        %v2807 = vunpack.c.l.b16 %v1525
        %v2808 = vunpack.c.h.b16 %v1525
        %v2809 = vunpack.c.l.b16 %v1526
        %v2810 = vunpack.c.h.b16 %v1526
        %v2811 = vunpack.c.l.b16 %v1527
        %v2812 = vunpack.c.h.b16 %v1527
        %v2813 = vunpack.c.l.b16 %v1528
        %v2814 = vunpack.c.h.b16 %v1528
        %v2815 = vunpack.c.l.b16 %v1529
        %v2816 = vunpack.c.h.b16 %v1529
        %v2817 = vunpack.c.l.b16 %v1530
        %v2818 = vunpack.c.h.b16 %v1530
        %v2819 = vunpack.c.l.b16 %v1531
        %v2820 = vunpack.c.h.b16 %v1531
        %v2821 = vunpack.c.l.b16 %v1532
        %v2822 = vunpack.c.h.b16 %v1532
        %v2823 = vunpack.c.l.b16 %v1533
        %v2824 = vunpack.c.h.b16 %v1533
        %v2825 = vunpack.c.l.b16 %v1534
        %v2826 = vunpack.c.h.b16 %v1534
        %v2827 = vunpack.c.l.b16 %v1535
        %v2828 = vunpack.c.h.b16 %v1535
        %v2829 = vunpack.c.l.b16 %v1536
        %v2830 = vunpack.c.h.b16 %v1536
        %v2831 = vunpack.c.l.b16 %v1537
        %v2832 = vunpack.c.h.b16 %v1537
        %v2833 = vunpack.c.l.b16 %v1538
        %v2834 = vunpack.c.h.b16 %v1538
        %v2835 = vunpack.c.l.b16 %v1539
        %v2836 = vunpack.c.h.b16 %v1539
        %v2837 = vunpack.c.l.b16 %v1540
        %v2838 = vunpack.c.h.b16 %v1540
        %v2839 = vunpack.c.l.b16 %v1541
        %v2840 = vunpack.c.h.b16 %v1541
        %v2841 = vunpack.c.l.b16 %v1542
        %v2842 = vunpack.c.h.b16 %v1542
        %v2843 = vunpack.c.l.b16 %v1543
        %v2844 = vunpack.c.h.b16 %v1543
        %v2845 = vunpack.c.l.b16 %v1544
        %v2846 = vunpack.c.h.b16 %v1544
        %v2847 = vunpack.c.l.b16 %v1545
        %v2848 = vunpack.c.h.b16 %v1545
        %v2849 = vunpack.c.l.b16 %v1546
        %v2850 = vunpack.c.h.b16 %v1546
        %v2851 = vunpack.c.l.b16 %v1547
        %v2852 = vunpack.c.h.b16 %v1547
        %v2853 = vunpack.c.l.b16 %v1548
        %v2854 = vunpack.c.h.b16 %v1548
        %v2855 = vunpack.c.l.b16 %v1549
        %v2856 = vunpack.c.h.b16 %v1549
        %v2857 = vunpack.c.l.b16 %v1550
        %v2858 = vunpack.c.h.b16 %v1550
        %v2859 = vunpack.c.l.b16 %v1551
        %v2860 = vunpack.c.h.b16 %v1551
        %v2861 = vunpack.c.l.b16 %v1552
        %v2862 = vunpack.c.h.b16 %v1552
        %v2863 = vunpack.c.l.b16 %v1553
        %v2864 = vunpack.c.h.b16 %v1553
        %v2865 = vunpack.c.l.b16 %v1554
        %v2866 = vunpack.c.h.b16 %v1554
        %v2867 = vunpack.c.l.b16 %v1555
        %v2868 = vunpack.c.h.b16 %v1555
        %v2869 = vunpack.c.l.b16 %v1556
        %v2870 = vunpack.c.h.b16 %v1556
        %v2871 = vunpack.c.l.b16 %v1557
        %v2872 = vunpack.c.h.b16 %v1557
        %v2873 = vunpack.c.l.b16 %v1558
        %v2874 = vunpack.c.h.b16 %v1558
        %v2875 = vunpack.c.l.b16 %v1559
        %v2876 = vunpack.c.h.b16 %v1559
        %v2877 = vunpack.c.l.b16 %v1560
        %v2878 = vunpack.c.h.b16 %v1560
        %v2879 = vunpack.c.l.b16 %v1561
        %v2880 = vunpack.c.h.b16 %v1561
        %v2881 = vunpack.c.l.b16 %v1562
        %v2882 = vunpack.c.h.b16 %v1562
        %v2883 = vunpack.c.l.b16 %v1563
        %v2884 = vunpack.c.h.b16 %v1563
        %v2885 = vunpack.c.l.b16 %v1564
        %v2886 = vunpack.c.h.b16 %v1564
        %v2887 = vunpack.c.l.b16 %v1565
        %v2888 = vunpack.c.h.b16 %v1565
        %v2889 = vunpack.c.l.b16 %v1566
        %v2890 = vunpack.c.h.b16 %v1566
        %v2891 = vunpack.c.l.b16 %v1567
        %v2892 = vunpack.c.h.b16 %v1567
        %v2893 = vunpack.c.l.b16 %v1568
        %v2894 = vunpack.c.h.b16 %v1568
        %v2895 = vunpack.c.l.b16 %v1569
        %v2896 = vunpack.c.h.b16 %v1569
        %v2897 = vunpack.c.l.b16 %v1570
        %v2898 = vunpack.c.h.b16 %v1570
        %v2899 = vunpack.c.l.b16 %v1571
        %v2900 = vunpack.c.h.b16 %v1571
        %v2901 = vunpack.c.l.b16 %v1572
        %v2902 = vunpack.c.h.b16 %v1572
        %v2903 = vunpack.c.l.b16 %v1573
        %v2904 = vunpack.c.h.b16 %v1573
        %v2905 = vunpack.c.l.b16 %v1574
        %v2906 = vunpack.c.h.b16 %v1574
        %v2907 = vunpack.c.l.b16 %v1575
        %v2908 = vunpack.c.h.b16 %v1575
        %v2909 = vunpack.c.l.b16 %v1576
        %v2910 = vunpack.c.h.b16 %v1576
        %v2911 = vunpack.c.l.b16 %v1577
        %v2912 = vunpack.c.h.b16 %v1577
        %v2913 = vunpack.c.l.b16 %v1578
        %v2914 = vunpack.c.h.b16 %v1578
        %v2915 = vunpack.c.l.b16 %v1579
        %v2916 = vunpack.c.h.b16 %v1579
        %v2917 = vunpack.c.l.b16 %v1580
        %v2918 = vunpack.c.h.b16 %v1580
        %v2919 = vunpack.c.l.b16 %v1581
        %v2920 = vunpack.c.h.b16 %v1581
        %v2921 = vunpack.c.l.b16 %v1582
        %v2922 = vunpack.c.h.b16 %v1582
        %v2923 = vunpack.c.l.b16 %v1583
        %v2924 = vunpack.c.h.b16 %v1583
        %v2925 = vunpack.c.l.b16 %v1584
        %v2926 = vunpack.c.h.b16 %v1584
        %v2927 = vunpack.c.l.b16 %v1585
        %v2928 = vunpack.c.h.b16 %v1585
        %v2929 = vunpack.c.l.b16 %v1586
        %v2930 = vunpack.c.h.b16 %v1586
        %v2931 = vunpack.c.l.b16 %v1587
        %v2932 = vunpack.c.h.b16 %v1587
        %v2933 = vunpack.c.l.b16 %v1588
        %v2934 = vunpack.c.h.b16 %v1588
        %v2935 = vunpack.c.l.b16 %v1589
        %v2936 = vunpack.c.h.b16 %v1589
        %v2937 = vunpack.c.l.b16 %v1590
        %v2938 = vunpack.c.h.b16 %v1590
        %v2939 = vunpack.c.l.b16 %v1591
        %v2940 = vunpack.c.h.b16 %v1591
        %v2941 = vunpack.c.l.b16 %v1592
        %v2942 = vunpack.c.h.b16 %v1592
        %v2943 = vunpack.c.l.b16 %v1593
        %v2944 = vunpack.c.h.b16 %v1593
        %v2945 = vunpack.c.l.b16 %v1594
        %v2946 = vunpack.c.h.b16 %v1594
        %v2947 = vunpack.c.l.b16 %v1595
        %v2948 = vunpack.c.h.b16 %v1595
        %v2949 = vunpack.c.l.b16 %v1596
        %v2950 = vunpack.c.h.b16 %v1596
        %v2951 = vunpack.c.l.b16 %v1597
        %v2952 = vunpack.c.h.b16 %v1597
        %v2953 = vunpack.c.l.b16 %v1598
        %v2954 = vunpack.c.h.b16 %v1598
        %v2955 = vunpack.c.l.b16 %v1599
        %v2956 = vunpack.c.h.b16 %v1599
        %v2957 = vunpack.c.l.b16 %v1600
        %v2958 = vunpack.c.h.b16 %v1600
        %v2959 = vunpack.c.l.b16 %v1601
        %v2960 = vunpack.c.h.b16 %v1601
        %v2961 = vunpack.c.l.b16 %v1602
        %v2962 = vunpack.c.h.b16 %v1602
        %v2963 = vunpack.c.l.b16 %v1603
        %v2964 = vunpack.c.h.b16 %v1603
        %v2965 = vunpack.c.l.b16 %v1604
        %v2966 = vunpack.c.h.b16 %v1604
        %v2967 = vunpack.c.l.b16 %v1605
        %v2968 = vunpack.c.h.b16 %v1605
        %v2969 = vunpack.c.l.b16 %v1606
        %v2970 = vunpack.c.h.b16 %v1606
        %v2971 = vunpack.c.l.b16 %v1607
        %v2972 = vunpack.c.h.b16 %v1607
        %v2973 = vunpack.c.l.b16 %v1608
        %v2974 = vunpack.c.h.b16 %v1608
        %v2975 = vunpack.c.l.b16 %v1609
        %v2976 = vunpack.c.h.b16 %v1609
        %v2977 = vunpack.c.l.b16 %v1610
        %v2978 = vunpack.c.h.b16 %v1610
        %v2979 = vunpack.c.l.b16 %v1611
        %v2980 = vunpack.c.h.b16 %v1611
        %v2981 = vunpack.c.l.b16 %v1612
        %v2982 = vunpack.c.h.b16 %v1612
        %v2983 = vunpack.c.l.b16 %v1613
        %v2984 = vunpack.c.h.b16 %v1613
        %v2985 = vunpack.c.l.b16 %v1614
        %v2986 = vunpack.c.h.b16 %v1614
        %v2987 = vunpack.c.l.b16 %v1615
        %v2988 = vunpack.c.h.b16 %v1615
        %v2989 = vunpack.c.l.b16 %v1616
        %v2990 = vunpack.c.h.b16 %v1616
        %v2991 = vunpack.c.l.b16 %v1617
        %v2992 = vunpack.c.h.b16 %v1617
        %v2993 = vunpack.c.l.b16 %v1618
        %v2994 = vunpack.c.h.b16 %v1618
        %v2995 = vunpack.c.l.b16 %v1619
        %v2996 = vunpack.c.h.b16 %v1619
        %v2997 = vunpack.c.l.b16 %v1620
        %v2998 = vunpack.c.h.b16 %v1620
        %v2999 = vunpack.c.l.b16 %v1621
        %v3000 = vunpack.c.h.b16 %v1621
        %v3001 = vunpack.c.l.b16 %v1622
        %v3002 = vunpack.c.h.b16 %v1622
        %v3003 = vunpack.c.l.b16 %v1623
        %v3004 = vunpack.c.h.b16 %v1623
        %v3005 = vunpack.c.l.b16 %v1624
        %v3006 = vunpack.c.h.b16 %v1624
        %v3007 = vunpack.c.l.b16 %v1625
        %v3008 = vunpack.c.h.b16 %v1625
        %v3009 = vunpack.c.l.b16 %v1626
        %v3010 = vunpack.c.h.b16 %v1626
        %v3011 = vunpack.c.l.b16 %v1627
        %v3012 = vunpack.c.h.b16 %v1627
        %v3013 = vunpack.c.l.b16 %v1628
        %v3014 = vunpack.c.h.b16 %v1628
        %v3015 = vunpack.c.l.b16 %v1629
        %v3016 = vunpack.c.h.b16 %v1629
        %v3017 = vunpack.c.l.b16 %v1630
        %v3018 = vunpack.c.h.b16 %v1630
        %v3019 = vunpack.c.l.b16 %v1631
        %v3020 = vunpack.c.h.b16 %v1631
        %v3021 = vunpack.c.l.b16 %v1632
        %v3022 = vunpack.c.h.b16 %v1632
        %v3023 = vunpack.c.l.b16 %v1633
        %v3024 = vunpack.c.h.b16 %v1633
        %v3025 = vunpack.c.l.b16 %v1634
        %v3026 = vunpack.c.h.b16 %v1634
        %v3027 = vunpack.c.l.b16 %v1635
        %v3028 = vunpack.c.h.b16 %v1635
        %v3029 = vunpack.c.l.b16 %v1636
        %v3030 = vunpack.c.h.b16 %v1636
        %v3031 = vunpack.c.l.b16 %v1637
        %v3032 = vunpack.c.h.b16 %v1637
        %v3033 = vunpack.c.l.b16 %v1638
        %v3034 = vunpack.c.h.b16 %v1638
        %v3035 = vunpack.c.l.b16 %v1639
        %v3036 = vunpack.c.h.b16 %v1639
        %v3037 = vunpack.c.l.b16 %v1640
        %v3038 = vunpack.c.h.b16 %v1640
        %v3039 = vunpack.c.l.b16 %v1641
        %v3040 = vunpack.c.h.b16 %v1641
        %v3041 = vunpack.c.l.b16 %v1642
        %v3042 = vunpack.c.h.b16 %v1642
        %v3043 = vunpack.c.l.b16 %v1643
        %v3044 = vunpack.c.h.b16 %v1643
        %v3045 = vunpack.c.l.b16 %v1644
        %v3046 = vunpack.c.h.b16 %v1644
        %v3047 = vunpack.c.l.b16 %v1645
        %v3048 = vunpack.c.h.b16 %v1645
        %v3049 = vunpack.c.l.b16 %v1646
        %v3050 = vunpack.c.h.b16 %v1646
        %v3051 = vunpack.c.l.b16 %v1647
        %v3052 = vunpack.c.h.b16 %v1647
        %v3053 = vunpack.c.l.b16 %v1648
        %v3054 = vunpack.c.h.b16 %v1648
        %v3055 = vunpack.c.l.b16 %v1649
        %v3056 = vunpack.c.h.b16 %v1649
        %v3057 = vunpack.c.l.b16 %v1650
        %v3058 = vunpack.c.h.b16 %v1650
        %v3059 = vpack.c.b16 %v2549, %v2547
        %v3060 = vpack.c.b16 %v2550, %v2548
        %v3061 = vpack.c.b16 %v2553, %v2551
        %v3062 = vpack.c.b16 %v2554, %v2552
        %v3063 = vpack.c.b16 %v2557, %v2555
        %v3064 = vpack.c.b16 %v2558, %v2556
        %v3065 = vpack.c.b16 %v2561, %v2559
        %v3066 = vpack.c.b16 %v2562, %v2560
        %v3067 = vpack.c.b16 %v2565, %v2563
        %v3068 = vpack.c.b16 %v2566, %v2564
        %v3069 = vpack.c.b16 %v2569, %v2567
        %v3070 = vpack.c.b16 %v2570, %v2568
        %v3071 = vpack.c.b16 %v2573, %v2571
        %v3072 = vpack.c.b16 %v2574, %v2572
        %v3073 = vpack.c.b16 %v2577, %v2575
        %v3074 = vpack.c.b16 %v2578, %v2576
        %v3075 = vpack.c.b16 %v2581, %v2579
        %v3076 = vpack.c.b16 %v2582, %v2580
        %v3077 = vpack.c.b16 %v2585, %v2583
        %v3078 = vpack.c.b16 %v2586, %v2584
        %v3079 = vpack.c.b16 %v2589, %v2587
        %v3080 = vpack.c.b16 %v2590, %v2588
        %v3081 = vpack.c.b16 %v2593, %v2591
        %v3082 = vpack.c.b16 %v2594, %v2592
        %v3083 = vpack.c.b16 %v2597, %v2595
        %v3084 = vpack.c.b16 %v2598, %v2596
        %v3085 = vpack.c.b16 %v2601, %v2599
        %v3086 = vpack.c.b16 %v2602, %v2600
        %v3087 = vpack.c.b16 %v2605, %v2603
        %v3088 = vpack.c.b16 %v2606, %v2604
        %v3089 = vpack.c.b16 %v2609, %v2607
        %v3090 = vpack.c.b16 %v2610, %v2608
        %v3091 = vpack.c.b16 %v2613, %v2611
        %v3092 = vpack.c.b16 %v2614, %v2612
        %v3093 = vpack.c.b16 %v2617, %v2615
        %v3094 = vpack.c.b16 %v2618, %v2616
        %v3095 = vpack.c.b16 %v2621, %v2619
        %v3096 = vpack.c.b16 %v2622, %v2620
        %v3097 = vpack.c.b16 %v2625, %v2623
        %v3098 = vpack.c.b16 %v2626, %v2624
        %v3099 = vpack.c.b16 %v2629, %v2627
        %v3100 = vpack.c.b16 %v2630, %v2628
        %v3101 = vpack.c.b16 %v2633, %v2631
        %v3102 = vpack.c.b16 %v2634, %v2632
        %v3103 = vpack.c.b16 %v2637, %v2635
        %v3104 = vpack.c.b16 %v2638, %v2636
        %v3105 = vpack.c.b16 %v2641, %v2639
        %v3106 = vpack.c.b16 %v2642, %v2640
        %v3107 = vpack.c.b16 %v2645, %v2643
        %v3108 = vpack.c.b16 %v2646, %v2644
        %v3109 = vpack.c.b16 %v2649, %v2647
        %v3110 = vpack.c.b16 %v2650, %v2648
        %v3111 = vpack.c.b16 %v2653, %v2651
        %v3112 = vpack.c.b16 %v2654, %v2652
        %v3113 = vpack.c.b16 %v2657, %v2655
        %v3114 = vpack.c.b16 %v2658, %v2656
        %v3115 = vpack.c.b16 %v2661, %v2659
        %v3116 = vpack.c.b16 %v2662, %v2660
        %v3117 = vpack.c.b16 %v2665, %v2663
        %v3118 = vpack.c.b16 %v2666, %v2664
        %v3119 = vpack.c.b16 %v2669, %v2667
        %v3120 = vpack.c.b16 %v2670, %v2668
        %v3121 = vpack.c.b16 %v2673, %v2671
        %v3122 = vpack.c.b16 %v2674, %v2672
        %v3123 = vpack.c.b16 %v2677, %v2675
        %v3124 = vpack.c.b16 %v2678, %v2676
        %v3125 = vpack.c.b16 %v2681, %v2679
        %v3126 = vpack.c.b16 %v2682, %v2680
        %v3127 = vpack.c.b16 %v2685, %v2683
        %v3128 = vpack.c.b16 %v2686, %v2684
        %v3129 = vpack.c.b16 %v2689, %v2687
        %v3130 = vpack.c.b16 %v2690, %v2688
        %v3131 = vpack.c.b16 %v2693, %v2691
        %v3132 = vpack.c.b16 %v2694, %v2692
        %v3133 = vpack.c.b16 %v2697, %v2695
        %v3134 = vpack.c.b16 %v2698, %v2696
        %v3135 = vpack.c.b16 %v2701, %v2699
        %v3136 = vpack.c.b16 %v2702, %v2700
        %v3137 = vpack.c.b16 %v2705, %v2703
        %v3138 = vpack.c.b16 %v2706, %v2704
        %v3139 = vpack.c.b16 %v2709, %v2707
        %v3140 = vpack.c.b16 %v2710, %v2708
        %v3141 = vpack.c.b16 %v2713, %v2711
        %v3142 = vpack.c.b16 %v2714, %v2712
        %v3143 = vpack.c.b16 %v2717, %v2715
        %v3144 = vpack.c.b16 %v2718, %v2716
        %v3145 = vpack.c.b16 %v2721, %v2719
        %v3146 = vpack.c.b16 %v2722, %v2720
        %v3147 = vpack.c.b16 %v2725, %v2723
        %v3148 = vpack.c.b16 %v2726, %v2724
        %v3149 = vpack.c.b16 %v2729, %v2727
        %v3150 = vpack.c.b16 %v2730, %v2728
        %v3151 = vpack.c.b16 %v2733, %v2731
        %v3152 = vpack.c.b16 %v2734, %v2732
        %v3153 = vpack.c.b16 %v2737, %v2735
        %v3154 = vpack.c.b16 %v2738, %v2736
        %v3155 = vpack.c.b16 %v2741, %v2739
        %v3156 = vpack.c.b16 %v2742, %v2740
        %v3157 = vpack.c.b16 %v2745, %v2743
        %v3158 = vpack.c.b16 %v2746, %v2744
        %v3159 = vpack.c.b16 %v2749, %v2747
        %v3160 = vpack.c.b16 %v2750, %v2748
        %v3161 = vpack.c.b16 %v2753, %v2751
        %v3162 = vpack.c.b16 %v2754, %v2752
        %v3163 = vpack.c.b16 %v2757, %v2755
        %v3164 = vpack.c.b16 %v2758, %v2756
        %v3165 = vpack.c.b16 %v2761, %v2759
        %v3166 = vpack.c.b16 %v2762, %v2760
        %v3167 = vpack.c.b16 %v2765, %v2763
        %v3168 = vpack.c.b16 %v2766, %v2764
        %v3169 = vpack.c.b16 %v2769, %v2767
        %v3170 = vpack.c.b16 %v2770, %v2768
        %v3171 = vpack.c.b16 %v2773, %v2771
        %v3172 = vpack.c.b16 %v2774, %v2772
        %v3173 = vpack.c.b16 %v2777, %v2775
        %v3174 = vpack.c.b16 %v2778, %v2776
        %v3175 = vpack.c.b16 %v2781, %v2779
        %v3176 = vpack.c.b16 %v2782, %v2780
        %v3177 = vpack.c.b16 %v2785, %v2783
        %v3178 = vpack.c.b16 %v2786, %v2784
        %v3179 = vpack.c.b16 %v2789, %v2787
        %v3180 = vpack.c.b16 %v2790, %v2788
        %v3181 = vpack.c.b16 %v2793, %v2791
        %v3182 = vpack.c.b16 %v2794, %v2792
        %v3183 = vpack.c.b16 %v2797, %v2795
        %v3184 = vpack.c.b16 %v2798, %v2796
        %v3185 = vpack.c.b16 %v2801, %v2799
        %v3186 = vpack.c.b16 %v2802, %v2800
        %v3187 = vpack.c.b16 %v2805, %v2803
        %v3188 = vpack.c.b16 %v2806, %v2804
        %v3189 = vpack.c.b16 %v2809, %v2807
        %v3190 = vpack.c.b16 %v2810, %v2808
        %v3191 = vpack.c.b16 %v2813, %v2811
        %v3192 = vpack.c.b16 %v2814, %v2812
        %v3193 = vpack.c.b16 %v2817, %v2815
        %v3194 = vpack.c.b16 %v2818, %v2816
        %v3195 = vpack.c.b16 %v2821, %v2819
        %v3196 = vpack.c.b16 %v2822, %v2820
        %v3197 = vpack.c.b16 %v2825, %v2823
        %v3198 = vpack.c.b16 %v2826, %v2824
        %v3199 = vpack.c.b16 %v2829, %v2827
        %v3200 = vpack.c.b16 %v2830, %v2828
        %v3201 = vpack.c.b16 %v2833, %v2831
        %v3202 = vpack.c.b16 %v2834, %v2832
        %v3203 = vpack.c.b16 %v2837, %v2835
        %v3204 = vpack.c.b16 %v2838, %v2836
        %v3205 = vpack.c.b16 %v2841, %v2839
        %v3206 = vpack.c.b16 %v2842, %v2840
        %v3207 = vpack.c.b16 %v2845, %v2843
        %v3208 = vpack.c.b16 %v2846, %v2844
        %v3209 = vpack.c.b16 %v2849, %v2847
        %v3210 = vpack.c.b16 %v2850, %v2848
        %v3211 = vpack.c.b16 %v2853, %v2851
        %v3212 = vpack.c.b16 %v2854, %v2852
        %v3213 = vpack.c.b16 %v2857, %v2855
        %v3214 = vpack.c.b16 %v2858, %v2856
        %v3215 = vpack.c.b16 %v2861, %v2859
        %v3216 = vpack.c.b16 %v2862, %v2860
        %v3217 = vpack.c.b16 %v2865, %v2863
        %v3218 = vpack.c.b16 %v2866, %v2864
        %v3219 = vpack.c.b16 %v2869, %v2867
        %v3220 = vpack.c.b16 %v2870, %v2868
        %v3221 = vpack.c.b16 %v2873, %v2871
        %v3222 = vpack.c.b16 %v2874, %v2872
        %v3223 = vpack.c.b16 %v2877, %v2875
        %v3224 = vpack.c.b16 %v2878, %v2876
        %v3225 = vpack.c.b16 %v2881, %v2879
        %v3226 = vpack.c.b16 %v2882, %v2880
        %v3227 = vpack.c.b16 %v2885, %v2883
        %v3228 = vpack.c.b16 %v2886, %v2884
        %v3229 = vpack.c.b16 %v2889, %v2887
        %v3230 = vpack.c.b16 %v2890, %v2888
        %v3231 = vpack.c.b16 %v2893, %v2891
        %v3232 = vpack.c.b16 %v2894, %v2892
        %v3233 = vpack.c.b16 %v2897, %v2895
        %v3234 = vpack.c.b16 %v2898, %v2896
        %v3235 = vpack.c.b16 %v2901, %v2899
        %v3236 = vpack.c.b16 %v2902, %v2900
        %v3237 = vpack.c.b16 %v2905, %v2903
        %v3238 = vpack.c.b16 %v2906, %v2904
        %v3239 = vpack.c.b16 %v2909, %v2907
        %v3240 = vpack.c.b16 %v2910, %v2908
        %v3241 = vpack.c.b16 %v2913, %v2911
        %v3242 = vpack.c.b16 %v2914, %v2912
        %v3243 = vpack.c.b16 %v2917, %v2915
        %v3244 = vpack.c.b16 %v2918, %v2916
        %v3245 = vpack.c.b16 %v2921, %v2919
        %v3246 = vpack.c.b16 %v2922, %v2920
        %v3247 = vpack.c.b16 %v2925, %v2923
        %v3248 = vpack.c.b16 %v2926, %v2924
        %v3249 = vpack.c.b16 %v2929, %v2927
        %v3250 = vpack.c.b16 %v2930, %v2928
        %v3251 = vpack.c.b16 %v2933, %v2931
        %v3252 = vpack.c.b16 %v2934, %v2932
        %v3253 = vpack.c.b16 %v2937, %v2935
        %v3254 = vpack.c.b16 %v2938, %v2936
        %v3255 = vpack.c.b16 %v2941, %v2939
        %v3256 = vpack.c.b16 %v2942, %v2940
        %v3257 = vpack.c.b16 %v2945, %v2943
        %v3258 = vpack.c.b16 %v2946, %v2944
        %v3259 = vpack.c.b16 %v2949, %v2947
        %v3260 = vpack.c.b16 %v2950, %v2948
        %v3261 = vpack.c.b16 %v2953, %v2951
        %v3262 = vpack.c.b16 %v2954, %v2952
        %v3263 = vpack.c.b16 %v2957, %v2955
        %v3264 = vpack.c.b16 %v2958, %v2956
        %v3265 = vpack.c.b16 %v2961, %v2959
        %v3266 = vpack.c.b16 %v2962, %v2960
        %v3267 = vpack.c.b16 %v2965, %v2963
        %v3268 = vpack.c.b16 %v2966, %v2964
        %v3269 = vpack.c.b16 %v2969, %v2967
        %v3270 = vpack.c.b16 %v2970, %v2968
        %v3271 = vpack.c.b16 %v2973, %v2971
        %v3272 = vpack.c.b16 %v2974, %v2972
        %v3273 = vpack.c.b16 %v2977, %v2975
        %v3274 = vpack.c.b16 %v2978, %v2976
        %v3275 = vpack.c.b16 %v2981, %v2979
        %v3276 = vpack.c.b16 %v2982, %v2980
        %v3277 = vpack.c.b16 %v2985, %v2983
        %v3278 = vpack.c.b16 %v2986, %v2984
        %v3279 = vpack.c.b16 %v2989, %v2987
        %v3280 = vpack.c.b16 %v2990, %v2988
        %v3281 = vpack.c.b16 %v2993, %v2991
        %v3282 = vpack.c.b16 %v2994, %v2992
        %v3283 = vpack.c.b16 %v2997, %v2995
        %v3284 = vpack.c.b16 %v2998, %v2996
        %v3285 = vpack.c.b16 %v3001, %v2999
        %v3286 = vpack.c.b16 %v3002, %v3000
        %v3287 = vpack.c.b16 %v3005, %v3003
        %v3288 = vpack.c.b16 %v3006, %v3004
        %v3289 = vpack.c.b16 %v3009, %v3007
        %v3290 = vpack.c.b16 %v3010, %v3008
        %v3291 = vpack.c.b16 %v3013, %v3011
        %v3292 = vpack.c.b16 %v3014, %v3012
        %v3293 = vpack.c.b16 %v3017, %v3015
        %v3294 = vpack.c.b16 %v3018, %v3016
        %v3295 = vpack.c.b16 %v3021, %v3019
        %v3296 = vpack.c.b16 %v3022, %v3020
        %v3297 = vpack.c.b16 %v3025, %v3023
        %v3298 = vpack.c.b16 %v3026, %v3024
        %v3299 = vpack.c.b16 %v3029, %v3027
        %v3300 = vpack.c.b16 %v3030, %v3028
        %v3301 = vpack.c.b16 %v3033, %v3031
        %v3302 = vpack.c.b16 %v3034, %v3032
        %v3303 = vpack.c.b16 %v3037, %v3035
        %v3304 = vpack.c.b16 %v3038, %v3036
        %v3305 = vpack.c.b16 %v3041, %v3039
        %v3306 = vpack.c.b16 %v3042, %v3040
        %v3307 = vpack.c.b16 %v3045, %v3043
        %v3308 = vpack.c.b16 %v3046, %v3044
        %v3309 = vpack.c.b16 %v3049, %v3047
        %v3310 = vpack.c.b16 %v3050, %v3048
        %v3311 = vpack.c.b16 %v3053, %v3051
        %v3312 = vpack.c.b16 %v3054, %v3052
        %v3313 = vpack.c.b16 %v3057, %v3055
        %v3314 = vpack.c.b16 %v3058, %v3056
        %3571 = vmatprep.subr.bf16.mxu0 %v3060
        %3572 = vmatpush1.bf16.msra.mxu0 %v3059
        %3573 = vmatprep.subr.bf16.mxu0 %v3062
        %3574 = vmatpush1.bf16.msra.mxu0 %v3061
        %3575 = vmatprep.subr.bf16.mxu0 %v3064
        %3576 = vmatpush1.bf16.msra.mxu0 %v3063
        %3577 = vmatprep.subr.bf16.mxu0 %v3066
        %3578 = vmatpush1.bf16.msra.mxu0 %v3065
        %3579 = vmatprep.subr.bf16.mxu0 %v3068
        %3580 = vmatpush1.bf16.msra.mxu0 %v3067
        %3581 = vmatprep.subr.bf16.mxu0 %v3070
        %3582 = vmatpush1.bf16.msra.mxu0 %v3069
        %3583 = vmatprep.subr.bf16.mxu0 %v3072
        %3584 = vmatpush1.bf16.msra.mxu0 %v3071
        %3585 = vmatprep.subr.bf16.mxu0 %v3074
        %3586 = vmatpush1.bf16.msra.mxu0 %v3073
        %3587 = vmatprep.subr.bf16.mxu0 %v3076
        %3588 = vmatpush1.bf16.msra.mxu0 %v3075
        %3589 = vmatprep.subr.bf16.mxu0 %v3078
        %3590 = vmatpush1.bf16.msra.mxu0 %v3077
        %3591 = vmatprep.subr.bf16.mxu0 %v3080
        %3592 = vmatpush1.bf16.msra.mxu0 %v3079
        %3593 = vmatprep.subr.bf16.mxu0 %v3082
        %3594 = vmatpush1.bf16.msra.mxu0 %v3081
        %3595 = vmatprep.subr.bf16.mxu0 %v3084
        %3596 = vmatpush1.bf16.msra.mxu0 %v3083
        %3597 = vmatprep.subr.bf16.mxu0 %v3086
        %3598 = vmatpush1.bf16.msra.mxu0 %v3085
        %3599 = vmatprep.subr.bf16.mxu0 %v3088
        %3600 = vmatpush1.bf16.msra.mxu0 %v3087
        %3601 = vmatprep.subr.bf16.mxu0 %v3090
        %3602 = vmatpush1.bf16.msra.mxu0 %v3089
        %3603 = vmatprep.mubr.bf16.mxu0 %v2036
        %3604 = vmatmul.mubr.bf16.gmra.mrb[0].mxu0 %v2035
        %v3605 = vpop.f32.mrb[0].mxu0
        %v3606 = vadd.f32 0.0, %v3605
        %v3607 = vpop.f32.mrb[0].mxu0
        %v3608 = vadd.f32 0.0, %v3607
        %v3609 = vpop.f32.mrb[0].mxu0
        %v3610 = vadd.f32 0.0, %v3609
        %v3611 = vpop.f32.mrb[0].mxu0
        %v3612 = vadd.f32 0.0, %v3611
        %3613 = vmatprep.mubr.bf16.mxu0 %v2052
        %3614 = vmatmul.mubr.bf16.gmra.mrb[0].mxu0 %v2051
        %v3615 = vpop.f32.mrb[0].mxu0
        %v3616 = vadd.f32 0.0, %v3615
        %v3617 = vpop.f32.mrb[0].mxu0
        %v3618 = vadd.f32 0.0, %v3617
        %v3619 = vpop.f32.mrb[0].mxu0
        %v3620 = vadd.f32 0.0, %v3619
        %v3621 = vpop.f32.mrb[0].mxu0
        %v3622 = vadd.f32 0.0, %v3621
        %3623 = vmatprep.mubr.bf16.mxu0 %v2068
        %3624 = vmatmul.mubr.bf16.gmra.mrb[0].mxu0 %v2067
        %v3625 = vpop.f32.mrb[0].mxu0
        %v3626 = vadd.f32 0.0, %v3625
        %v3627 = vpop.f32.mrb[0].mxu0
        %v3628 = vadd.f32 0.0, %v3627
        %v3629 = vpop.f32.mrb[0].mxu0
        %v3630 = vadd.f32 0.0, %v3629
        %v3631 = vpop.f32.mrb[0].mxu0
        %v3632 = vadd.f32 0.0, %v3631
        %3633 = vmatprep.mubr.bf16.mxu0 %v2084
        %3634 = vmatmul.mubr.bf16.gmra.mrb[0].mxu0 %v2083
        %v3635 = vpop.f32.mrb[0].mxu0
        %v3636 = vadd.f32 0.0, %v3635
        %v3637 = vpop.f32.mrb[0].mxu0
        %v3638 = vadd.f32 0.0, %v3637
        %v3639 = vpop.f32.mrb[0].mxu0
        %v3640 = vadd.f32 0.0, %v3639
        %v3641 = vpop.f32.mrb[0].mxu0
        %v3642 = vadd.f32 0.0, %v3641
        %3643 = vmatprep.mubr.bf16.mxu0 %v2100
        %3644 = vmatmul.mubr.bf16.gmra.mrb[0].mxu0 %v2099
        %v3645 = vpop.f32.mrb[0].mxu0
        %v3646 = vadd.f32 0.0, %v3645
        %v3647 = vpop.f32.mrb[0].mxu0
        %v3648 = vadd.f32 0.0, %v3647
        %v3649 = vpop.f32.mrb[0].mxu0
        %v3650 = vadd.f32 0.0, %v3649
        %v3651 = vpop.f32.mrb[0].mxu0
        %v3652 = vadd.f32 0.0, %v3651
        %3653 = vmatprep.mubr.bf16.mxu0 %v2116
        %3654 = vmatmul.mubr.bf16.gmra.mrb[0].mxu0 %v2115
        %v3655 = vpop.f32.mrb[0].mxu0
        %v3656 = vadd.f32 0.0, %v3655
        %v3657 = vpop.f32.mrb[0].mxu0
        %v3658 = vadd.f32 0.0, %v3657
        %v3659 = vpop.f32.mrb[0].mxu0
        %v3660 = vadd.f32 0.0, %v3659
        %v3661 = vpop.f32.mrb[0].mxu0
        %v3662 = vadd.f32 0.0, %v3661
        %3663 = vmatprep.mubr.bf16.mxu0 %v2132
        %3664 = vmatmul.mubr.bf16.gmra.mrb[0].mxu0 %v2131
        %v3665 = vpop.f32.mrb[0].mxu0
        %v3666 = vadd.f32 0.0, %v3665
        %v3667 = vpop.f32.mrb[0].mxu0
        %v3668 = vadd.f32 0.0, %v3667
        %v3669 = vpop.f32.mrb[0].mxu0
        %v3670 = vadd.f32 0.0, %v3669
        %v3671 = vpop.f32.mrb[0].mxu0
        %v3672 = vadd.f32 0.0, %v3671
        %3673 = vmatprep.mubr.bf16.mxu0 %v2148
        %3674 = vmatmul.mubr.bf16.gmra.mrb[0].mxu0 %v2147
        %v3675 = vpop.f32.mrb[0].mxu0
        %v3676 = vadd.f32 0.0, %v3675
        %v3677 = vpop.f32.mrb[0].mxu0
        %v3678 = vadd.f32 0.0, %v3677
        %v3679 = vpop.f32.mrb[0].mxu0
        %v3680 = vadd.f32 0.0, %v3679
        %v3681 = vpop.f32.mrb[0].mxu0
        %v3682 = vadd.f32 0.0, %v3681
        %3683 = vdwg.mxu0
        %3684 = vmatprep.subr.bf16.mxu0 %v3092
        %3685 = vmatpush1.bf16.msra.mxu0 %v3091
        %3686 = vmatprep.subr.bf16.mxu0 %v3094
        %3687 = vmatpush1.bf16.msra.mxu0 %v3093
        %3688 = vmatprep.subr.bf16.mxu0 %v3096
        %3689 = vmatpush1.bf16.msra.mxu0 %v3095
        %3690 = vmatprep.subr.bf16.mxu0 %v3098
        %3691 = vmatpush1.bf16.msra.mxu0 %v3097
        %3692 = vmatprep.subr.bf16.mxu0 %v3100
        %3693 = vmatpush1.bf16.msra.mxu0 %v3099
        %3694 = vmatprep.subr.bf16.mxu0 %v3102
        %3695 = vmatpush1.bf16.msra.mxu0 %v3101
        %3696 = vmatprep.subr.bf16.mxu0 %v3104
        %3697 = vmatpush1.bf16.msra.mxu0 %v3103
        %3698 = vmatprep.subr.bf16.mxu0 %v3106
        %3699 = vmatpush1.bf16.msra.mxu0 %v3105
        %3700 = vmatprep.subr.bf16.mxu0 %v3108
        %3701 = vmatpush1.bf16.msra.mxu0 %v3107
        %3702 = vmatprep.subr.bf16.mxu0 %v3110
        %3703 = vmatpush1.bf16.msra.mxu0 %v3109
        %3704 = vmatprep.subr.bf16.mxu0 %v3112
        %3705 = vmatpush1.bf16.msra.mxu0 %v3111
        %3706 = vmatprep.subr.bf16.mxu0 %v3114
        %3707 = vmatpush1.bf16.msra.mxu0 %v3113
        %3708 = vmatprep.subr.bf16.mxu0 %v3116
        %3709 = vmatpush1.bf16.msra.mxu0 %v3115
        %3710 = vmatprep.subr.bf16.mxu0 %v3118
        %3711 = vmatpush1.bf16.msra.mxu0 %v3117
        %3712 = vmatprep.subr.bf16.mxu0 %v3120
        %3713 = vmatpush1.bf16.msra.mxu0 %v3119
        %3714 = vmatprep.subr.bf16.mxu0 %v3122
        %3715 = vmatpush1.bf16.msra.mxu0 %v3121
        %3716 = vmatprep.mubr.bf16.mxu0 %v2038
        %3717 = vmatmul.mubr.bf16.gmra.mrb[0].mxu0 %v2037
        %v3718 = vpop.f32.mrb[0].mxu0
        %v3719 = vadd.f32 %v3606, %v3718
        %v3720 = vpop.f32.mrb[0].mxu0
        %v3721 = vadd.f32 %v3608, %v3720
        %v3722 = vpop.f32.mrb[0].mxu0
        %v3723 = vadd.f32 %v3610, %v3722
        %v3724 = vpop.f32.mrb[0].mxu0
        %v3725 = vadd.f32 %v3612, %v3724
        %3726 = vmatprep.mubr.bf16.mxu0 %v2054
        %3727 = vmatmul.mubr.bf16.gmra.mrb[0].mxu0 %v2053
        %v3728 = vpop.f32.mrb[0].mxu0
        %v3729 = vadd.f32 %v3616, %v3728
        %v3730 = vpop.f32.mrb[0].mxu0
        %v3731 = vadd.f32 %v3618, %v3730
        %v3732 = vpop.f32.mrb[0].mxu0
        %v3733 = vadd.f32 %v3620, %v3732
        %v3734 = vpop.f32.mrb[0].mxu0
        %v3735 = vadd.f32 %v3622, %v3734
        %3736 = vmatprep.mubr.bf16.mxu0 %v2070
        %3737 = vmatmul.mubr.bf16.gmra.mrb[0].mxu0 %v2069
        %v3738 = vpop.f32.mrb[0].mxu0
        %v3739 = vadd.f32 %v3626, %v3738
        %v3740 = vpop.f32.mrb[0].mxu0
        %v3741 = vadd.f32 %v3628, %v3740
        %v3742 = vpop.f32.mrb[0].mxu0
        %v3743 = vadd.f32 %v3630, %v3742
        %v3744 = vpop.f32.mrb[0].mxu0
        %v3745 = vadd.f32 %v3632, %v3744
        %3746 = vmatprep.mubr.bf16.mxu0 %v2086
        %3747 = vmatmul.mubr.bf16.gmra.mrb[0].mxu0 %v2085
        %v3748 = vpop.f32.mrb[0].mxu0
        %v3749 = vadd.f32 %v3636, %v3748
        %v3750 = vpop.f32.mrb[0].mxu0
        %v3751 = vadd.f32 %v3638, %v3750
        %v3752 = vpop.f32.mrb[0].mxu0
        %v3753 = vadd.f32 %v3640, %v3752
        %v3754 = vpop.f32.mrb[0].mxu0
        %v3755 = vadd.f32 %v3642, %v3754
        %3756 = vmatprep.mubr.bf16.mxu0 %v2102
        %3757 = vmatmul.mubr.bf16.gmra.mrb[0].mxu0 %v2101
        %v3758 = vpop.f32.mrb[0].mxu0
        %v3759 = vadd.f32 %v3646, %v3758
        %v3760 = vpop.f32.mrb[0].mxu0
        %v3761 = vadd.f32 %v3648, %v3760
        %v3762 = vpop.f32.mrb[0].mxu0
        %v3763 = vadd.f32 %v3650, %v3762
        %v3764 = vpop.f32.mrb[0].mxu0
        %v3765 = vadd.f32 %v3652, %v3764
        %3766 = vmatprep.mubr.bf16.mxu0 %v2118
        %3767 = vmatmul.mubr.bf16.gmra.mrb[0].mxu0 %v2117
        %v3768 = vpop.f32.mrb[0].mxu0
        %v3769 = vadd.f32 %v3656, %v3768
        %v3770 = vpop.f32.mrb[0].mxu0
        %v3771 = vadd.f32 %v3658, %v3770
        %v3772 = vpop.f32.mrb[0].mxu0
        %v3773 = vadd.f32 %v3660, %v3772
        %v3774 = vpop.f32.mrb[0].mxu0
        %v3775 = vadd.f32 %v3662, %v3774
        %3776 = vmatprep.mubr.bf16.mxu0 %v2134
        %3777 = vmatmul.mubr.bf16.gmra.mrb[0].mxu0 %v2133
        %v3778 = vpop.f32.mrb[0].mxu0
        %v3779 = vadd.f32 %v3666, %v3778
        %v3780 = vpop.f32.mrb[0].mxu0
        %v3781 = vadd.f32 %v3668, %v3780
        %v3782 = vpop.f32.mrb[0].mxu0
        %v3783 = vadd.f32 %v3670, %v3782
        %v3784 = vpop.f32.mrb[0].mxu0
        %v3785 = vadd.f32 %v3672, %v3784
        %3786 = vmatprep.mubr.bf16.mxu0 %v2150
        %3787 = vmatmul.mubr.bf16.gmra.mrb[0].mxu0 %v2149
        %v3788 = vpop.f32.mrb[0].mxu0
        %v3789 = vadd.f32 %v3676, %v3788
        %v3790 = vpop.f32.mrb[0].mxu0
        %v3791 = vadd.f32 %v3678, %v3790
        %v3792 = vpop.f32.mrb[0].mxu0
        %v3793 = vadd.f32 %v3680, %v3792
        %v3794 = vpop.f32.mrb[0].mxu0
        %v3795 = vadd.f32 %v3682, %v3794
        %3796 = vdwg.mxu0
        %3797 = vmatprep.subr.bf16.mxu0 %v3124
        %3798 = vmatpush1.bf16.msra.mxu0 %v3123
        %3799 = vmatprep.subr.bf16.mxu0 %v3126
        %3800 = vmatpush1.bf16.msra.mxu0 %v3125
        %3801 = vmatprep.subr.bf16.mxu0 %v3128
        %3802 = vmatpush1.bf16.msra.mxu0 %v3127
        %3803 = vmatprep.subr.bf16.mxu0 %v3130
        %3804 = vmatpush1.bf16.msra.mxu0 %v3129
        %3805 = vmatprep.subr.bf16.mxu0 %v3132
        %3806 = vmatpush1.bf16.msra.mxu0 %v3131
        %3807 = vmatprep.subr.bf16.mxu0 %v3134
        %3808 = vmatpush1.bf16.msra.mxu0 %v3133
        %3809 = vmatprep.subr.bf16.mxu0 %v3136
        %3810 = vmatpush1.bf16.msra.mxu0 %v3135
        %3811 = vmatprep.subr.bf16.mxu0 %v3138
        %3812 = vmatpush1.bf16.msra.mxu0 %v3137
        %3813 = vmatprep.subr.bf16.mxu0 %v3140
        %3814 = vmatpush1.bf16.msra.mxu0 %v3139
        %3815 = vmatprep.subr.bf16.mxu0 %v3142
        %3816 = vmatpush1.bf16.msra.mxu0 %v3141
        %3817 = vmatprep.subr.bf16.mxu0 %v3144
        %3818 = vmatpush1.bf16.msra.mxu0 %v3143
        %3819 = vmatprep.subr.bf16.mxu0 %v3146
        %3820 = vmatpush1.bf16.msra.mxu0 %v3145
        %3821 = vmatprep.subr.bf16.mxu0 %v3148
        %3822 = vmatpush1.bf16.msra.mxu0 %v3147
        %3823 = vmatprep.subr.bf16.mxu0 %v3150
        %3824 = vmatpush1.bf16.msra.mxu0 %v3149
        %3825 = vmatprep.subr.bf16.mxu0 %v3152
        %3826 = vmatpush1.bf16.msra.mxu0 %v3151
        %3827 = vmatprep.subr.bf16.mxu0 %v3154
        %3828 = vmatpush1.bf16.msra.mxu0 %v3153
        %3829 = vmatprep.mubr.bf16.mxu0 %v2040
        %3830 = vmatmul.mubr.bf16.gmra.mrb[0].mxu0 %v2039
        %v3831 = vpop.f32.mrb[0].mxu0
        %v3832 = vadd.f32 %v3719, %v3831
        %v3833 = vpop.f32.mrb[0].mxu0
        %v3834 = vadd.f32 %v3721, %v3833
        %v3835 = vpop.f32.mrb[0].mxu0
        %v3836 = vadd.f32 %v3723, %v3835
        %v3837 = vpop.f32.mrb[0].mxu0
        %v3838 = vadd.f32 %v3725, %v3837
        %3839 = vmatprep.mubr.bf16.mxu0 %v2056
        %3840 = vmatmul.mubr.bf16.gmra.mrb[0].mxu0 %v2055
        %v3841 = vpop.f32.mrb[0].mxu0
        %v3842 = vadd.f32 %v3729, %v3841
        %v3843 = vpop.f32.mrb[0].mxu0
        %v3844 = vadd.f32 %v3731, %v3843
        %v3845 = vpop.f32.mrb[0].mxu0
        %v3846 = vadd.f32 %v3733, %v3845
        %v3847 = vpop.f32.mrb[0].mxu0
        %v3848 = vadd.f32 %v3735, %v3847
        %3849 = vmatprep.mubr.bf16.mxu0 %v2072
        %3850 = vmatmul.mubr.bf16.gmra.mrb[0].mxu0 %v2071
        %v3851 = vpop.f32.mrb[0].mxu0
        %v3852 = vadd.f32 %v3739, %v3851
        %v3853 = vpop.f32.mrb[0].mxu0
        %v3854 = vadd.f32 %v3741, %v3853
        %v3855 = vpop.f32.mrb[0].mxu0
        %v3856 = vadd.f32 %v3743, %v3855
        %v3857 = vpop.f32.mrb[0].mxu0
        %v3858 = vadd.f32 %v3745, %v3857
        %3859 = vmatprep.mubr.bf16.mxu0 %v2088
        %3860 = vmatmul.mubr.bf16.gmra.mrb[0].mxu0 %v2087
        %v3861 = vpop.f32.mrb[0].mxu0
        %v3862 = vadd.f32 %v3749, %v3861
        %v3863 = vpop.f32.mrb[0].mxu0
        %v3864 = vadd.f32 %v3751, %v3863
        %v3865 = vpop.f32.mrb[0].mxu0
        %v3866 = vadd.f32 %v3753, %v3865
        %v3867 = vpop.f32.mrb[0].mxu0
        %v3868 = vadd.f32 %v3755, %v3867
        %3869 = vmatprep.mubr.bf16.mxu0 %v2104
        %3870 = vmatmul.mubr.bf16.gmra.mrb[0].mxu0 %v2103
        %v3871 = vpop.f32.mrb[0].mxu0
        %v3872 = vadd.f32 %v3759, %v3871
        %v3873 = vpop.f32.mrb[0].mxu0
        %v3874 = vadd.f32 %v3761, %v3873
        %v3875 = vpop.f32.mrb[0].mxu0
        %v3876 = vadd.f32 %v3763, %v3875
        %v3877 = vpop.f32.mrb[0].mxu0
        %v3878 = vadd.f32 %v3765, %v3877
        %3879 = vmatprep.mubr.bf16.mxu0 %v2120
        %3880 = vmatmul.mubr.bf16.gmra.mrb[0].mxu0 %v2119
        %v3881 = vpop.f32.mrb[0].mxu0
        %v3882 = vadd.f32 %v3769, %v3881
        %v3883 = vpop.f32.mrb[0].mxu0
        %v3884 = vadd.f32 %v3771, %v3883
        %v3885 = vpop.f32.mrb[0].mxu0
        %v3886 = vadd.f32 %v3773, %v3885
        %v3887 = vpop.f32.mrb[0].mxu0
        %v3888 = vadd.f32 %v3775, %v3887
        %3889 = vmatprep.mubr.bf16.mxu0 %v2136
        %3890 = vmatmul.mubr.bf16.gmra.mrb[0].mxu0 %v2135
        %v3891 = vpop.f32.mrb[0].mxu0
        %v3892 = vadd.f32 %v3779, %v3891
        %v3893 = vpop.f32.mrb[0].mxu0
        %v3894 = vadd.f32 %v3781, %v3893
        %v3895 = vpop.f32.mrb[0].mxu0
        %v3896 = vadd.f32 %v3783, %v3895
        %v3897 = vpop.f32.mrb[0].mxu0
        %v3898 = vadd.f32 %v3785, %v3897
        %3899 = vmatprep.mubr.bf16.mxu0 %v2152
        %3900 = vmatmul.mubr.bf16.gmra.mrb[0].mxu0 %v2151
        %v3901 = vpop.f32.mrb[0].mxu0
        %v3902 = vadd.f32 %v3789, %v3901
        %v3903 = vpop.f32.mrb[0].mxu0
        %v3904 = vadd.f32 %v3791, %v3903
        %v3905 = vpop.f32.mrb[0].mxu0
        %v3906 = vadd.f32 %v3793, %v3905
        %v3907 = vpop.f32.mrb[0].mxu0
        %v3908 = vadd.f32 %v3795, %v3907
        %3909 = vdwg.mxu0
        %3910 = vmatprep.subr.bf16.mxu0 %v3156
        %3911 = vmatpush1.bf16.msra.mxu0 %v3155
        %3912 = vmatprep.subr.bf16.mxu0 %v3158
        %3913 = vmatpush1.bf16.msra.mxu0 %v3157
        %3914 = vmatprep.subr.bf16.mxu0 %v3160
        %3915 = vmatpush1.bf16.msra.mxu0 %v3159
        %3916 = vmatprep.subr.bf16.mxu0 %v3162
        %3917 = vmatpush1.bf16.msra.mxu0 %v3161
        %3918 = vmatprep.subr.bf16.mxu0 %v3164
        %3919 = vmatpush1.bf16.msra.mxu0 %v3163
        %3920 = vmatprep.subr.bf16.mxu0 %v3166
        %3921 = vmatpush1.bf16.msra.mxu0 %v3165
        %3922 = vmatprep.subr.bf16.mxu0 %v3168
        %3923 = vmatpush1.bf16.msra.mxu0 %v3167
        %3924 = vmatprep.subr.bf16.mxu0 %v3170
        %3925 = vmatpush1.bf16.msra.mxu0 %v3169
        %3926 = vmatprep.subr.bf16.mxu0 %v3172
        %3927 = vmatpush1.bf16.msra.mxu0 %v3171
        %3928 = vmatprep.subr.bf16.mxu0 %v3174
        %3929 = vmatpush1.bf16.msra.mxu0 %v3173
        %3930 = vmatprep.subr.bf16.mxu0 %v3176
        %3931 = vmatpush1.bf16.msra.mxu0 %v3175
        %3932 = vmatprep.subr.bf16.mxu0 %v3178
        %3933 = vmatpush1.bf16.msra.mxu0 %v3177
        %3934 = vmatprep.subr.bf16.mxu0 %v3180
        %3935 = vmatpush1.bf16.msra.mxu0 %v3179
        %3936 = vmatprep.subr.bf16.mxu0 %v3182
        %3937 = vmatpush1.bf16.msra.mxu0 %v3181
        %3938 = vmatprep.subr.bf16.mxu0 %v3184
        %3939 = vmatpush1.bf16.msra.mxu0 %v3183
        %3940 = vmatprep.subr.bf16.mxu0 %v3186
        %3941 = vmatpush1.bf16.msra.mxu0 %v3185
        %3942 = vmatprep.mubr.bf16.mxu0 %v2042
        %3943 = vmatmul.mubr.bf16.gmra.mrb[0].mxu0 %v2041
        %v3944 = vpop.f32.mrb[0].mxu0
        %v3945 = vadd.f32 %v3832, %v3944
        %v3946 = vpop.f32.mrb[0].mxu0
        %v3947 = vadd.f32 %v3834, %v3946
        %v3948 = vpop.f32.mrb[0].mxu0
        %v3949 = vadd.f32 %v3836, %v3948
        %v3950 = vpop.f32.mrb[0].mxu0
        %v3951 = vadd.f32 %v3838, %v3950
        %3952 = vmatprep.mubr.bf16.mxu0 %v2058
        %3953 = vmatmul.mubr.bf16.gmra.mrb[0].mxu0 %v2057
        %v3954 = vpop.f32.mrb[0].mxu0
        %v3955 = vadd.f32 %v3842, %v3954
        %v3956 = vpop.f32.mrb[0].mxu0
        %v3957 = vadd.f32 %v3844, %v3956
        %v3958 = vpop.f32.mrb[0].mxu0
        %v3959 = vadd.f32 %v3846, %v3958
        %v3960 = vpop.f32.mrb[0].mxu0
        %v3961 = vadd.f32 %v3848, %v3960
        %3962 = vmatprep.mubr.bf16.mxu0 %v2074
        %3963 = vmatmul.mubr.bf16.gmra.mrb[0].mxu0 %v2073
        %v3964 = vpop.f32.mrb[0].mxu0
        %v3965 = vadd.f32 %v3852, %v3964
        %v3966 = vpop.f32.mrb[0].mxu0
        %v3967 = vadd.f32 %v3854, %v3966
        %v3968 = vpop.f32.mrb[0].mxu0
        %v3969 = vadd.f32 %v3856, %v3968
        %v3970 = vpop.f32.mrb[0].mxu0
        %v3971 = vadd.f32 %v3858, %v3970
        %3972 = vmatprep.mubr.bf16.mxu0 %v2090
        %3973 = vmatmul.mubr.bf16.gmra.mrb[0].mxu0 %v2089
        %v3974 = vpop.f32.mrb[0].mxu0
        %v3975 = vadd.f32 %v3862, %v3974
        %v3976 = vpop.f32.mrb[0].mxu0
        %v3977 = vadd.f32 %v3864, %v3976
        %v3978 = vpop.f32.mrb[0].mxu0
        %v3979 = vadd.f32 %v3866, %v3978
        %v3980 = vpop.f32.mrb[0].mxu0
        %v3981 = vadd.f32 %v3868, %v3980
        %3982 = vmatprep.mubr.bf16.mxu0 %v2106
        %3983 = vmatmul.mubr.bf16.gmra.mrb[0].mxu0 %v2105
        %v3984 = vpop.f32.mrb[0].mxu0
        %v3985 = vadd.f32 %v3872, %v3984
        %v3986 = vpop.f32.mrb[0].mxu0
        %v3987 = vadd.f32 %v3874, %v3986
        %v3988 = vpop.f32.mrb[0].mxu0
        %v3989 = vadd.f32 %v3876, %v3988
        %v3990 = vpop.f32.mrb[0].mxu0
        %v3991 = vadd.f32 %v3878, %v3990
        %3992 = vmatprep.mubr.bf16.mxu0 %v2122
        %3993 = vmatmul.mubr.bf16.gmra.mrb[0].mxu0 %v2121
        %v3994 = vpop.f32.mrb[0].mxu0
        %v3995 = vadd.f32 %v3882, %v3994
        %v3996 = vpop.f32.mrb[0].mxu0
        %v3997 = vadd.f32 %v3884, %v3996
        %v3998 = vpop.f32.mrb[0].mxu0
        %v3999 = vadd.f32 %v3886, %v3998
        %v4000 = vpop.f32.mrb[0].mxu0
        %v4001 = vadd.f32 %v3888, %v4000
        %4002 = vmatprep.mubr.bf16.mxu0 %v2138
        %4003 = vmatmul.mubr.bf16.gmra.mrb[0].mxu0 %v2137
        %v4004 = vpop.f32.mrb[0].mxu0
        %v4005 = vadd.f32 %v3892, %v4004
        %v4006 = vpop.f32.mrb[0].mxu0
        %v4007 = vadd.f32 %v3894, %v4006
        %v4008 = vpop.f32.mrb[0].mxu0
        %v4009 = vadd.f32 %v3896, %v4008
        %v4010 = vpop.f32.mrb[0].mxu0
        %v4011 = vadd.f32 %v3898, %v4010
        %4012 = vmatprep.mubr.bf16.mxu0 %v2154
        %4013 = vmatmul.mubr.bf16.gmra.mrb[0].mxu0 %v2153
        %v4014 = vpop.f32.mrb[0].mxu0
        %v4015 = vadd.f32 %v3902, %v4014
        %v4016 = vpop.f32.mrb[0].mxu0
        %v4017 = vadd.f32 %v3904, %v4016
        %v4018 = vpop.f32.mrb[0].mxu0
        %v4019 = vadd.f32 %v3906, %v4018
        %v4020 = vpop.f32.mrb[0].mxu0
        %v4021 = vadd.f32 %v3908, %v4020
        %4022 = vdwg.mxu0
        %4023 = vmatprep.subr.bf16.mxu0 %v3188
        %4024 = vmatpush1.bf16.msra.mxu0 %v3187
        %4025 = vmatprep.subr.bf16.mxu0 %v3190
        %4026 = vmatpush1.bf16.msra.mxu0 %v3189
        %4027 = vmatprep.subr.bf16.mxu0 %v3192
        %4028 = vmatpush1.bf16.msra.mxu0 %v3191
        %4029 = vmatprep.subr.bf16.mxu0 %v3194
        %4030 = vmatpush1.bf16.msra.mxu0 %v3193
        %4031 = vmatprep.subr.bf16.mxu0 %v3196
        %4032 = vmatpush1.bf16.msra.mxu0 %v3195
        %4033 = vmatprep.subr.bf16.mxu0 %v3198
        %4034 = vmatpush1.bf16.msra.mxu0 %v3197
        %4035 = vmatprep.subr.bf16.mxu0 %v3200
        %4036 = vmatpush1.bf16.msra.mxu0 %v3199
        %4037 = vmatprep.subr.bf16.mxu0 %v3202
        %4038 = vmatpush1.bf16.msra.mxu0 %v3201
        %4039 = vmatprep.subr.bf16.mxu0 %v3204
        %4040 = vmatpush1.bf16.msra.mxu0 %v3203
        %4041 = vmatprep.subr.bf16.mxu0 %v3206
        %4042 = vmatpush1.bf16.msra.mxu0 %v3205
        %4043 = vmatprep.subr.bf16.mxu0 %v3208
        %4044 = vmatpush1.bf16.msra.mxu0 %v3207
        %4045 = vmatprep.subr.bf16.mxu0 %v3210
        %4046 = vmatpush1.bf16.msra.mxu0 %v3209
        %4047 = vmatprep.subr.bf16.mxu0 %v3212
        %4048 = vmatpush1.bf16.msra.mxu0 %v3211
        %4049 = vmatprep.subr.bf16.mxu0 %v3214
        %4050 = vmatpush1.bf16.msra.mxu0 %v3213
        %4051 = vmatprep.subr.bf16.mxu0 %v3216
        %4052 = vmatpush1.bf16.msra.mxu0 %v3215
        %4053 = vmatprep.subr.bf16.mxu0 %v3218
        %4054 = vmatpush1.bf16.msra.mxu0 %v3217
        %4055 = vmatprep.mubr.bf16.mxu0 %v2044
        %4056 = vmatmul.mubr.bf16.gmra.mrb[0].mxu0 %v2043
        %v4057 = vpop.f32.mrb[0].mxu0
        %v4058 = vadd.f32 %v3945, %v4057
        %v4059 = vpop.f32.mrb[0].mxu0
        %v4060 = vadd.f32 %v3947, %v4059
        %v4061 = vpop.f32.mrb[0].mxu0
        %v4062 = vadd.f32 %v3949, %v4061
        %v4063 = vpop.f32.mrb[0].mxu0
        %v4064 = vadd.f32 %v3951, %v4063
        %4065 = vmatprep.mubr.bf16.mxu0 %v2060
        %4066 = vmatmul.mubr.bf16.gmra.mrb[0].mxu0 %v2059
        %v4067 = vpop.f32.mrb[0].mxu0
        %v4068 = vadd.f32 %v3955, %v4067
        %v4069 = vpop.f32.mrb[0].mxu0
        %v4070 = vadd.f32 %v3957, %v4069
        %v4071 = vpop.f32.mrb[0].mxu0
        %v4072 = vadd.f32 %v3959, %v4071
        %v4073 = vpop.f32.mrb[0].mxu0
        %v4074 = vadd.f32 %v3961, %v4073
        %4075 = vmatprep.mubr.bf16.mxu0 %v2076
        %4076 = vmatmul.mubr.bf16.gmra.mrb[0].mxu0 %v2075
        %v4077 = vpop.f32.mrb[0].mxu0
        %v4078 = vadd.f32 %v3965, %v4077
        %v4079 = vpop.f32.mrb[0].mxu0
        %v4080 = vadd.f32 %v3967, %v4079
        %v4081 = vpop.f32.mrb[0].mxu0
        %v4082 = vadd.f32 %v3969, %v4081
        %v4083 = vpop.f32.mrb[0].mxu0
        %v4084 = vadd.f32 %v3971, %v4083
        %4085 = vmatprep.mubr.bf16.mxu0 %v2092
        %4086 = vmatmul.mubr.bf16.gmra.mrb[0].mxu0 %v2091
        %v4087 = vpop.f32.mrb[0].mxu0
        %v4088 = vadd.f32 %v3975, %v4087
        %v4089 = vpop.f32.mrb[0].mxu0
        %v4090 = vadd.f32 %v3977, %v4089
        %v4091 = vpop.f32.mrb[0].mxu0
        %v4092 = vadd.f32 %v3979, %v4091
        %v4093 = vpop.f32.mrb[0].mxu0
        %v4094 = vadd.f32 %v3981, %v4093
        %4095 = vmatprep.mubr.bf16.mxu0 %v2108
        %4096 = vmatmul.mubr.bf16.gmra.mrb[0].mxu0 %v2107
        %v4097 = vpop.f32.mrb[0].mxu0
        %v4098 = vadd.f32 %v3985, %v4097
        %v4099 = vpop.f32.mrb[0].mxu0
        %v4100 = vadd.f32 %v3987, %v4099
        %v4101 = vpop.f32.mrb[0].mxu0
        %v4102 = vadd.f32 %v3989, %v4101
        %v4103 = vpop.f32.mrb[0].mxu0
        %v4104 = vadd.f32 %v3991, %v4103
        %4105 = vmatprep.mubr.bf16.mxu0 %v2124
        %4106 = vmatmul.mubr.bf16.gmra.mrb[0].mxu0 %v2123
        %v4107 = vpop.f32.mrb[0].mxu0
        %v4108 = vadd.f32 %v3995, %v4107
        %v4109 = vpop.f32.mrb[0].mxu0
        %v4110 = vadd.f32 %v3997, %v4109
        %v4111 = vpop.f32.mrb[0].mxu0
        %v4112 = vadd.f32 %v3999, %v4111
        %v4113 = vpop.f32.mrb[0].mxu0
        %v4114 = vadd.f32 %v4001, %v4113
        %4115 = vmatprep.mubr.bf16.mxu0 %v2140
        %4116 = vmatmul.mubr.bf16.gmra.mrb[0].mxu0 %v2139
        %v4117 = vpop.f32.mrb[0].mxu0
        %v4118 = vadd.f32 %v4005, %v4117
        %v4119 = vpop.f32.mrb[0].mxu0
        %v4120 = vadd.f32 %v4007, %v4119
        %v4121 = vpop.f32.mrb[0].mxu0
        %v4122 = vadd.f32 %v4009, %v4121
        %v4123 = vpop.f32.mrb[0].mxu0
        %v4124 = vadd.f32 %v4011, %v4123
        %4125 = vmatprep.mubr.bf16.mxu0 %v2156
        %4126 = vmatmul.mubr.bf16.gmra.mrb[0].mxu0 %v2155
        %v4127 = vpop.f32.mrb[0].mxu0
        %v4128 = vadd.f32 %v4015, %v4127
        %v4129 = vpop.f32.mrb[0].mxu0
        %v4130 = vadd.f32 %v4017, %v4129
        %v4131 = vpop.f32.mrb[0].mxu0
        %v4132 = vadd.f32 %v4019, %v4131
        %v4133 = vpop.f32.mrb[0].mxu0
        %v4134 = vadd.f32 %v4021, %v4133
        %4135 = vdwg.mxu0
        %4136 = vmatprep.subr.bf16.mxu0 %v3220
        %4137 = vmatpush1.bf16.msra.mxu0 %v3219
        %4138 = vmatprep.subr.bf16.mxu0 %v3222
        %4139 = vmatpush1.bf16.msra.mxu0 %v3221
        %4140 = vmatprep.subr.bf16.mxu0 %v3224
        %4141 = vmatpush1.bf16.msra.mxu0 %v3223
        %4142 = vmatprep.subr.bf16.mxu0 %v3226
        %4143 = vmatpush1.bf16.msra.mxu0 %v3225
        %4144 = vmatprep.subr.bf16.mxu0 %v3228
        %4145 = vmatpush1.bf16.msra.mxu0 %v3227
        %4146 = vmatprep.subr.bf16.mxu0 %v3230
        %4147 = vmatpush1.bf16.msra.mxu0 %v3229
        %4148 = vmatprep.subr.bf16.mxu0 %v3232
        %4149 = vmatpush1.bf16.msra.mxu0 %v3231
        %4150 = vmatprep.subr.bf16.mxu0 %v3234
        %4151 = vmatpush1.bf16.msra.mxu0 %v3233
        %4152 = vmatprep.subr.bf16.mxu0 %v3236
        %4153 = vmatpush1.bf16.msra.mxu0 %v3235
        %4154 = vmatprep.subr.bf16.mxu0 %v3238
        %4155 = vmatpush1.bf16.msra.mxu0 %v3237
        %4156 = vmatprep.subr.bf16.mxu0 %v3240
        %4157 = vmatpush1.bf16.msra.mxu0 %v3239
        %4158 = vmatprep.subr.bf16.mxu0 %v3242
        %4159 = vmatpush1.bf16.msra.mxu0 %v3241
        %4160 = vmatprep.subr.bf16.mxu0 %v3244
        %4161 = vmatpush1.bf16.msra.mxu0 %v3243
        %4162 = vmatprep.subr.bf16.mxu0 %v3246
        %4163 = vmatpush1.bf16.msra.mxu0 %v3245
        %4164 = vmatprep.subr.bf16.mxu0 %v3248
        %4165 = vmatpush1.bf16.msra.mxu0 %v3247
        %4166 = vmatprep.subr.bf16.mxu0 %v3250
        %4167 = vmatpush1.bf16.msra.mxu0 %v3249
        %4168 = vmatprep.mubr.bf16.mxu0 %v2046
        %4169 = vmatmul.mubr.bf16.gmra.mrb[0].mxu0 %v2045
        %v4170 = vpop.f32.mrb[0].mxu0
        %v4171 = vadd.f32 %v4058, %v4170
        %v4172 = vpop.f32.mrb[0].mxu0
        %v4173 = vadd.f32 %v4060, %v4172
        %v4174 = vpop.f32.mrb[0].mxu0
        %v4175 = vadd.f32 %v4062, %v4174
        %v4176 = vpop.f32.mrb[0].mxu0
        %v4177 = vadd.f32 %v4064, %v4176
        %4178 = vmatprep.mubr.bf16.mxu0 %v2062
        %4179 = vmatmul.mubr.bf16.gmra.mrb[0].mxu0 %v2061
        %v4180 = vpop.f32.mrb[0].mxu0
        %v4181 = vadd.f32 %v4068, %v4180
        %v4182 = vpop.f32.mrb[0].mxu0
        %v4183 = vadd.f32 %v4070, %v4182
        %v4184 = vpop.f32.mrb[0].mxu0
        %v4185 = vadd.f32 %v4072, %v4184
        %v4186 = vpop.f32.mrb[0].mxu0
        %v4187 = vadd.f32 %v4074, %v4186
        %4188 = vmatprep.mubr.bf16.mxu0 %v2078
        %4189 = vmatmul.mubr.bf16.gmra.mrb[0].mxu0 %v2077
        %v4190 = vpop.f32.mrb[0].mxu0
        %v4191 = vadd.f32 %v4078, %v4190
        %v4192 = vpop.f32.mrb[0].mxu0
        %v4193 = vadd.f32 %v4080, %v4192
        %v4194 = vpop.f32.mrb[0].mxu0
        %v4195 = vadd.f32 %v4082, %v4194
        %v4196 = vpop.f32.mrb[0].mxu0
        %v4197 = vadd.f32 %v4084, %v4196
        %4198 = vmatprep.mubr.bf16.mxu0 %v2094
        %4199 = vmatmul.mubr.bf16.gmra.mrb[0].mxu0 %v2093
        %v4200 = vpop.f32.mrb[0].mxu0
        %v4201 = vadd.f32 %v4088, %v4200
        %v4202 = vpop.f32.mrb[0].mxu0
        %v4203 = vadd.f32 %v4090, %v4202
        %v4204 = vpop.f32.mrb[0].mxu0
        %v4205 = vadd.f32 %v4092, %v4204
        %v4206 = vpop.f32.mrb[0].mxu0
        %v4207 = vadd.f32 %v4094, %v4206
        %4208 = vmatprep.mubr.bf16.mxu0 %v2110
        %4209 = vmatmul.mubr.bf16.gmra.mrb[0].mxu0 %v2109
        %v4210 = vpop.f32.mrb[0].mxu0
        %v4211 = vadd.f32 %v4098, %v4210
        %v4212 = vpop.f32.mrb[0].mxu0
        %v4213 = vadd.f32 %v4100, %v4212
        %v4214 = vpop.f32.mrb[0].mxu0
        %v4215 = vadd.f32 %v4102, %v4214
        %v4216 = vpop.f32.mrb[0].mxu0
        %v4217 = vadd.f32 %v4104, %v4216
        %4218 = vmatprep.mubr.bf16.mxu0 %v2126
        %4219 = vmatmul.mubr.bf16.gmra.mrb[0].mxu0 %v2125
        %v4220 = vpop.f32.mrb[0].mxu0
        %v4221 = vadd.f32 %v4108, %v4220
        %v4222 = vpop.f32.mrb[0].mxu0
        %v4223 = vadd.f32 %v4110, %v4222
        %v4224 = vpop.f32.mrb[0].mxu0
        %v4225 = vadd.f32 %v4112, %v4224
        %v4226 = vpop.f32.mrb[0].mxu0
        %v4227 = vadd.f32 %v4114, %v4226
        %4228 = vmatprep.mubr.bf16.mxu0 %v2142
        %4229 = vmatmul.mubr.bf16.gmra.mrb[0].mxu0 %v2141
        %v4230 = vpop.f32.mrb[0].mxu0
        %v4231 = vadd.f32 %v4118, %v4230
        %v4232 = vpop.f32.mrb[0].mxu0
        %v4233 = vadd.f32 %v4120, %v4232
        %v4234 = vpop.f32.mrb[0].mxu0
        %v4235 = vadd.f32 %v4122, %v4234
        %v4236 = vpop.f32.mrb[0].mxu0
        %v4237 = vadd.f32 %v4124, %v4236
        %4238 = vmatprep.mubr.bf16.mxu0 %v2158
        %4239 = vmatmul.mubr.bf16.gmra.mrb[0].mxu0 %v2157
        %v4240 = vpop.f32.mrb[0].mxu0
        %v4241 = vadd.f32 %v4128, %v4240
        %v4242 = vpop.f32.mrb[0].mxu0
        %v4243 = vadd.f32 %v4130, %v4242
        %v4244 = vpop.f32.mrb[0].mxu0
        %v4245 = vadd.f32 %v4132, %v4244
        %v4246 = vpop.f32.mrb[0].mxu0
        %v4247 = vadd.f32 %v4134, %v4246
        %4248 = vdwg.mxu0
        %4249 = vmatprep.subr.bf16.mxu0 %v3252
        %4250 = vmatpush1.bf16.msra.mxu0 %v3251
        %4251 = vmatprep.subr.bf16.mxu0 %v3254
        %4252 = vmatpush1.bf16.msra.mxu0 %v3253
        %4253 = vmatprep.subr.bf16.mxu0 %v3256
        %4254 = vmatpush1.bf16.msra.mxu0 %v3255
        %4255 = vmatprep.subr.bf16.mxu0 %v3258
        %4256 = vmatpush1.bf16.msra.mxu0 %v3257
        %4257 = vmatprep.subr.bf16.mxu0 %v3260
        %4258 = vmatpush1.bf16.msra.mxu0 %v3259
        %4259 = vmatprep.subr.bf16.mxu0 %v3262
        %4260 = vmatpush1.bf16.msra.mxu0 %v3261
        %4261 = vmatprep.subr.bf16.mxu0 %v3264
        %4262 = vmatpush1.bf16.msra.mxu0 %v3263
        %4263 = vmatprep.subr.bf16.mxu0 %v3266
        %4264 = vmatpush1.bf16.msra.mxu0 %v3265
        %4265 = vmatprep.subr.bf16.mxu0 %v3268
        %4266 = vmatpush1.bf16.msra.mxu0 %v3267
        %4267 = vmatprep.subr.bf16.mxu0 %v3270
        %4268 = vmatpush1.bf16.msra.mxu0 %v3269
        %4269 = vmatprep.subr.bf16.mxu0 %v3272
        %4270 = vmatpush1.bf16.msra.mxu0 %v3271
        %4271 = vmatprep.subr.bf16.mxu0 %v3274
        %4272 = vmatpush1.bf16.msra.mxu0 %v3273
        %4273 = vmatprep.subr.bf16.mxu0 %v3276
        %4274 = vmatpush1.bf16.msra.mxu0 %v3275
        %4275 = vmatprep.subr.bf16.mxu0 %v3278
        %4276 = vmatpush1.bf16.msra.mxu0 %v3277
        %4277 = vmatprep.subr.bf16.mxu0 %v3280
        %4278 = vmatpush1.bf16.msra.mxu0 %v3279
        %4279 = vmatprep.subr.bf16.mxu0 %v3282
        %4280 = vmatpush1.bf16.msra.mxu0 %v3281
        %4281 = vmatprep.mubr.bf16.mxu0 %v2048
        %4282 = vmatmul.mubr.bf16.gmra.mrb[0].mxu0 %v2047
        %v4283 = vpop.f32.mrb[0].mxu0
        %v4284 = vadd.f32 %v4171, %v4283
        %v4285 = vpop.f32.mrb[0].mxu0
        %v4286 = vadd.f32 %v4173, %v4285
        %v4287 = vpop.f32.mrb[0].mxu0
        %v4288 = vadd.f32 %v4175, %v4287
        %v4289 = vpop.f32.mrb[0].mxu0
        %v4290 = vadd.f32 %v4177, %v4289
        %4291 = vmatprep.mubr.bf16.mxu0 %v2064
        %4292 = vmatmul.mubr.bf16.gmra.mrb[0].mxu0 %v2063
        %v4293 = vpop.f32.mrb[0].mxu0
        %v4294 = vadd.f32 %v4181, %v4293
        %v4295 = vpop.f32.mrb[0].mxu0
        %v4296 = vadd.f32 %v4183, %v4295
        %v4297 = vpop.f32.mrb[0].mxu0
        %v4298 = vadd.f32 %v4185, %v4297
        %v4299 = vpop.f32.mrb[0].mxu0
        %v4300 = vadd.f32 %v4187, %v4299
        %4301 = vmatprep.mubr.bf16.mxu0 %v2080
        %4302 = vmatmul.mubr.bf16.gmra.mrb[0].mxu0 %v2079
        %v4303 = vpop.f32.mrb[0].mxu0
        %v4304 = vadd.f32 %v4191, %v4303
        %v4305 = vpop.f32.mrb[0].mxu0
        %v4306 = vadd.f32 %v4193, %v4305
        %v4307 = vpop.f32.mrb[0].mxu0
        %v4308 = vadd.f32 %v4195, %v4307
        %v4309 = vpop.f32.mrb[0].mxu0
        %v4310 = vadd.f32 %v4197, %v4309
        %4311 = vmatprep.mubr.bf16.mxu0 %v2096
        %4312 = vmatmul.mubr.bf16.gmra.mrb[0].mxu0 %v2095
        %v4313 = vpop.f32.mrb[0].mxu0
        %v4314 = vadd.f32 %v4201, %v4313
        %v4315 = vpop.f32.mrb[0].mxu0
        %v4316 = vadd.f32 %v4203, %v4315
        %v4317 = vpop.f32.mrb[0].mxu0
        %v4318 = vadd.f32 %v4205, %v4317
        %v4319 = vpop.f32.mrb[0].mxu0
        %v4320 = vadd.f32 %v4207, %v4319
        %4321 = vmatprep.mubr.bf16.mxu0 %v2112
        %4322 = vmatmul.mubr.bf16.gmra.mrb[0].mxu0 %v2111
        %v4323 = vpop.f32.mrb[0].mxu0
        %v4324 = vadd.f32 %v4211, %v4323
        %v4325 = vpop.f32.mrb[0].mxu0
        %v4326 = vadd.f32 %v4213, %v4325
        %v4327 = vpop.f32.mrb[0].mxu0
        %v4328 = vadd.f32 %v4215, %v4327
        %v4329 = vpop.f32.mrb[0].mxu0
        %v4330 = vadd.f32 %v4217, %v4329
        %4331 = vmatprep.mubr.bf16.mxu0 %v2128
        %4332 = vmatmul.mubr.bf16.gmra.mrb[0].mxu0 %v2127
        %v4333 = vpop.f32.mrb[0].mxu0
        %v4334 = vadd.f32 %v4221, %v4333
        %v4335 = vpop.f32.mrb[0].mxu0
        %v4336 = vadd.f32 %v4223, %v4335
        %v4337 = vpop.f32.mrb[0].mxu0
        %v4338 = vadd.f32 %v4225, %v4337
        %v4339 = vpop.f32.mrb[0].mxu0
        %v4340 = vadd.f32 %v4227, %v4339
        %4341 = vmatprep.mubr.bf16.mxu0 %v2144
        %4342 = vmatmul.mubr.bf16.gmra.mrb[0].mxu0 %v2143
        %v4343 = vpop.f32.mrb[0].mxu0
        %v4344 = vadd.f32 %v4231, %v4343
        %v4345 = vpop.f32.mrb[0].mxu0
        %v4346 = vadd.f32 %v4233, %v4345
        %v4347 = vpop.f32.mrb[0].mxu0
        %v4348 = vadd.f32 %v4235, %v4347
        %v4349 = vpop.f32.mrb[0].mxu0
        %v4350 = vadd.f32 %v4237, %v4349
        %4351 = vmatprep.mubr.bf16.mxu0 %v2160
        %4352 = vmatmul.mubr.bf16.gmra.mrb[0].mxu0 %v2159
        %v4353 = vpop.f32.mrb[0].mxu0
        %v4354 = vadd.f32 %v4241, %v4353
        %v4355 = vpop.f32.mrb[0].mxu0
        %v4356 = vadd.f32 %v4243, %v4355
        %v4357 = vpop.f32.mrb[0].mxu0
        %v4358 = vadd.f32 %v4245, %v4357
        %v4359 = vpop.f32.mrb[0].mxu0
        %v4360 = vadd.f32 %v4247, %v4359
        %4361 = vdwg.mxu0
        %4362 = vmatprep.subr.bf16.mxu0 %v3284
        %4363 = vmatpush1.bf16.msra.mxu0 %v3283
        %4364 = vmatprep.subr.bf16.mxu0 %v3286
        %4365 = vmatpush1.bf16.msra.mxu0 %v3285
        %4366 = vmatprep.subr.bf16.mxu0 %v3288
        %4367 = vmatpush1.bf16.msra.mxu0 %v3287
        %4368 = vmatprep.subr.bf16.mxu0 %v3290
        %4369 = vmatpush1.bf16.msra.mxu0 %v3289
        %4370 = vmatprep.subr.bf16.mxu0 %v3292
        %4371 = vmatpush1.bf16.msra.mxu0 %v3291
        %4372 = vmatprep.subr.bf16.mxu0 %v3294
        %4373 = vmatpush1.bf16.msra.mxu0 %v3293
        %4374 = vmatprep.subr.bf16.mxu0 %v3296
        %4375 = vmatpush1.bf16.msra.mxu0 %v3295
        %4376 = vmatprep.subr.bf16.mxu0 %v3298
        %4377 = vmatpush1.bf16.msra.mxu0 %v3297
        %4378 = vmatprep.subr.bf16.mxu0 %v3300
        %4379 = vmatpush1.bf16.msra.mxu0 %v3299
        %4380 = vmatprep.subr.bf16.mxu0 %v3302
        %4381 = vmatpush1.bf16.msra.mxu0 %v3301
        %4382 = vmatprep.subr.bf16.mxu0 %v3304
        %4383 = vmatpush1.bf16.msra.mxu0 %v3303
        %4384 = vmatprep.subr.bf16.mxu0 %v3306
        %4385 = vmatpush1.bf16.msra.mxu0 %v3305
        %4386 = vmatprep.subr.bf16.mxu0 %v3308
        %4387 = vmatpush1.bf16.msra.mxu0 %v3307
        %4388 = vmatprep.subr.bf16.mxu0 %v3310
        %4389 = vmatpush1.bf16.msra.mxu0 %v3309
        %4390 = vmatprep.subr.bf16.mxu0 %v3312
        %4391 = vmatpush1.bf16.msra.mxu0 %v3311
        %4392 = vmatprep.subr.bf16.mxu0 %v3314
        %4393 = vmatpush1.bf16.msra.mxu0 %v3313
        %4394 = vmatprep.mubr.bf16.mxu0 %v2050
        %4395 = vmatmul.mubr.bf16.gmra.mrb[0].mxu0 %v2049
        %v4396 = vpop.f32.mrb[0].mxu0
        %v4397 = vadd.f32 %v4284, %v4396
        %v4398 = vpop.f32.mrb[0].mxu0
        %v4399 = vadd.f32 %v4286, %v4398
        %v4400 = vpop.f32.mrb[0].mxu0
        %v4401 = vadd.f32 %v4288, %v4400
        %v4402 = vpop.f32.mrb[0].mxu0
        %v4403 = vadd.f32 %v4290, %v4402
        %4404 = vmatprep.mubr.bf16.mxu0 %v2066
        %4405 = vmatmul.mubr.bf16.gmra.mrb[0].mxu0 %v2065
        %v4406 = vpop.f32.mrb[0].mxu0
        %v4407 = vadd.f32 %v4294, %v4406
        %v4408 = vpop.f32.mrb[0].mxu0
        %v4409 = vadd.f32 %v4296, %v4408
        %v4410 = vpop.f32.mrb[0].mxu0
        %v4411 = vadd.f32 %v4298, %v4410
        %v4412 = vpop.f32.mrb[0].mxu0
        %v4413 = vadd.f32 %v4300, %v4412
        %4414 = vmatprep.mubr.bf16.mxu0 %v2082
        %4415 = vmatmul.mubr.bf16.gmra.mrb[0].mxu0 %v2081
        %v4416 = vpop.f32.mrb[0].mxu0
        %v4417 = vadd.f32 %v4304, %v4416
        %v4418 = vpop.f32.mrb[0].mxu0
        %v4419 = vadd.f32 %v4306, %v4418
        %v4420 = vpop.f32.mrb[0].mxu0
        %v4421 = vadd.f32 %v4308, %v4420
        %v4422 = vpop.f32.mrb[0].mxu0
        %v4423 = vadd.f32 %v4310, %v4422
        %4424 = vmatprep.mubr.bf16.mxu0 %v2098
        %4425 = vmatmul.mubr.bf16.gmra.mrb[0].mxu0 %v2097
        %v4426 = vpop.f32.mrb[0].mxu0
        %v4427 = vadd.f32 %v4314, %v4426
        %v4428 = vpop.f32.mrb[0].mxu0
        %v4429 = vadd.f32 %v4316, %v4428
        %v4430 = vpop.f32.mrb[0].mxu0
        %v4431 = vadd.f32 %v4318, %v4430
        %v4432 = vpop.f32.mrb[0].mxu0
        %v4433 = vadd.f32 %v4320, %v4432
        %4434 = vmatprep.mubr.bf16.mxu0 %v2114
        %4435 = vmatmul.mubr.bf16.gmra.mrb[0].mxu0 %v2113
        %v4436 = vpop.f32.mrb[0].mxu0
        %v4437 = vadd.f32 %v4324, %v4436
        %v4438 = vpop.f32.mrb[0].mxu0
        %v4439 = vadd.f32 %v4326, %v4438
        %v4440 = vpop.f32.mrb[0].mxu0
        %v4441 = vadd.f32 %v4328, %v4440
        %v4442 = vpop.f32.mrb[0].mxu0
        %v4443 = vadd.f32 %v4330, %v4442
        %4444 = vmatprep.mubr.bf16.mxu0 %v2130
        %4445 = vmatmul.mubr.bf16.gmra.mrb[0].mxu0 %v2129
        %v4446 = vpop.f32.mrb[0].mxu0
        %v4447 = vadd.f32 %v4334, %v4446
        %v4448 = vpop.f32.mrb[0].mxu0
        %v4449 = vadd.f32 %v4336, %v4448
        %v4450 = vpop.f32.mrb[0].mxu0
        %v4451 = vadd.f32 %v4338, %v4450
        %v4452 = vpop.f32.mrb[0].mxu0
        %v4453 = vadd.f32 %v4340, %v4452
        %4454 = vmatprep.mubr.bf16.mxu0 %v2146
        %4455 = vmatmul.mubr.bf16.gmra.mrb[0].mxu0 %v2145
        %v4456 = vpop.f32.mrb[0].mxu0
        %v4457 = vadd.f32 %v4344, %v4456
        %v4458 = vpop.f32.mrb[0].mxu0
        %v4459 = vadd.f32 %v4346, %v4458
        %v4460 = vpop.f32.mrb[0].mxu0
        %v4461 = vadd.f32 %v4348, %v4460
        %v4462 = vpop.f32.mrb[0].mxu0
        %v4463 = vadd.f32 %v4350, %v4462
        %4464 = vmatprep.mubr.bf16.mxu0 %v2162
        %4465 = vmatmul.mubr.bf16.gmra.mrb[0].mxu0 %v2161
        %v4466 = vpop.f32.mrb[0].mxu0
        %v4467 = vadd.f32 %v4354, %v4466
        %v4468 = vpop.f32.mrb[0].mxu0
        %v4469 = vadd.f32 %v4356, %v4468
        %v4470 = vpop.f32.mrb[0].mxu0
        %v4471 = vadd.f32 %v4358, %v4470
        %v4472 = vpop.f32.mrb[0].mxu0
        %v4473 = vadd.f32 %v4360, %v4472
        %4474 = vdwg.mxu0
        %v4475 = vmul.f32 %v4397, %v4397
        %v4476 = vmul.f32 %v4401, %v4401
        %v4477 = vmul.f32 %v4407, %v4407
        %v4478 = vmul.f32 %v4411, %v4411
        %v4479 = vmul.f32 %v4417, %v4417
        %v4480 = vmul.f32 %v4421, %v4421
        %v4481 = vmul.f32 %v4427, %v4427
        %v4482 = vmul.f32 %v4431, %v4431
        %v4483 = vmul.f32 %v4437, %v4437
        %v4484 = vmul.f32 %v4441, %v4441
        %v4485 = vmul.f32 %v4447, %v4447
        %v4486 = vmul.f32 %v4451, %v4451
        %v4487 = vmul.f32 %v4457, %v4457
        %v4488 = vmul.f32 %v4461, %v4461
        %v4489 = vmul.f32 %v4467, %v4467
        %v4490 = vmul.f32 %v4471, %v4471
        %v4491 = vmul.f32 %v4399, %v4399
        %v4492 = vmul.f32 %v4403, %v4403
        %v4493 = vmul.f32 %v4409, %v4409
        %v4494 = vmul.f32 %v4413, %v4413
        %v4495 = vmul.f32 %v4419, %v4419
        %v4496 = vmul.f32 %v4423, %v4423
        %v4497 = vmul.f32 %v4429, %v4429
        %v4498 = vmul.f32 %v4433, %v4433
        %v4499 = vmul.f32 %v4439, %v4439
        %v4500 = vmul.f32 %v4443, %v4443
        %v4501 = vmul.f32 %v4449, %v4449
        %v4502 = vmul.f32 %v4453, %v4453
        %v4503 = vmul.f32 %v4459, %v4459
        %v4504 = vmul.f32 %v4463, %v4463
        %v4505 = vmul.f32 %v4469, %v4469
        %v4506 = vmul.f32 %v4473, %v4473
        %v4507 = vadd.f32 %v4475, %v4491
        %v4508 = vadd.f32 %v4476, %v4492
        %v4509 = vadd.f32 %v4477, %v4493
        %v4510 = vadd.f32 %v4478, %v4494
        %v4511 = vadd.f32 %v4479, %v4495
        %v4512 = vadd.f32 %v4480, %v4496
        %v4513 = vadd.f32 %v4481, %v4497
        %v4514 = vadd.f32 %v4482, %v4498
        %v4515 = vadd.f32 %v4483, %v4499
        %v4516 = vadd.f32 %v4484, %v4500
        %v4517 = vadd.f32 %v4485, %v4501
        %v4518 = vadd.f32 %v4486, %v4502
        %v4519 = vadd.f32 %v4487, %v4503
        %v4520 = vadd.f32 %v4488, %v4504
        %v4521 = vadd.f32 %v4489, %v4505
        %v4522 = vadd.f32 %v4490, %v4506
        %v4523 = vmax.f32 %v4507, 1e-20
        %v4524 = vmax.f32 %v4508, 1e-20
        %v4525 = vmax.f32 %v4509, 1e-20
        %v4526 = vmax.f32 %v4510, 1e-20
        %v4527 = vmax.f32 %v4511, 1e-20
        %v4528 = vmax.f32 %v4512, 1e-20
        %v4529 = vmax.f32 %v4513, 1e-20
        %v4530 = vmax.f32 %v4514, 1e-20
        %v4531 = vmax.f32 %v4515, 1e-20
        %v4532 = vmax.f32 %v4516, 1e-20
        %v4533 = vmax.f32 %v4517, 1e-20
        %v4534 = vmax.f32 %v4518, 1e-20
        %v4535 = vmax.f32 %v4519, 1e-20
        %v4536 = vmax.f32 %v4520, 1e-20
        %v4537 = vmax.f32 %v4521, 1e-20
        %v4538 = vmax.f32 %v4522, 1e-20
        %v4539 = vlog2.pop %v4523
        %v4540 = vmul.f32 %v4539, 0.6931472
        %v4541 = vlog2.pop %v4524
        %v4542 = vmul.f32 %v4541, 0.6931472
        %v4543 = vlog2.pop %v4525
        %v4544 = vmul.f32 %v4543, 0.6931472
        %v4545 = vlog2.pop %v4526
        %v4546 = vmul.f32 %v4545, 0.6931472
        %v4547 = vlog2.pop %v4527
        %v4548 = vmul.f32 %v4547, 0.6931472
        %v4549 = vlog2.pop %v4528
        %v4550 = vmul.f32 %v4549, 0.6931472
        %v4551 = vlog2.pop %v4529
        %v4552 = vmul.f32 %v4551, 0.6931472
        %v4553 = vlog2.pop %v4530
        %v4554 = vmul.f32 %v4553, 0.6931472
        %v4555 = vlog2.pop %v4531
        %v4556 = vmul.f32 %v4555, 0.6931472
        %v4557 = vlog2.pop %v4532
        %v4558 = vmul.f32 %v4557, 0.6931472
        %v4559 = vlog2.pop %v4533
        %v4560 = vmul.f32 %v4559, 0.6931472
        %v4561 = vlog2.pop %v4534
        %v4562 = vmul.f32 %v4561, 0.6931472
        %v4563 = vlog2.pop %v4535
        %v4564 = vmul.f32 %v4563, 0.6931472
        %v4565 = vlog2.pop %v4536
        %v4566 = vmul.f32 %v4565, 0.6931472
        %v4567 = vlog2.pop %v4537
        %v4568 = vmul.f32 %v4567, 0.6931472
        %v4569 = vlog2.pop %v4538
        %v4570 = vmul.f32 %v4569, 0.6931472
        %v4571 = vmul.f32 %v4540, 2.1714723
        %v4572 = vmul.f32 %v4542, 2.1714723
        %v4573 = vmul.f32 %v4544, 2.1714723
        %v4574 = vmul.f32 %v4546, 2.1714723
        %v4575 = vmul.f32 %v4548, 2.1714723
        %v4576 = vmul.f32 %v4550, 2.1714723
        %v4577 = vmul.f32 %v4552, 2.1714723
        %v4578 = vmul.f32 %v4554, 2.1714723
        %v4579 = vmul.f32 %v4556, 2.1714723
        %v4580 = vmul.f32 %v4558, 2.1714723
        %v4581 = vmul.f32 %v4560, 2.1714723
        %v4582 = vmul.f32 %v4562, 2.1714723
        %v4583 = vmul.f32 %v4564, 2.1714723
        %v4584 = vmul.f32 %v4566, 2.1714723
        %v4585 = vmul.f32 %v4568, 2.1714723
        %v4586 = vmul.f32 %v4570, 2.1714723
        %4587 = vxpose.xlu0.b32.start [1/16] %v4571, 128
        %4588 = vxpose.xlu0.b32.cont [2/16] %v4572, 128
        %4589 = vxpose.xlu0.b32.cont [3/16] %v4573, 128
        %4590 = vxpose.xlu0.b32.cont [4/16] %v4574, 128
        %4591 = vxpose.xlu0.b32.cont [5/16] %v4575, 128
        %4592 = vxpose.xlu0.b32.cont [6/16] %v4576, 128
        %4593 = vxpose.xlu0.b32.cont [7/16] %v4577, 128
        %4594 = vxpose.xlu0.b32.cont [8/16] %v4578, 128
        %4595 = vxpose.xlu0.b32.cont [9/16] %v4579, 128
        %4596 = vxpose.xlu0.b32.cont [10/16] %v4580, 128
        %4597 = vxpose.xlu0.b32.cont [11/16] %v4581, 128
        %4598 = vxpose.xlu0.b32.cont [12/16] %v4582, 128
        %4599 = vxpose.xlu0.b32.cont [13/16] %v4583, 128
        %4600 = vxpose.xlu0.b32.cont [14/16] %v4584, 128
        %4601 = vxpose.xlu0.b32.cont [15/16] %v4585, 128
        %4602 = vxpose.xlu0.b32.end [16/16] %v4586, 128
        %v4603 = vpop.trf.xlu0
        %v4604 = vpop.trf.xlu0
        %v4605 = vpop.trf.xlu0
        %v4606 = vpop.trf.xlu0
        %v4607 = vpop.trf.xlu0
        %v4608 = vpop.trf.xlu0
        %v4609 = vpop.trf.xlu0
        %v4610 = vpop.trf.xlu0
        %v4611 = vpop.trf.xlu0
        %v4612 = vpop.trf.xlu0
        %v4613 = vpop.trf.xlu0
        %v4614 = vpop.trf.xlu0
        %v4615 = vpop.trf.xlu0
        %v4616 = vpop.trf.xlu0
        %v4617 = vpop.trf.xlu0
        %v4618 = vpop.trf.xlu0
        %4619 = vst [vmem:[%s1265] sm:$0xff] %v4603
        %4620 = vst [vmem:[%s1265 + $0x8] sm:$0xff] %v4604
        %4621 = vst [vmem:[%s1265 + $0x10] sm:$0xff] %v4605
        %4622 = vst [vmem:[%s1265 + $0x18] sm:$0xff] %v4606
        %4623 = vst [vmem:[%s1265 + $0x20] sm:$0xff] %v4607
        %4624 = vst [vmem:[%s1265 + $0x28] sm:$0xff] %v4608
        %4625 = vst [vmem:[%s1265 + $0x30] sm:$0xff] %v4609
        %4626 = vst [vmem:[%s1265 + $0x38] sm:$0xff] %v4610
        %4627 = vst [vmem:[%s1265 + $0x40] sm:$0xff] %v4611
        %4628 = vst [vmem:[%s1265 + $0x48] sm:$0xff] %v4612
        %4629 = vst [vmem:[%s1265 + $0x50] sm:$0xff] %v4613
        %4630 = vst [vmem:[%s1265 + $0x58] sm:$0xff] %v4614
        %4631 = vst [vmem:[%s1265 + $0x60] sm:$0xff] %v4615
        %4632 = vst [vmem:[%s1265 + $0x68] sm:$0xff] %v4616
        %4633 = vst [vmem:[%s1265 + $0x70] sm:$0xff] %v4617
        %4634 = vst [vmem:[%s1265 + $0x78] sm:$0xff] %v4618
        %s4635 = smul.u32 16, %s20
        %p4636 = scmp.lt.s32.totalorder %s19, 2
        %s4637 = scalar_select %p4636, %s19, 2
        %p4638 = scmp.lt.s32.totalorder %s4635, 143
        %s4639 = scalar_select %p4638, %s4635, 143
        %p4640 = scmp.lt.s32.totalorder %s18, 0
        %s4641 = scalar_select %p4640, %s18, 0
        %s4642 = sadd.s32 %s4641, %s4639
        %s4643 = smul.addr %s4637, 144
        %s4644 = sadd.s32 %s4642, %s4643
        %s4645 = smul.addr %s4644, 8
        %s4646 = scalar_lea.vmem %s2, %s4645
        // Predicated region
        $region67: #{multi_resolution_spec.1} parent=61 // pred_check
          %p4647 = pneg %p108
        $region68: #{multi_resolution_spec.1} parent=61 // pred_check_branch
          %4649 = sbr.rel (%p4647) target = $region70
        $region69: #{multi_resolution_spec.1} parent=61 // pred_region
          %s4650 = smul.u32 16, %s20
        $region70: #{multi_resolution_spec.1} parent=61 // pred_fallthru
          _
      $region62: #{multi_resolution_spec.1} parent=5 // pred_fallthru
        _
      %p4651 = scmp.le.s32.totalorder 2, %s8
      // Predicated region
      $region71: #{multi_resolution_spec.1} parent=5 // pred_check
        %p4652 = pneg %p4651
      $region72: #{multi_resolution_spec.1} parent=5 // pred_check_branch
        %4654 = sbr.rel (%p4652) target = $region74
      $region73: #{multi_resolution_spec.1} parent=5 // pred_region
        %s4655 = ssub.s32 %s8, 2
        // Predicated region
        $region75: #{multi_resolution_spec.1} parent=73 // pred_check
          %p4656 = pneg %p114
        $region76: #{multi_resolution_spec.1} parent=73 // pred_check_branch
          %4658 = sbr.rel (%p4656) target = $region78
        $region77: #{multi_resolution_spec.1} parent=73 // pred_region
          %s4659 = smul.u32 16, %s23
          %p4660 = scmp.lt.s32.totalorder %s22, 2
          %s4661 = scalar_select %p4660, %s22, 2
          %p4662 = scmp.lt.s32.totalorder %s4659, 143
          %s4663 = scalar_select %p4662, %s4659, 143
          %p4664 = scmp.lt.s32.totalorder %s21, 0
          %s4665 = scalar_select %p4664, %s21, 0
          %s4666 = sadd.s32 %s4665, %s4663
          %s4667 = smul.addr %s4661, 144
          %s4668 = sadd.s32 %s4666, %s4667
          %s4669 = smul.addr %s4668, 8
          %s4670 = scalar_lea.vmem %s2, %s4669
        $region78: #{multi_resolution_spec.1} parent=73 // pred_fallthru
          _
      $region74: #{multi_resolution_spec.1} parent=5 // pred_fallthru
        _
    $region6: #{multi_resolution_spec.1} parent=1 // loop_footer
      %s12 = sadd.s32 1, %s8
    $region7: #{multi_resolution_spec.1} parent=1 // loop_footer_branch
      %7 = sbr.rel target = $region3
    $region8: #{multi_resolution_spec.1} parent=1 // loop_exit
      _

</llo_original>
